<compile_context>
chip_gen: v5e
topology: v5e:2x2
jax: 0.10.0
libtpu: 0.0.40
codegen_flags: <defaults>
</compile_context>

<pallas_src>
import functools

import numpy as np
import jax
import jax.numpy as jnp
from jax import lax
from jax.experimental import pallas as pl
from jax.experimental.pallas import tpu as pltpu

# ---- problem constants (fixed by the module) --------------------------------
M = 28        # "m" axis (acts as C for the unfold)
N = 28        # "n" axis (acts as H for the unfold; pad 4, kernel 9)
MN = M * N    # 784 flattened spatial positions
CI = 48       # contracted channels of the first einsum
CO = 192      # output channels
P = 9         # unfold kernel height
J = 14        # trailing dim of both weights
K2 = 2        # size-2 dim of weights[1], summed after the roll
HALF = P // 2  # = 4 (unfold padding)

PJ = 16               # sublane-aligned per-unfold-position stride in the contraction
KDIM = P * PJ         # 144 fused contraction depth (rows 16p+14/15 are exact zeros)
W = 896               # 7*128 working lane width (784 data lanes + 112 slack lanes)
COB = 96              # output-channel block per grid step -> grid = (2,)

# Precomputed per-lane n index (constant; passed in to avoid in-kernel int div/mod).
_NMOD = np.tile((np.arange(W, dtype=np.int32) % N)[None, :], (PJ, 1))


def _build_contrib(w2uv_ref, x_ref, nmod_ref, uv_ref, contrib_ref, shift):
    """Builds the fused [144, 896] contribution matrix (t4sum in lane-major layout)."""
    # einsum 1, both k planes in ONE MXU matmul:
    #   uv[j     , m*28+n] = sum_i w2[i,0,j] * x[i,m,n]   (U plane, rows 0..13)
    #   uv[16 + j, m*28+n] = sum_i w2[i,1,j] * x[i,m,n]   (V plane, rows 16..29)
    uv_ref[:, :MN] = jnp.dot(w2uv_ref[...], x_ref[...],
                             preferred_element_type=jnp.float32)
    uv_ref[:, MN:] = jnp.zeros((2 * PJ, W - MN), jnp.float32)   # keep slack lanes clean
    u = uv_ref[:PJ, :]                                          # [16, W]
    v = uv_ref[PJ:, :]                                          # [16, W]

    nmod = nmod_ref[...]                                        # per-lane n index
    first = nmod == 0                                           # n == 0 lanes
    last = nmod == N - 1                                        # n == N-1 lanes

    def sh(plane, delta):
        # sh(plane, delta)[:, r] == plane[:, r + delta]   (circular over W)
        return pltpu.roll(plane, shift=(-delta) % W, axis=1)

    def shm(plane, delta):
        # shifted + unfold-range mask: zero where (n + delta) falls outside [0, N)
        rolled = sh(plane, delta)
        m = (nmod < N - delta) if delta >= 0 else (nmod >= -delta)
        return jnp.where(m, rolled, 0.0)

    for p in range(P):
        d = p - HALF
        if shift == 1:
            # t4sum[m,p,n,j] = [0<=n+d<N]*U[n+d]
            #                + (n>0 ? [0<=n-1+d<N]*V[n-1+d] : [0<=N-1+d<N]*V[N-1+d])
            slab = shm(u, d)
            rolled_v = sh(v, d - 1)
            if d <= 0:
                reg_v = jnp.where(nmod >= 1 - d, rolled_v, 0.0)
                slab = slab + jnp.where(first, sh(v, d + (N - 1)), reg_v)
            else:
                mv = jnp.logical_and(nmod >= 1, nmod < N + 1 - d)
                slab = slab + jnp.where(mv, rolled_v, 0.0)
        else:
            # t4sum[m,p,n,j] = [0<=n+d<N]*V[n+d]
            #                + (n<N-1 ? [0<=n+1+d<N]*U[n+1+d] : [0<=d<N]*U[d])
            slab = shm(v, d)
            rolled_u = sh(u, d + 1)
            if d >= 0:
                reg_u = jnp.where(nmod < N - 1 - d, rolled_u, 0.0)
                slab = slab + jnp.where(last, sh(u, d - (N - 1)), reg_u)
            else:
                mu = jnp.logical_and(nmod <= N - 2, nmod >= -d - 1)
                slab = slab + jnp.where(mu, rolled_u, 0.0)
        contrib_ref[pl.ds(p * PJ, PJ), :] = slab


def _make_kernel(shift, build_once):
    assert shift in (1, -1)

    def kernel(w2uv_ref, x_ref, w1_ref, nmod_ref, o_ref, uv_ref, contrib_ref):
        if build_once:
            # "arbitrary" grid: build contrib only on step 0; it persists in scratch.
            @pl.when(pl.program_id(0) == 0)
            def _():
                _build_contrib(w2uv_ref, x_ref, nmod_ref, uv_ref, contrib_ref, shift)
        else:
            # "parallel" grid (v7x megacore): each core builds its own contrib copy.
            _build_contrib(w2uv_ref, x_ref, nmod_ref, uv_ref, contrib_ref, shift)

        # einsum 2, fused over all 9 unfold positions: one full-depth MXU matmul per
        # output-channel block, stored directly in compact [co, m*28+n] layout.
        o_ref[...] = jnp.dot(w1_ref[...], contrib_ref[:, :MN],
                             preferred_element_type=jnp.float32)

    return kernel


def _use_megacore_parallel():
    # v7x has 2 TensorCores per chip; elsewhere prefer the build-once/pipelined path.
    try:
        return "v7" in jax.devices()[0].device_kind.lower()
    except Exception:
        return False


@functools.partial(jax.jit, static_argnums=(3,))
def kernel_generated_3_forward(x, w1, w2, shift=1):
    """x: [1,48,28,28] f32, w1: [192,9,14], w2: [48,2,14] -> [1,192,28,28]."""
    # Free reshape: lane index r = m*28 + n (no wrapper-side padding needed anymore).
    x2 = x.reshape(CI, MN)                                            # [48, 784]

    # Tiny weight glue: stack the two k planes of w2 into one 32-row LHS, and flatten
    # w1 to the fused [CO, 144] contraction layout (zero cols at 16p+14/15).
    w2u = jnp.pad(jnp.transpose(w2[:, 0, :]), ((0, PJ - J), (0, 0)))  # [16, 48]
    w2v = jnp.pad(jnp.transpose(w2[:, 1, :]), ((0, PJ - J), (0, 0)))  # [16, 48]
    w2uv = jnp.concatenate([w2u, w2v], axis=0)                        # [32, 48]
    w1f = jnp.pad(w1, ((0, 0), (0, 0), (0, PJ - J))).reshape(CO, KDIM)  # [192, 144]
    nmod = jnp.asarray(_NMOD)                                         # [16, 896] i32

    parallel = _use_megacore_parallel()

    out = pl.pallas_call(
        _make_kernel(shift, build_once=not parallel),
        out_shape=jax.ShapeDtypeStruct((CO, MN), jnp.float32),
        grid=(CO // COB,),
        in_specs=[
            pl.BlockSpec((2 * PJ, CI), lambda i: (0, 0)),   # w2uv
            pl.BlockSpec((CI, MN), lambda i: (0, 0)),       # x (compact lanes)
            pl.BlockSpec((COB, KDIM), lambda i: (i, 0)),    # w1f block per step
            pl.BlockSpec((PJ, W), lambda i: (0, 0)),        # nmod constant
        ],
        out_specs=pl.BlockSpec((COB, MN), lambda i: (i, 0)),
        scratch_shapes=[
            pltpu.VMEM((2 * PJ, W), jnp.float32),           # u / v source planes
            pltpu.VMEM((KDIM, W), jnp.float32),             # fused contrib matrix
        ],
        compiler_params=pltpu.CompilerParams(
            dimension_semantics=(("parallel",) if parallel else ("arbitrary",))),
        cost_estimate=pl.CostEstimate(
            flops=2 * (2 * PJ * CI * MN + CO * KDIM * MN),
            bytes_accessed=4 * (CI * MN + 2 * PJ * CI + CO * KDIM + PJ * W + CO * MN),
            transcendentals=0),
    )(w2uv, x2, w1f, nmod)

    # Output is already channel-major and lane-compact: a free reshape only.
    return out.reshape(1, CO, M, N)


def reference(x, w1, w2, shift):
    """Pure-JAX replica of the PyTorch forward (float32 HIGHEST precision)."""
    hp = lax.Precision.HIGHEST
    t3 = jnp.einsum('limn,ikj->lmnkj', x, w2, precision=hp)           # [1,28,28,2,14]
    t4 = t3.reshape(1, M, N, K2 * J)                                  # [1,28,28,28]
    tpad = jnp.pad(t4, ((0, 0), (0, 0), (HALF, HALF), (0, 0)))        # unfold pad (4,0)
    cols = jnp.stack([tpad[:, :, p:p + N, :] for p in range(P)], axis=2)
    t4 = cols.reshape(1, M, P, N, K2, J)
    t4 = t4.reshape(1, M, P, N * K2, J)
    t4 = jnp.roll(t4, shift, axis=3)
    t4 = t4.reshape(1, M, P, N, K2, J)
    t4 = t4.sum(axis=4)                                               # [1,28,9,28,14]
    return jnp.einsum('lmjnk,ijk->limn', t4, w1, precision=hp)        # [1,192,28,28]


if __name__ == "__main__":
    key = jax.random.PRNGKey(0)
    kx, k1, k2 = jax.random.split(key, 3)
    # Deterministic stand-ins for the module's torch.randn parameters (shapes fixed
    # by the module's hard-coded reshapes).
    x = jax.random.normal(kx, (1, CI, M, N), dtype=jnp.float32)
    w1 = jax.random.normal(k1, (CO, P, J), dtype=jnp.float32)         # weights[0]
    w2 = jax.random.normal(k2, (CI, K2, J), dtype=jnp.float32)        # weights[1]

    # shift_direction = (random.random() > 0.5)*2 - 1 in the module; both directions
    # are implemented and verified here.
    for shift in (1, -1):
        y = jax.block_until_ready(kernel_generated_3_forward(x, w1, w2, shift))
        y_ref = reference(x, w1, w2, shift)
        assert y.shape == (1, CO, M, N) and y.dtype == jnp.float32
        err = float(jnp.max(jnp.abs(y - y_ref)))
        scale = float(jnp.max(jnp.abs(y_ref)))
        # Default (bf16-pass) MXU precision vs the f32 HIGHEST-precision reference:
        # compare via the relative infinity norm.
        assert err <= 2e-2 * scale + 1e-3, (
            "mismatch shift=%d max_abs_err=%e (scale=%e)" % (shift, err, scale))
    print("KERNEL_OK")
</pallas_src>

<mosaic_0001>
module attributes {stable_mosaic.version = 11 : i64} {
  func.func @kernel(%arg0: i32, %arg1: memref<32x48xf32, #tpu.memory_space<vmem>>, %arg2: memref<48x784xf32, #tpu.memory_space<vmem>>, %arg3: memref<96x144xf32, #tpu.memory_space<vmem>>, %arg4: memref<16x896xi32, #tpu.memory_space<vmem>>, %arg5: memref<96x784xf32, #tpu.memory_space<vmem>>, %arg6: memref<32x896xf32, #tpu.memory_space<vmem>>, %arg7: memref<144x896xf32, #tpu.memory_space<vmem>>) attributes {dimension_semantics = [#tpu.dimension_semantics<arbitrary>], iteration_bounds = array<i64: 2>, scalar_prefetch = 0 : i64, scratch_operands = 2 : i64, tpu.core_type = #tpu.core_type<tc>, window_params = [{pipeline_mode = #tpu.pipeline_mode<synchronous>, transform_indices = @transform_0, window_bounds = array<i64: 32, 48>}, {pipeline_mode = #tpu.pipeline_mode<synchronous>, transform_indices = @transform_1, window_bounds = array<i64: 48, 784>}, {transform_indices = @transform_2, window_bounds = array<i64: 96, 144>}, {pipeline_mode = #tpu.pipeline_mode<synchronous>, transform_indices = @transform_3, window_bounds = array<i64: 16, 896>}, {transform_indices = @transform_4, window_bounds = array<i64: 96, 784>}]} {
    %c0_i32 = arith.constant 0 : i32
    %0 = arith.cmpi eq, %arg0, %c0_i32 : i32
    %1 = arith.extui %0 : i1 to i32
    %c0_i32_0 = arith.constant 0 : i32
    %2 = arith.cmpi ne, %1, %c0_i32_0 : i32
    scf.if %2 {
      %c0_6 = arith.constant 0 : index
      %c0_7 = arith.constant 0 : index
      %7 = vector.load %arg1[%c0_6, %c0_7] : memref<32x48xf32, #tpu.memory_space<vmem>>, vector<32x48xf32>
      %c0_8 = arith.constant 0 : index
      %c0_9 = arith.constant 0 : index
      %8 = vector.load %arg2[%c0_8, %c0_9] : memref<48x784xf32, #tpu.memory_space<vmem>>, vector<48x784xf32>
      %cst_10 = arith.constant dense<0.000000e+00> : vector<32x784xf32>
      %9 = tpu.matmul %7, %8, %cst_10 {dimension_numbers = #tpu.dot_dimension_numbers<[1], [0], [0], [1], [0, 0, 1, 1], [], []>} : vector<32x48xf32>, vector<48x784xf32>, vector<32x784xf32> -> vector<32x784xf32>
      %c0_11 = arith.constant 0 : index
      %c0_12 = arith.constant 0 : index
      %10 = vector.load %arg6[%c0_11, %c0_12] : memref<32x896xf32, #tpu.memory_space<vmem>>, vector<32x784xf32>
      tpu.vector_store %arg6[%c0_11, %c0_12], %9 {strides = array<i32>} : memref<32x896xf32, #tpu.memory_space<vmem>>, vector<32x784xf32>,
      %cst_13 = arith.constant 0.000000e+00 : f32
      %11 = vector.broadcast %cst_13 : f32 to vector<32x112xf32>
      %c0_14 = arith.constant 0 : index
      %c784 = arith.constant 784 : index
      %12 = vector.load %arg6[%c0_14, %c784] : memref<32x896xf32, #tpu.memory_space<vmem>>, vector<32x112xf32>
      tpu.vector_store %arg6[%c0_14, %c784], %11 {strides = array<i32>} : memref<32x896xf32, #tpu.memory_space<vmem>>, vector<32x112xf32>,
      %c0_15 = arith.constant 0 : index
      %c0_16 = arith.constant 0 : index
      %13 = vector.load %arg6[%c0_15, %c0_16] : memref<32x896xf32, #tpu.memory_space<vmem>>, vector<16x896xf32>
      %c16 = arith.constant 16 : index
      %c0_17 = arith.constant 0 : index
      %14 = vector.load %arg6[%c16, %c0_17] : memref<32x896xf32, #tpu.memory_space<vmem>>, vector<16x896xf32>
      %c0_18 = arith.constant 0 : index
      %c0_19 = arith.constant 0 : index
      %15 = vector.load %arg4[%c0_18, %c0_19] : memref<16x896xi32, #tpu.memory_space<vmem>>, vector<16x896xi32>
      %c0_i32_20 = arith.constant 0 : i32
      %16 = vector.broadcast %c0_i32_20 : i32 to vector<16x896xi32>
      %17 = arith.cmpi eq, %15, %16 : vector<16x896xi32>
      %c4_i32 = arith.constant 4 : i32
      %18 = tpu.dynamic_rotate %13 by %c4_i32 dim 1 : vector<16x896xf32>, i32 -> vector<16x896xf32>
      %c4_i32_21 = arith.constant 4 : i32
      %19 = vector.broadcast %c4_i32_21 : i32 to vector<16x896xi32>
      %20 = arith.cmpi sge, %15, %19 : vector<16x896xi32>
      %cst_22 = arith.constant 0.000000e+00 : f32
      %21 = vector.broadcast %cst_22 : f32 to vector<16x896xf32>
      %22 = arith.select %20, %18, %21 : vector<16x896xi1>, vector<16x896xf32>
      %c5_i32 = arith.constant 5 : i32
      %23 = tpu.dynamic_rotate %14 by %c5_i32 dim 1 : vector<16x896xf32>, i32 -> vector<16x896xf32>
      %c5_i32_23 = arith.constant 5 : i32
      %24 = vector.broadcast %c5_i32_23 : i32 to vector<16x896xi32>
      %25 = arith.cmpi sge, %15, %24 : vector<16x896xi32>
      %cst_24 = arith.constant 0.000000e+00 : f32
      %26 = vector.broadcast %cst_24 : f32 to vector<16x896xf32>
      %27 = arith.select %25, %23, %26 : vector<16x896xi1>, vector<16x896xf32>
      %c873_i32 = arith.constant 873 : i32
      %28 = tpu.dynamic_rotate %14 by %c873_i32 dim 1 : vector<16x896xf32>, i32 -> vector<16x896xf32>
      %29 = arith.select %17, %28, %27 : vector<16x896xi1>, vector<16x896xf32>
      %30 = arith.addf %22, %29 : vector<16x896xf32>
      %c0_25 = arith.constant 0 : index
      %c0_26 = arith.constant 0 : index
      %31 = vector.load %arg7[%c0_25, %c0_26] : memref<144x896xf32, #tpu.memory_space<vmem>>, vector<16x896xf32>
      tpu.vector_store %arg7[%c0_25, %c0_26], %30 {strides = array<i32>} : memref<144x896xf32, #tpu.memory_space<vmem>>, vector<16x896xf32>,
      %c3_i32 = arith.constant 3 : i32
      %32 = tpu.dynamic_rotate %13 by %c3_i32 dim 1 : vector<16x896xf32>, i32 -> vector<16x896xf32>
      %c3_i32_27 = arith.constant 3 : i32
      %33 = vector.broadcast %c3_i32_27 : i32 to vector<16x896xi32>
      %34 = arith.cmpi sge, %15, %33 : vector<16x896xi32>
      %cst_28 = arith.constant 0.000000e+00 : f32
      %35 = vector.broadcast %cst_28 : f32 to vector<16x896xf32>
      %36 = arith.select %34, %32, %35 : vector<16x896xi1>, vector<16x896xf32>
      %c4_i32_29 = arith.constant 4 : i32
      %37 = tpu.dynamic_rotate %14 by %c4_i32_29 dim 1 : vector<16x896xf32>, i32 -> vector<16x896xf32>
      %c4_i32_30 = arith.constant 4 : i32
      %38 = vector.broadcast %c4_i32_30 : i32 to vector<16x896xi32>
      %39 = arith.cmpi sge, %15, %38 : vector<16x896xi32>
      %cst_31 = arith.constant 0.000000e+00 : f32
      %40 = vector.broadcast %cst_31 : f32 to vector<16x896xf32>
      %41 = arith.select %39, %37, %40 : vector<16x896xi1>, vector<16x896xf32>
      %c872_i32 = arith.constant 872 : i32
      %42 = tpu.dynamic_rotate %14 by %c872_i32 dim 1 : vector<16x896xf32>, i32 -> vector<16x896xf32>
      %43 = arith.select %17, %42, %41 : vector<16x896xi1>, vector<16x896xf32>
      %44 = arith.addf %36, %43 : vector<16x896xf32>
      %c16_32 = arith.constant 16 : index
      %c0_33 = arith.constant 0 : index
      %45 = vector.load %arg7[%c16_32, %c0_33] : memref<144x896xf32, #tpu.memory_space<vmem>>, vector<16x896xf32>
      tpu.vector_store %arg7[%c16_32, %c0_33], %44 {strides = array<i32>} : memref<144x896xf32, #tpu.memory_space<vmem>>, vector<16x896xf32>,
      %c2_i32 = arith.constant 2 : i32
      %46 = tpu.dynamic_rotate %13 by %c2_i32 dim 1 : vector<16x896xf32>, i32 -> vector<16x896xf32>
      %c2_i32_34 = arith.constant 2 : i32
      %47 = vector.broadcast %c2_i32_34 : i32 to vector<16x896xi32>
      %48 = arith.cmpi sge, %15, %47 : vector<16x896xi32>
      %cst_35 = arith.constant 0.000000e+00 : f32
      %49 = vector.broadcast %cst_35 : f32 to vector<16x896xf32>
      %50 = arith.select %48, %46, %49 : vector<16x896xi1>, vector<16x896xf32>
      %c3_i32_36 = arith.constant 3 : i32
      %51 = tpu.dynamic_rotate %14 by %c3_i32_36 dim 1 : vector<16x896xf32>, i32 -> vector<16x896xf32>
      %c3_i32_37 = arith.constant 3 : i32
      %52 = vector.broadcast %c3_i32_37 : i32 to vector<16x896xi32>
      %53 = arith.cmpi sge, %15, %52 : vector<16x896xi32>
      %cst_38 = arith.constant 0.000000e+00 : f32
      %54 = vector.broadcast %cst_38 : f32 to vector<16x896xf32>
      %55 = arith.select %53, %51, %54 : vector<16x896xi1>, vector<16x896xf32>
      %c871_i32 = arith.constant 871 : i32
      %56 = tpu.dynamic_rotate %14 by %c871_i32 dim 1 : vector<16x896xf32>, i32 -> vector<16x896xf32>
      %57 = arith.select %17, %56, %55 : vector<16x896xi1>, vector<16x896xf32>
      %58 = arith.addf %50, %57 : vector<16x896xf32>
      %c32 = arith.constant 32 : index
      %c0_39 = arith.constant 0 : index
      %59 = vector.load %arg7[%c32, %c0_39] : memref<144x896xf32, #tpu.memory_space<vmem>>, vector<16x896xf32>
      tpu.vector_store %arg7[%c32, %c0_39], %58 {strides = array<i32>} : memref<144x896xf32, #tpu.memory_space<vmem>>, vector<16x896xf32>,
      %c1_i32 = arith.constant 1 : i32
      %60 = tpu.dynamic_rotate %13 by %c1_i32 dim 1 : vector<16x896xf32>, i32 -> vector<16x896xf32>
      %c1_i32_40 = arith.constant 1 : i32
      %61 = vector.broadcast %c1_i32_40 : i32 to vector<16x896xi32>
      %62 = arith.cmpi sge, %15, %61 : vector<16x896xi32>
      %cst_41 = arith.constant 0.000000e+00 : f32
      %63 = vector.broadcast %cst_41 : f32 to vector<16x896xf32>
      %64 = arith.select %62, %60, %63 : vector<16x896xi1>, vector<16x896xf32>
      %c2_i32_42 = arith.constant 2 : i32
      %65 = tpu.dynamic_rotate %14 by %c2_i32_42 dim 1 : vector<16x896xf32>, i32 -> vector<16x896xf32>
      %c2_i32_43 = arith.constant 2 : i32
      %66 = vector.broadcast %c2_i32_43 : i32 to vector<16x896xi32>
      %67 = arith.cmpi sge, %15, %66 : vector<16x896xi32>
      %cst_44 = arith.constant 0.000000e+00 : f32
      %68 = vector.broadcast %cst_44 : f32 to vector<16x896xf32>
      %69 = arith.select %67, %65, %68 : vector<16x896xi1>, vector<16x896xf32>
      %c870_i32 = arith.constant 870 : i32
      %70 = tpu.dynamic_rotate %14 by %c870_i32 dim 1 : vector<16x896xf32>, i32 -> vector<16x896xf32>
      %71 = arith.select %17, %70, %69 : vector<16x896xi1>, vector<16x896xf32>
      %72 = arith.addf %64, %71 : vector<16x896xf32>
      %c48 = arith.constant 48 : index
      %c0_45 = arith.constant 0 : index
      %73 = vector.load %arg7[%c48, %c0_45] : memref<144x896xf32, #tpu.memory_space<vmem>>, vector<16x896xf32>
      tpu.vector_store %arg7[%c48, %c0_45], %72 {strides = array<i32>} : memref<144x896xf32, #tpu.memory_space<vmem>>, vector<16x896xf32>,
      %c0_i32_46 = arith.constant 0 : i32
      %74 = tpu.dynamic_rotate %13 by %c0_i32_46 dim 1 : vector<16x896xf32>, i32 -> vector<16x896xf32>
      %c28_i32 = arith.constant 28 : i32
      %75 = vector.broadcast %c28_i32 : i32 to vector<16x896xi32>
      %76 = arith.cmpi slt, %15, %75 : vector<16x896xi32>
      %cst_47 = arith.constant 0.000000e+00 : f32
      %77 = vector.broadcast %cst_47 : f32 to vector<16x896xf32>
      %78 = arith.select %76, %74, %77 : vector<16x896xi1>, vector<16x896xf32>
      %c1_i32_48 = arith.constant 1 : i32
      %79 = tpu.dynamic_rotate %14 by %c1_i32_48 dim 1 : vector<16x896xf32>, i32 -> vector<16x896xf32>
      %c1_i32_49 = arith.constant 1 : i32
      %80 = vector.broadcast %c1_i32_49 : i32 to vector<16x896xi32>
      %81 = arith.cmpi sge, %15, %80 : vector<16x896xi32>
      %cst_50 = arith.constant 0.000000e+00 : f32
      %82 = vector.broadcast %cst_50 : f32 to vector<16x896xf32>
      %83 = arith.select %81, %79, %82 : vector<16x896xi1>, vector<16x896xf32>
      %c869_i32 = arith.constant 869 : i32
      %84 = tpu.dynamic_rotate %14 by %c869_i32 dim 1 : vector<16x896xf32>, i32 -> vector<16x896xf32>
      %85 = arith.select %17, %84, %83 : vector<16x896xi1>, vector<16x896xf32>
      %86 = arith.addf %78, %85 : vector<16x896xf32>
      %c64 = arith.constant 64 : index
      %c0_51 = arith.constant 0 : index
      %87 = vector.load %arg7[%c64, %c0_51] : memref<144x896xf32, #tpu.memory_space<vmem>>, vector<16x896xf32>
      tpu.vector_store %arg7[%c64, %c0_51], %86 {strides = array<i32>} : memref<144x896xf32, #tpu.memory_space<vmem>>, vector<16x896xf32>,
      %c895_i32 = arith.constant 895 : i32
      %88 = tpu.dynamic_rotate %13 by %c895_i32 dim 1 : vector<16x896xf32>, i32 -> vector<16x896xf32>
      %c27_i32 = arith.constant 27 : i32
      %89 = vector.broadcast %c27_i32 : i32 to vector<16x896xi32>
      %90 = arith.cmpi slt, %15, %89 : vector<16x896xi32>
      %cst_52 = arith.constant 0.000000e+00 : f32
      %91 = vector.broadcast %cst_52 : f32 to vector<16x896xf32>
      %92 = arith.select %90, %88, %91 : vector<16x896xi1>, vector<16x896xf32>
      %c0_i32_53 = arith.constant 0 : i32
      %93 = tpu.dynamic_rotate %14 by %c0_i32_53 dim 1 : vector<16x896xf32>, i32 -> vector<16x896xf32>
      %c1_i32_54 = arith.constant 1 : i32
      %94 = vector.broadcast %c1_i32_54 : i32 to vector<16x896xi32>
      %95 = arith.cmpi sge, %15, %94 : vector<16x896xi32>
      %c28_i32_55 = arith.constant 28 : i32
      %96 = vector.broadcast %c28_i32_55 : i32 to vector<16x896xi32>
      %97 = arith.cmpi slt, %15, %96 : vector<16x896xi32>
      %98 = arith.andi %95, %97 : vector<16x896xi1>
      %cst_56 = arith.constant 0.000000e+00 : f32
      %99 = vector.broadcast %cst_56 : f32 to vector<16x896xf32>
      %100 = arith.select %98, %93, %99 : vector<16x896xi1>, vector<16x896xf32>
      %101 = arith.addf %92, %100 : vector<16x896xf32>
      %c80 = arith.constant 80 : index
      %c0_57 = arith.constant 0 : index
      %102 = vector.load %arg7[%c80, %c0_57] : memref<144x896xf32, #tpu.memory_space<vmem>>, vector<16x896xf32>
      tpu.vector_store %arg7[%c80, %c0_57], %101 {strides = array<i32>} : memref<144x896xf32, #tpu.memory_space<vmem>>, vector<16x896xf32>,
      %c894_i32 = arith.constant 894 : i32
      %103 = tpu.dynamic_rotate %13 by %c894_i32 dim 1 : vector<16x896xf32>, i32 -> vector<16x896xf32>
      %c26_i32 = arith.constant 26 : i32
      %104 = vector.broadcast %c26_i32 : i32 to vector<16x896xi32>
      %105 = arith.cmpi slt, %15, %104 : vector<16x896xi32>
      %cst_58 = arith.constant 0.000000e+00 : f32
      %106 = vector.broadcast %cst_58 : f32 to vector<16x896xf32>
      %107 = arith.select %105, %103, %106 : vector<16x896xi1>, vector<16x896xf32>
      %c895_i32_59 = arith.constant 895 : i32
      %108 = tpu.dynamic_rotate %14 by %c895_i32_59 dim 1 : vector<16x896xf32>, i32 -> vector<16x896xf32>
      %c1_i32_60 = arith.constant 1 : i32
      %109 = vector.broadcast %c1_i32_60 : i32 to vector<16x896xi32>
      %110 = arith.cmpi sge, %15, %109 : vector<16x896xi32>
      %c27_i32_61 = arith.constant 27 : i32
      %111 = vector.broadcast %c27_i32_61 : i32 to vector<16x896xi32>
      %112 = arith.cmpi slt, %15, %111 : vector<16x896xi32>
      %113 = arith.andi %110, %112 : vector<16x896xi1>
      %cst_62 = arith.constant 0.000000e+00 : f32
      %114 = vector.broadcast %cst_62 : f32 to vector<16x896xf32>
      %115 = arith.select %113, %108, %114 : vector<16x896xi1>, vector<16x896xf32>
      %116 = arith.addf %107, %115 : vector<16x896xf32>
      %c96 = arith.constant 96 : index
      %c0_63 = arith.constant 0 : index
      %117 = vector.load %arg7[%c96, %c0_63] : memref<144x896xf32, #tpu.memory_space<vmem>>, vector<16x896xf32>
      tpu.vector_store %arg7[%c96, %c0_63], %116 {strides = array<i32>} : memref<144x896xf32, #tpu.memory_space<vmem>>, vector<16x896xf32>,
      %c893_i32 = arith.constant 893 : i32
      %118 = tpu.dynamic_rotate %13 by %c893_i32 dim 1 : vector<16x896xf32>, i32 -> vector<16x896xf32>
      %c25_i32 = arith.constant 25 : i32
      %119 = vector.broadcast %c25_i32 : i32 to vector<16x896xi32>
      %120 = arith.cmpi slt, %15, %119 : vector<16x896xi32>
      %cst_64 = arith.constant 0.000000e+00 : f32
      %121 = vector.broadcast %cst_64 : f32 to vector<16x896xf32>
      %122 = arith.select %120, %118, %121 : vector<16x896xi1>, vector<16x896xf32>
      %c894_i32_65 = arith.constant 894 : i32
      %123 = tpu.dynamic_rotate %14 by %c894_i32_65 dim 1 : vector<16x896xf32>, i32 -> vector<16x896xf32>
      %c1_i32_66 = arith.constant 1 : i32
      %124 = vector.broadcast %c1_i32_66 : i32 to vector<16x896xi32>
      %125 = arith.cmpi sge, %15, %124 : vector<16x896xi32>
      %c26_i32_67 = arith.constant 26 : i32
      %126 = vector.broadcast %c26_i32_67 : i32 to vector<16x896xi32>
      %127 = arith.cmpi slt, %15, %126 : vector<16x896xi32>
      %128 = arith.andi %125, %127 : vector<16x896xi1>
      %cst_68 = arith.constant 0.000000e+00 : f32
      %129 = vector.broadcast %cst_68 : f32 to vector<16x896xf32>
      %130 = arith.select %128, %123, %129 : vector<16x896xi1>, vector<16x896xf32>
      %131 = arith.addf %122, %130 : vector<16x896xf32>
      %c112 = arith.constant 112 : index
      %c0_69 = arith.constant 0 : index
      %132 = vector.load %arg7[%c112, %c0_69] : memref<144x896xf32, #tpu.memory_space<vmem>>, vector<16x896xf32>
      tpu.vector_store %arg7[%c112, %c0_69], %131 {strides = array<i32>} : memref<144x896xf32, #tpu.memory_space<vmem>>, vector<16x896xf32>,
      %c892_i32 = arith.constant 892 : i32
      %133 = tpu.dynamic_rotate %13 by %c892_i32 dim 1 : vector<16x896xf32>, i32 -> vector<16x896xf32>
      %c24_i32 = arith.constant 24 : i32
      %134 = vector.broadcast %c24_i32 : i32 to vector<16x896xi32>
      %135 = arith.cmpi slt, %15, %134 : vector<16x896xi32>
      %cst_70 = arith.constant 0.000000e+00 : f32
      %136 = vector.broadcast %cst_70 : f32 to vector<16x896xf32>
      %137 = arith.select %135, %133, %136 : vector<16x896xi1>, vector<16x896xf32>
      %c893_i32_71 = arith.constant 893 : i32
      %138 = tpu.dynamic_rotate %14 by %c893_i32_71 dim 1 : vector<16x896xf32>, i32 -> vector<16x896xf32>
      %c1_i32_72 = arith.constant 1 : i32
      %139 = vector.broadcast %c1_i32_72 : i32 to vector<16x896xi32>
      %140 = arith.cmpi sge, %15, %139 : vector<16x896xi32>
      %c25_i32_73 = arith.constant 25 : i32
      %141 = vector.broadcast %c25_i32_73 : i32 to vector<16x896xi32>
      %142 = arith.cmpi slt, %15, %141 : vector<16x896xi32>
      %143 = arith.andi %140, %142 : vector<16x896xi1>
      %cst_74 = arith.constant 0.000000e+00 : f32
      %144 = vector.broadcast %cst_74 : f32 to vector<16x896xf32>
      %145 = arith.select %143, %138, %144 : vector<16x896xi1>, vector<16x896xf32>
      %146 = arith.addf %137, %145 : vector<16x896xf32>
      %c128 = arith.constant 128 : index
      %c0_75 = arith.constant 0 : index
      %147 = vector.load %arg7[%c128, %c0_75] : memref<144x896xf32, #tpu.memory_space<vmem>>, vector<16x896xf32>
      tpu.vector_store %arg7[%c128, %c0_75], %146 {strides = array<i32>} : memref<144x896xf32, #tpu.memory_space<vmem>>, vector<16x896xf32>,
    } else {
    }
    %c0 = arith.constant 0 : index
    %c0_1 = arith.constant 0 : index
    %3 = vector.load %arg3[%c0, %c0_1] : memref<96x144xf32, #tpu.memory_space<vmem>>, vector<96x144xf32>
    %c0_2 = arith.constant 0 : index
    %c0_3 = arith.constant 0 : index
    %4 = vector.load %arg7[%c0_2, %c0_3] : memref<144x896xf32, #tpu.memory_space<vmem>>, vector<144x784xf32>
    %cst = arith.constant dense<0.000000e+00> : vector<96x784xf32>
    %5 = tpu.matmul %3, %4, %cst {dimension_numbers = #tpu.dot_dimension_numbers<[1], [0], [0], [1], [0, 0, 1, 1], [], []>} : vector<96x144xf32>, vector<144x784xf32>, vector<96x784xf32> -> vector<96x784xf32>
    %c0_4 = arith.constant 0 : index
    %c0_5 = arith.constant 0 : index
    %6 = vector.load %arg5[%c0_4, %c0_5] : memref<96x784xf32, #tpu.memory_space<vmem>>, vector<96x784xf32>
    tpu.vector_store %arg5[%c0_4, %c0_5], %5 {strides = array<i32>} : memref<96x784xf32, #tpu.memory_space<vmem>>, vector<96x784xf32>,
    return
  }
  func.func @transform_0(%arg0: i32) -> (i32, i32) {
    %c0_i32 = arith.constant 0 : i32
    %c0_i32_0 = arith.constant 0 : i32
    %c0_i32_1 = arith.constant 0 : i32
    return %c0_i32, %c0_i32_0 : i32, i32
  }
  func.func @transform_1(%arg0: i32) -> (i32, i32) {
    %c0_i32 = arith.constant 0 : i32
    %c0_i32_0 = arith.constant 0 : i32
    %c0_i32_1 = arith.constant 0 : i32
    return %c0_i32, %c0_i32_0 : i32, i32
  }
  func.func @transform_2(%arg0: i32) -> (i32, i32) {
    %c0_i32 = arith.constant 0 : i32
    %c0_i32_0 = arith.constant 0 : i32
    return %arg0, %c0_i32 : i32, i32
  }
  func.func @transform_3(%arg0: i32) -> (i32, i32) {
    %c0_i32 = arith.constant 0 : i32
    %c0_i32_0 = arith.constant 0 : i32
    %c0_i32_1 = arith.constant 0 : i32
    return %c0_i32, %c0_i32_0 : i32, i32
  }
  func.func @transform_4(%arg0: i32) -> (i32, i32) {
    %c0_i32 = arith.constant 0 : i32
    %c0_i32_0 = arith.constant 0 : i32
    return %arg0, %c0_i32 : i32, i32
  }
}

</mosaic_0001>

<llo_original>
// kernel: kernel_generated_3_forward.1
$region0: #{kernel_generated_3_forward.1}
  #allocation0 [shape = 'u32[]', space=smem, size = 0x4, offset = 0x4, fixed_abs, tag = 'smem constant byte address 0x4 - core index']
  #allocation1 [shape = 'u32[72,128]{1,0:T(1,128)}', space=vmem, size = 0x9000, scoped, tag = 'internal scratch']
  #allocation2 [shape = 'f32[32,896]{1,0:T(8,128)}', space=vmem, size = 0x1c000, scoped, tag = 'scratch operand']
  #allocation3 [shape = 'f32[144,896]{1,0:T(8,128)}', space=vmem, size = 0x7e000, scoped, tag = 'scratch operand']
  %s0 = inlined_call_operand.vmem [shape: f32[32,48], index: 0, kind: input, shape index: {}]
  %s1 = inlined_call_operand.vmem [shape: f32[48,784], index: 1, kind: input, shape index: {}]
  %s2 = inlined_call_operand.vmem [shape: f32[192,144], index: 2, kind: input, shape index: {}]
  %s3 = inlined_call_operand.vmem [shape: s32[16,896], index: 3, kind: input, shape index: {}]
  %s4 = inlined_call_operand.vmem [shape: f32[192,784], index: 4, kind: output, shape index: {}]
  %s5 = sld [smem:[#allocation0]]
  $region53: #{kernel_generated_3_forward.1} parent=0
    _
  %s7 = ssub.s32 1, %s5
  %s8 = scalar_select 0, %s7, %s5
  loop: start=0, step=1, limit=4
  $region2: #{kernel_generated_3_forward.1} parent=0 // loop_pre_header
    _
  $region3: #{kernel_generated_3_forward.1} parent=0 // loop_header
    %s10 = sphi 0, %s14
    %p11 = scmp.ge.s32.totalorder %s10, 4
    %s18 = sphi 0, %s18
    %s20 = sphi 0, %s18
    %s21 = sphi 0, %s20
    %s35 = sphi 0, %s21
    %s39 = sphi 0, %s39
    %s41 = sphi 0, %s39
    %s42 = sphi 0, %s41
    %s56 = sphi 0, %s42
    %s62 = sphi 0, %s64
    %s65 = sphi 0, %s62
    %s66 = sphi 0, %s65
    %s82 = sphi 0, %s66
    %s86 = sphi 0, %s86
    %s88 = sphi 0, %s86
    %s89 = sphi 0, %s88
    %s103 = sphi 0, %s89
    %s109 = sphi 0, %s111
    %s112 = sphi 0, %s109
    %s113 = sphi 0, %s112
    %s129 = sphi 0, %s113
  $region4: #{kernel_generated_3_forward.1} parent=0 // loop_header_branch
    %13 = sbr.rel (%p11) target = $region8
  $region5: #{kernel_generated_3_forward.1} parent=0 // loop_body
    %s15 = ssub.s32 %s10, 1
    %s16 = ssub.s32 %s10, 2
    %s17 = sadd.s32 %s10, 1
    %s19 = sadd.s32 %s18, 1
    %p22 = scmp.eq.s32.totalorder %s10, 1
    %p23 = scmp.ne.s32.totalorder %s18, %s20
    %p24 = scmp.eq.s32.totalorder %s10, 0
    %p25 = por %p23, %p24
    %p26 = scmp.ne.s32.totalorder %s18, %s20
    %p27 = scmp.eq.s32.totalorder %s15, 1
    %p28 = por %p26, %p27
    %p29 = scmp.ne.s32.totalorder %s20, %s21
    %p30 = scmp.eq.s32.totalorder %s15, 0
    %p31 = por %p29, %p30
    %p32 = scmp.ne.s32.totalorder %s20, %s21
    %p33 = scmp.eq.s32.totalorder %s16, 1
    %p34 = por %p32, %p33
    %p36 = scmp.ne.s32.totalorder %s21, %s35
    %p37 = scmp.eq.s32.totalorder %s16, 0
    %p38 = por %p36, %p37
    %s40 = sadd.s32 %s39, 1
    %p43 = scmp.eq.s32.totalorder %s10, 1
    %p44 = scmp.ne.s32.totalorder %s39, %s41
    %p45 = scmp.eq.s32.totalorder %s10, 0
    %p46 = por %p44, %p45
    %p47 = scmp.ne.s32.totalorder %s39, %s41
    %p48 = scmp.eq.s32.totalorder %s15, 1
    %p49 = por %p47, %p48
    %p50 = scmp.ne.s32.totalorder %s41, %s42
    %p51 = scmp.eq.s32.totalorder %s15, 0
    %p52 = por %p50, %p51
    %p53 = scmp.ne.s32.totalorder %s41, %s42
    %p54 = scmp.eq.s32.totalorder %s16, 1
    %p55 = por %p53, %p54
    %p57 = scmp.ne.s32.totalorder %s42, %s56
    %p58 = scmp.eq.s32.totalorder %s16, 0
    %p59 = por %p57, %p58
    %s60 = ssub.s32 %s10, %s17
    %p61 = scmp.eq.s32.totalorder %s60, 0
    %s63 = sadd.s32 %s62, 1
    %s64 = scalar_select %p61, %s62, %s63
    %p67 = pneg %p61
    %p68 = scmp.eq.s32.totalorder %s10, 1
    %p69 = por %p67, %p68
    %p70 = scmp.ne.s32.totalorder %s62, %s65
    %p71 = scmp.eq.s32.totalorder %s10, 0
    %p72 = por %p70, %p71
    %p73 = scmp.ne.s32.totalorder %s62, %s65
    %p74 = scmp.eq.s32.totalorder %s15, 1
    %p75 = por %p73, %p74
    %p76 = scmp.ne.s32.totalorder %s65, %s66
    %p77 = scmp.eq.s32.totalorder %s15, 0
    %p78 = por %p76, %p77
    %p79 = scmp.ne.s32.totalorder %s65, %s66
    %p80 = scmp.eq.s32.totalorder %s16, 1
    %p81 = por %p79, %p80
    %p83 = scmp.ne.s32.totalorder %s66, %s82
    %p84 = scmp.eq.s32.totalorder %s16, 0
    %p85 = por %p83, %p84
    %s87 = sadd.s32 %s86, 1
    %p90 = scmp.eq.s32.totalorder %s10, 1
    %p91 = scmp.ne.s32.totalorder %s86, %s88
    %p92 = scmp.eq.s32.totalorder %s10, 0
    %p93 = por %p91, %p92
    %p94 = scmp.ne.s32.totalorder %s86, %s88
    %p95 = scmp.eq.s32.totalorder %s15, 1
    %p96 = por %p94, %p95
    %p97 = scmp.ne.s32.totalorder %s88, %s89
    %p98 = scmp.eq.s32.totalorder %s15, 0
    %p99 = por %p97, %p98
    %p100 = scmp.ne.s32.totalorder %s88, %s89
    %p101 = scmp.eq.s32.totalorder %s16, 1
    %p102 = por %p100, %p101
    %p104 = scmp.ne.s32.totalorder %s89, %s103
    %p105 = scmp.eq.s32.totalorder %s16, 0
    %p106 = por %p104, %p105
    %s107 = ssub.s32 %s10, %s17
    %p108 = scmp.eq.s32.totalorder %s107, 0
    %s110 = sadd.s32 %s109, 1
    %s111 = scalar_select %p108, %s109, %s110
    %p114 = pneg %p108
    %p115 = scmp.eq.s32.totalorder %s10, 1
    %p116 = por %p114, %p115
    %p117 = scmp.ne.s32.totalorder %s109, %s112
    %p118 = scmp.eq.s32.totalorder %s10, 0
    %p119 = por %p117, %p118
    %p120 = scmp.ne.s32.totalorder %s109, %s112
    %p121 = scmp.eq.s32.totalorder %s15, 1
    %p122 = por %p120, %p121
    %p123 = scmp.ne.s32.totalorder %s112, %s113
    %p124 = scmp.eq.s32.totalorder %s15, 0
    %p125 = por %p123, %p124
    %p126 = scmp.ne.s32.totalorder %s112, %s113
    %p127 = scmp.eq.s32.totalorder %s16, 1
    %p128 = por %p126, %p127
    %p130 = scmp.ne.s32.totalorder %s113, %s129
    %p131 = scmp.eq.s32.totalorder %s16, 0
    %p132 = por %p130, %p131
    %p133 = scmp.le.s32.totalorder 1, %s10
    %p134 = scmp.lt.s32.totalorder %s10, 3
    %p135 = pnand %p133, %p134
    %p136 = pneg %p135
    // Predicated region
    $region9: #{kernel_generated_3_forward.1} parent=5 // pred_check
      _
    $region10: #{kernel_generated_3_forward.1} parent=5 // pred_check_branch
      %138 = sbr.rel (%p135) target = $region12
    $region11: #{kernel_generated_3_forward.1} parent=5 // pred_region
      %s139 = ssub.s32 %s10, 1
      // Predicated region
      $region13: #{kernel_generated_3_forward.1} parent=11 // pred_check
        %p140 = pneg %p31
      $region14: #{kernel_generated_3_forward.1} parent=11 // pred_check_branch
        %142 = sbr.rel (%p140) target = $region16
      $region15: #{kernel_generated_3_forward.1} parent=11 // pred_region
        _
      $region16: #{kernel_generated_3_forward.1} parent=11 // pred_fallthru
        _
      // Predicated region
      $region17: #{kernel_generated_3_forward.1} parent=11 // pred_check
        %p143 = pneg %p52
      $region18: #{kernel_generated_3_forward.1} parent=11 // pred_check_branch
        %145 = sbr.rel (%p143) target = $region20
      $region19: #{kernel_generated_3_forward.1} parent=11 // pred_region
        _
      $region20: #{kernel_generated_3_forward.1} parent=11 // pred_fallthru
        _
      // Predicated region
      $region21: #{kernel_generated_3_forward.1} parent=11 // pred_check
        %p146 = pneg %p99
      $region22: #{kernel_generated_3_forward.1} parent=11 // pred_check_branch
        %148 = sbr.rel (%p146) target = $region24
      $region23: #{kernel_generated_3_forward.1} parent=11 // pred_region
        _
      $region24: #{kernel_generated_3_forward.1} parent=11 // pred_fallthru
        _
    $region12: #{kernel_generated_3_forward.1} parent=5 // pred_fallthru
      _
    %p149 = scmp.lt.s32.totalorder %s10, 2
    // Predicated region
    $region25: #{kernel_generated_3_forward.1} parent=5 // pred_check
      %p150 = pneg %p149
    $region26: #{kernel_generated_3_forward.1} parent=5 // pred_check_branch
      %152 = sbr.rel (%p150) target = $region28
    $region27: #{kernel_generated_3_forward.1} parent=5 // pred_region
      // Predicated region
      $region29: #{kernel_generated_3_forward.1} parent=27 // pred_check
        %p153 = pneg %p72
      $region30: #{kernel_generated_3_forward.1} parent=27 // pred_check_branch
        %155 = sbr.rel (%p153) target = $region32
      $region31: #{kernel_generated_3_forward.1} parent=27 // pred_region
        %s156 = smul.u32 12, %s10
        %p157 = scmp.lt.s32.totalorder %s156, 23
        %s158 = scalar_select %p157, %s156, 23
        %s159 = smul.addr %s158, 2
        %s160 = smul.addr %s159, 8
        %s161 = scalar_lea.vmem %s2, %s160
        %s162 = smul.u32 12, %s10
      $region32: #{kernel_generated_3_forward.1} parent=27 // pred_fallthru
        _
    $region28: #{kernel_generated_3_forward.1} parent=5 // pred_fallthru
      _
    %p163 = scmp.le.s32.totalorder 1, %s10
    %p164 = scmp.lt.s32.totalorder %s10, 3
    %p165 = pnand %p163, %p164
    %p166 = pneg %p165
    // Predicated region
    $region33: #{kernel_generated_3_forward.1} parent=5 // pred_check
      _
    $region34: #{kernel_generated_3_forward.1} parent=5 // pred_check_branch
      %168 = sbr.rel (%p165) target = $region36
    $region35: #{kernel_generated_3_forward.1} parent=5 // pred_region
      %s169 = ssub.s32 %s10, 1
      %p170 = pneg %p31
      %p171 = pneg %p28
      %p172 = pneg %p52
      %p173 = pneg %p49
      %s174 = smul.u32 12, %s15
      %p175 = scmp.lt.s32.totalorder %s174, 23
      %s176 = scalar_select %p175, %s174, 23
      %s177 = smul.addr %s176, 2
      %s178 = smul.addr %s177, 8
      %s179 = scalar_lea.vmem %s2, %s178
      %p180 = pneg %p78
      %p181 = pneg %p75
      %p182 = pneg %p99
      %p183 = pneg %p96
      %p184 = pneg %p125
      %p185 = pneg %p122
      %s186 = smul.u32 12, %s15
      %p187 = scmp.lt.s32.totalorder %s186, 23
      %s188 = scalar_select %p187, %s186, 23
      %s189 = smul.addr %s188, 7
      %s190 = smul.addr %s189, 8
      %s191 = scalar_lea.vmem %s4, %s190
      %s192 = smul.u32 12, %s15
      %p193 = scmp.lt.s32.totalorder %s192, 23
      %s194 = scalar_select %p193, %s192, 23
      %s195 = smul.addr %s194, 2
      %s196 = smul.addr %s195, 8
      %s197 = scalar_lea.vmem %s2, %s196
      %s198 = smul.u32 12, %s15
      %s199 = smul.u32 12, %s15
      %p200 = scmp.lt.s32.totalorder %s199, 23
      %s201 = scalar_select %p200, %s199, 23
      %s202 = smul.addr %s201, 7
      %s203 = smul.addr %s202, 8
      %s204 = scalar_lea.vmem %s4, %s203
      %s205 = smul.u32 12, %s15
      %p206 = scmp.eq.s32.totalorder %s15, 0
      // Predicated region
      $region37: #{kernel_generated_3_forward.1} parent=35 // pred_check
        %p207 = pneg %p206
      $region38: #{kernel_generated_3_forward.1} parent=35 // pred_check_branch
        %209 = sbr.rel (%p207) target = $region40
      $region39: #{kernel_generated_3_forward.1} parent=35 // pred_region
        %v210 = vld [vmem:[%s0] sm:$0xff]
        %v211 = vld [vmem:[%s0 + $0x8] sm:$0xff]
        %v212 = vld [vmem:[%s0 + $0x10] sm:$0xff]
        %v213 = vld [vmem:[%s0 + $0x18] sm:$0xff]
        %v214 = vld [vmem:[%s1] sm:$0xff]
        %v215 = vld [vmem:[%s1 + $0x8] sm:$0xff]
        %v216 = vld [vmem:[%s1 + $0x10] sm:$0xff]
        %v217 = vld [vmem:[%s1 + $0x18] sm:$0xff]
        %v218 = vld [vmem:[%s1 + $0x20] sm:$0xff]
        %v219 = vld [vmem:[%s1 + $0x28] sm:$0xff]
        %v220 = vld [vmem:[%s1 + $0x30] sm:$0xff]
        %v221 = vld [vmem:[%s1 + $0x38] sm:$0xff]
        %v222 = vld [vmem:[%s1 + $0x40] sm:$0xff]
        %v223 = vld [vmem:[%s1 + $0x48] sm:$0xff]
        %v224 = vld [vmem:[%s1 + $0x50] sm:$0xff]
        %v225 = vld [vmem:[%s1 + $0x58] sm:$0xff]
        %v226 = vld [vmem:[%s1 + $0x60] sm:$0xff]
        %v227 = vld [vmem:[%s1 + $0x68] sm:$0xff]
        %v228 = vld [vmem:[%s1 + $0x70] sm:$0xff]
        %v229 = vld [vmem:[%s1 + $0x78] sm:$0xff]
        %v230 = vld [vmem:[%s1 + $0x80] sm:$0xff]
        %v231 = vld [vmem:[%s1 + $0x88] sm:$0xff]
        %v232 = vld [vmem:[%s1 + $0x90] sm:$0xff]
        %v233 = vld [vmem:[%s1 + $0x98] sm:$0xff]
        %v234 = vld [vmem:[%s1 + $0xa0] sm:$0xff]
        %v235 = vld [vmem:[%s1 + $0xa8] sm:$0xff]
        %v236 = vld [vmem:[%s1 + $0xb0] sm:$0xff]
        %v237 = vld [vmem:[%s1 + $0xb8] sm:$0xff]
        %v238 = vld [vmem:[%s1 + $0xc0] sm:$0xff]
        %v239 = vld [vmem:[%s1 + $0xc8] sm:$0xff]
        %v240 = vld [vmem:[%s1 + $0xd0] sm:$0xff]
        %v241 = vld [vmem:[%s1 + $0xd8] sm:$0xff]
        %v242 = vld [vmem:[%s1 + $0xe0] sm:$0xff]
        %v243 = vld [vmem:[%s1 + $0xe8] sm:$0xff]
        %v244 = vld [vmem:[%s1 + $0xf0] sm:$0xff]
        %v245 = vld [vmem:[%s1 + $0xf8] sm:$0xff]
        %v246 = vld [vmem:[%s1 + $0x100] sm:$0xff]
        %v247 = vld [vmem:[%s1 + $0x108] sm:$0xff]
        %v248 = vld [vmem:[%s1 + $0x110] sm:$0xff]
        %v249 = vld [vmem:[%s1 + $0x118] sm:$0xff]
        %v250 = vld [vmem:[%s1 + $0x120] sm:$0xff]
        %v251 = vld [vmem:[%s1 + $0x128] sm:$0xff]
        %v252 = vld [vmem:[%s1 + $0x130] sm:$0xff]
        %v253 = vld [vmem:[%s1 + $0x138] sm:$0xff]
        %v254 = vld [vmem:[%s1 + $0x140] sm:$0xff]
        %v255 = vld [vmem:[%s1 + $0x148] sm:$0xff]
        %vm256 = vcmask 392192
        %v258 = vsel %vm256, %v210, 0
        %v261 = vsel %vm256, %v211, 0
        %v264 = vsel %vm256, %v212, 0
        %v267 = vsel %vm256, %v213, 0
        %269 = vmatpush.msra.mxu0 0.0
        %270 = vmatpush.msra.mxu0 0.0
        %271 = vmatpush.msra.mxu0 0.0
        %272 = vmatpush.msra.mxu0 0.0
        %273 = vmatpush.msra.mxu0 0.0
        %274 = vmatpush.msra.mxu0 0.0
        %275 = vmatpush.msra.mxu0 0.0
        %276 = vmatpush.msra.mxu0 0.0
        %277 = vmatpush.msra.mxu0 0.0
        %278 = vmatpush.msra.mxu0 0.0
        %279 = vmatpush.msra.mxu0 %v249
        %280 = vmatpush.msra.mxu0 %v242
        %281 = vmatpush.msra.mxu0 %v235
        %282 = vmatpush.msra.mxu0 %v228
        %283 = vmatpush.msra.mxu0 %v221
        %284 = vmatpush.msra.mxu0 %v214
        %285 = vmatmul.f32.gmra.mxu0 %v258
        %v286 = vpop.f32.mrf.mxu0
        %v287 = vadd.f32 0.0, %v286
        %288 = vmatmul.f32.gmra.mxu0 %v261
        %v289 = vpop.f32.mrf.mxu0
        %v290 = vadd.f32 0.0, %v289
        %291 = vmatmul.f32.gmra.mxu0 %v264
        %v292 = vpop.f32.mrf.mxu0
        %v293 = vadd.f32 0.0, %v292
        %294 = vmatmul.f32.gmra.mxu0 %v267
        %v295 = vpop.f32.mrf.mxu0
        %v296 = vadd.f32 0.0, %v295
        %297 = vdwg.mxu0
        %298 = vmatpush.msra.mxu0 0.0
        %299 = vmatpush.msra.mxu0 0.0
        %300 = vmatpush.msra.mxu0 0.0
        %301 = vmatpush.msra.mxu0 0.0
        %302 = vmatpush.msra.mxu0 0.0
        %303 = vmatpush.msra.mxu0 0.0
        %304 = vmatpush.msra.mxu0 0.0
        %305 = vmatpush.msra.mxu0 0.0
        %306 = vmatpush.msra.mxu0 0.0
        %307 = vmatpush.msra.mxu0 0.0
        %308 = vmatpush.msra.mxu0 %v250
        %309 = vmatpush.msra.mxu0 %v243
        %310 = vmatpush.msra.mxu0 %v236
        %311 = vmatpush.msra.mxu0 %v229
        %312 = vmatpush.msra.mxu0 %v222
        %313 = vmatpush.msra.mxu0 %v215
        %314 = vmatmul.f32.gmra.mxu0 %v258
        %v315 = vpop.f32.mrf.mxu0
        %v316 = vadd.f32 0.0, %v315
        %317 = vmatmul.f32.gmra.mxu0 %v261
        %v318 = vpop.f32.mrf.mxu0
        %v319 = vadd.f32 0.0, %v318
        %320 = vmatmul.f32.gmra.mxu0 %v264
        %v321 = vpop.f32.mrf.mxu0
        %v322 = vadd.f32 0.0, %v321
        %323 = vmatmul.f32.gmra.mxu0 %v267
        %v324 = vpop.f32.mrf.mxu0
        %v325 = vadd.f32 0.0, %v324
        %326 = vdwg.mxu0
        %327 = vmatpush.msra.mxu0 0.0
        %328 = vmatpush.msra.mxu0 0.0
        %329 = vmatpush.msra.mxu0 0.0
        %330 = vmatpush.msra.mxu0 0.0
        %331 = vmatpush.msra.mxu0 0.0
        %332 = vmatpush.msra.mxu0 0.0
        %333 = vmatpush.msra.mxu0 0.0
        %334 = vmatpush.msra.mxu0 0.0
        %335 = vmatpush.msra.mxu0 0.0
        %336 = vmatpush.msra.mxu0 0.0
        %337 = vmatpush.msra.mxu0 %v251
        %338 = vmatpush.msra.mxu0 %v244
        %339 = vmatpush.msra.mxu0 %v237
        %340 = vmatpush.msra.mxu0 %v230
        %341 = vmatpush.msra.mxu0 %v223
        %342 = vmatpush.msra.mxu0 %v216
        %343 = vmatmul.f32.gmra.mxu0 %v258
        %v344 = vpop.f32.mrf.mxu0
        %v345 = vadd.f32 0.0, %v344
        %346 = vmatmul.f32.gmra.mxu0 %v261
        %v347 = vpop.f32.mrf.mxu0
        %v348 = vadd.f32 0.0, %v347
        %349 = vmatmul.f32.gmra.mxu0 %v264
        %v350 = vpop.f32.mrf.mxu0
        %v351 = vadd.f32 0.0, %v350
        %352 = vmatmul.f32.gmra.mxu0 %v267
        %v353 = vpop.f32.mrf.mxu0
        %v354 = vadd.f32 0.0, %v353
        %355 = vdwg.mxu0
        %356 = vmatpush.msra.mxu0 0.0
        %357 = vmatpush.msra.mxu0 0.0
        %358 = vmatpush.msra.mxu0 0.0
        %359 = vmatpush.msra.mxu0 0.0
        %360 = vmatpush.msra.mxu0 0.0
        %361 = vmatpush.msra.mxu0 0.0
        %362 = vmatpush.msra.mxu0 0.0
        %363 = vmatpush.msra.mxu0 0.0
        %364 = vmatpush.msra.mxu0 0.0
        %365 = vmatpush.msra.mxu0 0.0
        %366 = vmatpush.msra.mxu0 %v252
        %367 = vmatpush.msra.mxu0 %v245
        %368 = vmatpush.msra.mxu0 %v238
        %369 = vmatpush.msra.mxu0 %v231
        %370 = vmatpush.msra.mxu0 %v224
        %371 = vmatpush.msra.mxu0 %v217
        %372 = vmatmul.f32.gmra.mxu0 %v258
        %v373 = vpop.f32.mrf.mxu0
        %v374 = vadd.f32 0.0, %v373
        %375 = vmatmul.f32.gmra.mxu0 %v261
        %v376 = vpop.f32.mrf.mxu0
        %v377 = vadd.f32 0.0, %v376
        %378 = vmatmul.f32.gmra.mxu0 %v264
        %v379 = vpop.f32.mrf.mxu0
        %v380 = vadd.f32 0.0, %v379
        %381 = vmatmul.f32.gmra.mxu0 %v267
        %v382 = vpop.f32.mrf.mxu0
        %v383 = vadd.f32 0.0, %v382
        %384 = vdwg.mxu0
        %385 = vmatpush.msra.mxu0 0.0
        %386 = vmatpush.msra.mxu0 0.0
        %387 = vmatpush.msra.mxu0 0.0
        %388 = vmatpush.msra.mxu0 0.0
        %389 = vmatpush.msra.mxu0 0.0
        %390 = vmatpush.msra.mxu0 0.0
        %391 = vmatpush.msra.mxu0 0.0
        %392 = vmatpush.msra.mxu0 0.0
        %393 = vmatpush.msra.mxu0 0.0
        %394 = vmatpush.msra.mxu0 0.0
        %395 = vmatpush.msra.mxu0 %v253
        %396 = vmatpush.msra.mxu0 %v246
        %397 = vmatpush.msra.mxu0 %v239
        %398 = vmatpush.msra.mxu0 %v232
        %399 = vmatpush.msra.mxu0 %v225
        %400 = vmatpush.msra.mxu0 %v218
        %401 = vmatmul.f32.gmra.mxu0 %v258
        %v402 = vpop.f32.mrf.mxu0
        %v403 = vadd.f32 0.0, %v402
        %404 = vmatmul.f32.gmra.mxu0 %v261
        %v405 = vpop.f32.mrf.mxu0
        %v406 = vadd.f32 0.0, %v405
        %407 = vmatmul.f32.gmra.mxu0 %v264
        %v408 = vpop.f32.mrf.mxu0
        %v409 = vadd.f32 0.0, %v408
        %410 = vmatmul.f32.gmra.mxu0 %v267
        %v411 = vpop.f32.mrf.mxu0
        %v412 = vadd.f32 0.0, %v411
        %413 = vdwg.mxu0
        %414 = vmatpush.msra.mxu0 0.0
        %415 = vmatpush.msra.mxu0 0.0
        %416 = vmatpush.msra.mxu0 0.0
        %417 = vmatpush.msra.mxu0 0.0
        %418 = vmatpush.msra.mxu0 0.0
        %419 = vmatpush.msra.mxu0 0.0
        %420 = vmatpush.msra.mxu0 0.0
        %421 = vmatpush.msra.mxu0 0.0
        %422 = vmatpush.msra.mxu0 0.0
        %423 = vmatpush.msra.mxu0 0.0
        %424 = vmatpush.msra.mxu0 %v254
        %425 = vmatpush.msra.mxu0 %v247
        %426 = vmatpush.msra.mxu0 %v240
        %427 = vmatpush.msra.mxu0 %v233
        %428 = vmatpush.msra.mxu0 %v226
        %429 = vmatpush.msra.mxu0 %v219
        %430 = vmatmul.f32.gmra.mxu0 %v258
        %v431 = vpop.f32.mrf.mxu0
        %v432 = vadd.f32 0.0, %v431
        %433 = vmatmul.f32.gmra.mxu0 %v261
        %v434 = vpop.f32.mrf.mxu0
        %v435 = vadd.f32 0.0, %v434
        %436 = vmatmul.f32.gmra.mxu0 %v264
        %v437 = vpop.f32.mrf.mxu0
        %v438 = vadd.f32 0.0, %v437
        %439 = vmatmul.f32.gmra.mxu0 %v267
        %v440 = vpop.f32.mrf.mxu0
        %v441 = vadd.f32 0.0, %v440
        %442 = vdwg.mxu0
        %443 = vmatpush.msra.mxu0 0.0
        %444 = vmatpush.msra.mxu0 0.0
        %445 = vmatpush.msra.mxu0 0.0
        %446 = vmatpush.msra.mxu0 0.0
        %447 = vmatpush.msra.mxu0 0.0
        %448 = vmatpush.msra.mxu0 0.0
        %449 = vmatpush.msra.mxu0 0.0
        %450 = vmatpush.msra.mxu0 0.0
        %451 = vmatpush.msra.mxu0 0.0
        %452 = vmatpush.msra.mxu0 0.0
        %453 = vmatpush.msra.mxu0 %v255
        %454 = vmatpush.msra.mxu0 %v248
        %455 = vmatpush.msra.mxu0 %v241
        %456 = vmatpush.msra.mxu0 %v234
        %457 = vmatpush.msra.mxu0 %v227
        %458 = vmatpush.msra.mxu0 %v220
        %459 = vmatmul.f32.gmra.mxu0 %v258
        %v460 = vpop.f32.mrf.mxu0
        %v461 = vadd.f32 0.0, %v460
        %462 = vmatmul.f32.gmra.mxu0 %v261
        %v463 = vpop.f32.mrf.mxu0
        %v464 = vadd.f32 0.0, %v463
        %465 = vmatmul.f32.gmra.mxu0 %v264
        %v466 = vpop.f32.mrf.mxu0
        %v467 = vadd.f32 0.0, %v466
        %468 = vmatmul.f32.gmra.mxu0 %v267
        %v469 = vpop.f32.mrf.mxu0
        %v470 = vadd.f32 0.0, %v469
        %471 = vdwg.mxu0
        %472 = vst [vmem:[#allocation2] sm:$0xff] %v287
        %473 = vst [vmem:[#allocation2 + $0x8] sm:$0xff] %v316
        %474 = vst [vmem:[#allocation2 + $0x10] sm:$0xff] %v345
        %475 = vst [vmem:[#allocation2 + $0x18] sm:$0xff] %v374
        %476 = vst [vmem:[#allocation2 + $0x20] sm:$0xff] %v403
        %477 = vst [vmem:[#allocation2 + $0x28] sm:$0xff] %v432
        %vm478 = vcmask 130048
        %479 = vst.msk [vmem:[#allocation2 + $0x30] sm:$0xff] %vm478, %v461
        %480 = vst [vmem:[#allocation2 + $0x38] sm:$0xff] %v290
        %481 = vst [vmem:[#allocation2 + $0x40] sm:$0xff] %v319
        %482 = vst [vmem:[#allocation2 + $0x48] sm:$0xff] %v348
        %483 = vst [vmem:[#allocation2 + $0x50] sm:$0xff] %v377
        %484 = vst [vmem:[#allocation2 + $0x58] sm:$0xff] %v406
        %485 = vst [vmem:[#allocation2 + $0x60] sm:$0xff] %v435
        %486 = vst.msk [vmem:[#allocation2 + $0x68] sm:$0xff] %vm478, %v464
        %487 = vst [vmem:[#allocation2 + $0x70] sm:$0xff] %v293
        %488 = vst [vmem:[#allocation2 + $0x78] sm:$0xff] %v322
        %489 = vst [vmem:[#allocation2 + $0x80] sm:$0xff] %v351
        %490 = vst [vmem:[#allocation2 + $0x88] sm:$0xff] %v380
        %491 = vst [vmem:[#allocation2 + $0x90] sm:$0xff] %v409
        %492 = vst [vmem:[#allocation2 + $0x98] sm:$0xff] %v438
        %493 = vst.msk [vmem:[#allocation2 + $0xa0] sm:$0xff] %vm478, %v467
        %494 = vst [vmem:[#allocation2 + $0xa8] sm:$0xff] %v296
        %495 = vst [vmem:[#allocation2 + $0xb0] sm:$0xff] %v325
        %496 = vst [vmem:[#allocation2 + $0xb8] sm:$0xff] %v354
        %497 = vst [vmem:[#allocation2 + $0xc0] sm:$0xff] %v383
        %498 = vst [vmem:[#allocation2 + $0xc8] sm:$0xff] %v412
        %499 = vst [vmem:[#allocation2 + $0xd0] sm:$0xff] %v441
        %500 = vst.msk [vmem:[#allocation2 + $0xd8] sm:$0xff] %vm478, %v470
        %vm501 = vcmask 1047680
        %502 = vst.msk [vmem:[#allocation2 + $0x30] sm:$0xff] %vm501, 0.0
        %503 = vst.msk [vmem:[#allocation2 + $0x68] sm:$0xff] %vm501, 0.0
        %504 = vst.msk [vmem:[#allocation2 + $0xa0] sm:$0xff] %vm501, 0.0
        %505 = vst.msk [vmem:[#allocation2 + $0xd8] sm:$0xff] %vm501, 0.0
        %v506 = vld [vmem:[#allocation2] sm:$0xff]
        %v507 = vld [vmem:[#allocation2 + $0x8] sm:$0xff]
        %v508 = vld [vmem:[#allocation2 + $0x10] sm:$0xff]
        %v509 = vld [vmem:[#allocation2 + $0x18] sm:$0xff]
        %v510 = vld [vmem:[#allocation2 + $0x20] sm:$0xff]
        %v511 = vld [vmem:[#allocation2 + $0x28] sm:$0xff]
        %v512 = vld [vmem:[#allocation2 + $0x30] sm:$0xff]
        %v513 = vld [vmem:[#allocation2 + $0x38] sm:$0xff]
        %v514 = vld [vmem:[#allocation2 + $0x40] sm:$0xff]
        %v515 = vld [vmem:[#allocation2 + $0x48] sm:$0xff]
        %v516 = vld [vmem:[#allocation2 + $0x50] sm:$0xff]
        %v517 = vld [vmem:[#allocation2 + $0x58] sm:$0xff]
        %v518 = vld [vmem:[#allocation2 + $0x60] sm:$0xff]
        %v519 = vld [vmem:[#allocation2 + $0x68] sm:$0xff]
        %v520 = vld [vmem:[#allocation2 + $0x70] sm:$0xff]
        %v521 = vld [vmem:[#allocation2 + $0x78] sm:$0xff]
        %v522 = vld [vmem:[#allocation2 + $0x80] sm:$0xff]
        %v523 = vld [vmem:[#allocation2 + $0x88] sm:$0xff]
        %v524 = vld [vmem:[#allocation2 + $0x90] sm:$0xff]
        %v525 = vld [vmem:[#allocation2 + $0x98] sm:$0xff]
        %v526 = vld [vmem:[#allocation2 + $0xa0] sm:$0xff]
        %v527 = vld [vmem:[#allocation2 + $0xa8] sm:$0xff]
        %v528 = vld [vmem:[#allocation2 + $0xb0] sm:$0xff]
        %v529 = vld [vmem:[#allocation2 + $0xb8] sm:$0xff]
        %v530 = vld [vmem:[#allocation2 + $0xc0] sm:$0xff]
        %v531 = vld [vmem:[#allocation2 + $0xc8] sm:$0xff]
        %v532 = vld [vmem:[#allocation2 + $0xd0] sm:$0xff]
        %v533 = vld [vmem:[#allocation2 + $0xd8] sm:$0xff]
        %v534 = vld [vmem:[%s3] sm:$0xff]
        %v535 = vld [vmem:[%s3 + $0x8] sm:$0xff]
        %v536 = vld [vmem:[%s3 + $0x10] sm:$0xff]
        %v537 = vld [vmem:[%s3 + $0x18] sm:$0xff]
        %v538 = vld [vmem:[%s3 + $0x20] sm:$0xff]
        %v539 = vld [vmem:[%s3 + $0x28] sm:$0xff]
        %v540 = vld [vmem:[%s3 + $0x30] sm:$0xff]
        %v541 = vld [vmem:[%s3 + $0x38] sm:$0xff]
        %v542 = vld [vmem:[%s3 + $0x40] sm:$0xff]
        %v543 = vld [vmem:[%s3 + $0x48] sm:$0xff]
        %v544 = vld [vmem:[%s3 + $0x50] sm:$0xff]
        %v545 = vld [vmem:[%s3 + $0x58] sm:$0xff]
        %v546 = vld [vmem:[%s3 + $0x60] sm:$0xff]
        %v547 = vld [vmem:[%s3 + $0x68] sm:$0xff]
        %vm548 = vcmp.eq.s32.totalorder %v534, 0
        %vm549 = vcmp.eq.s32.totalorder %v535, 0
        %vm550 = vcmp.eq.s32.totalorder %v536, 0
        %vm551 = vcmp.eq.s32.totalorder %v537, 0
        %vm552 = vcmp.eq.s32.totalorder %v538, 0
        %vm553 = vcmp.eq.s32.totalorder %v539, 0
        %vm554 = vcmp.eq.s32.totalorder %v540, 0
        %vm555 = vcmp.eq.s32.totalorder %v541, 0
        %vm556 = vcmp.eq.s32.totalorder %v542, 0
        %vm557 = vcmp.eq.s32.totalorder %v543, 0
        %vm558 = vcmp.eq.s32.totalorder %v544, 0
        %vm559 = vcmp.eq.s32.totalorder %v545, 0
        %vm560 = vcmp.eq.s32.totalorder %v546, 0
        %vm561 = vcmp.eq.s32.totalorder %v547, 0
        %562 = vrot.lane.b32.xlu0 %v506, 4
        %v563 = vpop.permute.xlu0 %562
        %564 = vrot.lane.b32.xlu0 %v513, 4
        %v565 = vpop.permute.xlu0 %564
        %566 = vrot.lane.b32.xlu0 %v507, 4
        %v567 = vpop.permute.xlu0 %566
        %568 = vrot.lane.b32.xlu0 %v514, 4
        %v569 = vpop.permute.xlu0 %568
        %570 = vrot.lane.b32.xlu0 %v508, 4
        %v571 = vpop.permute.xlu0 %570
        %572 = vrot.lane.b32.xlu0 %v515, 4
        %v573 = vpop.permute.xlu0 %572
        %574 = vrot.lane.b32.xlu0 %v509, 4
        %v575 = vpop.permute.xlu0 %574
        %576 = vrot.lane.b32.xlu0 %v516, 4
        %v577 = vpop.permute.xlu0 %576
        %578 = vrot.lane.b32.xlu0 %v510, 4
        %v579 = vpop.permute.xlu0 %578
        %580 = vrot.lane.b32.xlu0 %v517, 4
        %v581 = vpop.permute.xlu0 %580
        %582 = vrot.lane.b32.xlu0 %v511, 4
        %v583 = vpop.permute.xlu0 %582
        %584 = vrot.lane.b32.xlu0 %v518, 4
        %v585 = vpop.permute.xlu0 %584
        %586 = vrot.lane.b32.xlu0 %v512, 4
        %v587 = vpop.permute.xlu0 %586
        %588 = vrot.lane.b32.xlu0 %v519, 4
        %v589 = vpop.permute.xlu0 %588
        %v590 = vlaneseq
        %v591 = vand.u32 %v590, 127
        %vm592 = vcmp.lt.s32.totalorder %v591, 4
        %v593 = vsel %vm592, %v583, %v587
        %v594 = vsel %vm592, %v585, %v589
        %v595 = vsel %vm592, %v579, %v583
        %v596 = vsel %vm592, %v581, %v585
        %v597 = vsel %vm592, %v575, %v579
        %v598 = vsel %vm592, %v577, %v581
        %v599 = vsel %vm592, %v571, %v575
        %v600 = vsel %vm592, %v573, %v577
        %v601 = vsel %vm592, %v567, %v571
        %v602 = vsel %vm592, %v569, %v573
        %v603 = vsel %vm592, %v563, %v567
        %v604 = vsel %vm592, %v565, %v569
        %v605 = vsel %vm592, %v587, %v563
        %v606 = vsel %vm592, %v589, %v565
        %vm607 = vcmp.ge.s32.totalorder %v534, 4
        %vm608 = vcmp.ge.s32.totalorder %v535, 4
        %vm609 = vcmp.ge.s32.totalorder %v536, 4
        %vm610 = vcmp.ge.s32.totalorder %v537, 4
        %vm611 = vcmp.ge.s32.totalorder %v538, 4
        %vm612 = vcmp.ge.s32.totalorder %v539, 4
        %vm613 = vcmp.ge.s32.totalorder %v540, 4
        %vm614 = vcmp.ge.s32.totalorder %v541, 4
        %vm615 = vcmp.ge.s32.totalorder %v542, 4
        %vm616 = vcmp.ge.s32.totalorder %v543, 4
        %vm617 = vcmp.ge.s32.totalorder %v544, 4
        %vm618 = vcmp.ge.s32.totalorder %v545, 4
        %vm619 = vcmp.ge.s32.totalorder %v546, 4
        %vm620 = vcmp.ge.s32.totalorder %v547, 4
        %v621 = vsel %vm607, %v605, 0.0
        %v622 = vsel %vm608, %v603, 0.0
        %v623 = vsel %vm609, %v601, 0.0
        %v624 = vsel %vm610, %v599, 0.0
        %v625 = vsel %vm611, %v597, 0.0
        %v626 = vsel %vm612, %v595, 0.0
        %v627 = vsel %vm613, %v593, 0.0
        %v628 = vsel %vm614, %v606, 0.0
        %v629 = vsel %vm615, %v604, 0.0
        %v630 = vsel %vm616, %v602, 0.0
        %v631 = vsel %vm617, %v600, 0.0
        %v632 = vsel %vm618, %v598, 0.0
        %v633 = vsel %vm619, %v596, 0.0
        %v634 = vsel %vm620, %v594, 0.0
        %635 = vrot.lane.b32.xlu0 %v520, 5
        %v636 = vpop.permute.xlu0 %635
        %637 = vrot.lane.b32.xlu0 %v527, 5
        %v638 = vpop.permute.xlu0 %637
        %639 = vrot.lane.b32.xlu0 %v521, 5
        %v640 = vpop.permute.xlu0 %639
        %641 = vrot.lane.b32.xlu0 %v528, 5
        %v642 = vpop.permute.xlu0 %641
        %643 = vrot.lane.b32.xlu0 %v522, 5
        %v644 = vpop.permute.xlu0 %643
        %645 = vrot.lane.b32.xlu0 %v529, 5
        %v646 = vpop.permute.xlu0 %645
        %647 = vrot.lane.b32.xlu0 %v523, 5
        %v648 = vpop.permute.xlu0 %647
        %649 = vrot.lane.b32.xlu0 %v530, 5
        %v650 = vpop.permute.xlu0 %649
        %651 = vrot.lane.b32.xlu0 %v524, 5
        %v652 = vpop.permute.xlu0 %651
        %653 = vrot.lane.b32.xlu0 %v531, 5
        %v654 = vpop.permute.xlu0 %653
        %655 = vrot.lane.b32.xlu0 %v525, 5
        %v656 = vpop.permute.xlu0 %655
        %657 = vrot.lane.b32.xlu0 %v532, 5
        %v658 = vpop.permute.xlu0 %657
        %659 = vrot.lane.b32.xlu0 %v526, 5
        %v660 = vpop.permute.xlu0 %659
        %661 = vrot.lane.b32.xlu0 %v533, 5
        %v662 = vpop.permute.xlu0 %661
        %vm663 = vcmp.lt.s32.totalorder %v591, 5
        %v664 = vsel %vm663, %v656, %v660
        %v665 = vsel %vm663, %v658, %v662
        %v666 = vsel %vm663, %v652, %v656
        %v667 = vsel %vm663, %v654, %v658
        %v668 = vsel %vm663, %v648, %v652
        %v669 = vsel %vm663, %v650, %v654
        %v670 = vsel %vm663, %v644, %v648
        %v671 = vsel %vm663, %v646, %v650
        %v672 = vsel %vm663, %v640, %v644
        %v673 = vsel %vm663, %v642, %v646
        %v674 = vsel %vm663, %v636, %v640
        %v675 = vsel %vm663, %v638, %v642
        %v676 = vsel %vm663, %v660, %v636
        %v677 = vsel %vm663, %v662, %v638
        %vm678 = vcmp.ge.s32.totalorder %v534, 5
        %vm679 = vcmp.ge.s32.totalorder %v535, 5
        %vm680 = vcmp.ge.s32.totalorder %v536, 5
        %vm681 = vcmp.ge.s32.totalorder %v537, 5
        %vm682 = vcmp.ge.s32.totalorder %v538, 5
        %vm683 = vcmp.ge.s32.totalorder %v539, 5
        %vm684 = vcmp.ge.s32.totalorder %v540, 5
        %vm685 = vcmp.ge.s32.totalorder %v541, 5
        %vm686 = vcmp.ge.s32.totalorder %v542, 5
        %vm687 = vcmp.ge.s32.totalorder %v543, 5
        %vm688 = vcmp.ge.s32.totalorder %v544, 5
        %vm689 = vcmp.ge.s32.totalorder %v545, 5
        %vm690 = vcmp.ge.s32.totalorder %v546, 5
        %vm691 = vcmp.ge.s32.totalorder %v547, 5
        %v692 = vsel %vm678, %v676, 0.0
        %v693 = vsel %vm679, %v674, 0.0
        %v694 = vsel %vm680, %v672, 0.0
        %v695 = vsel %vm681, %v670, 0.0
        %v696 = vsel %vm682, %v668, 0.0
        %v697 = vsel %vm683, %v666, 0.0
        %v698 = vsel %vm684, %v664, 0.0
        %v699 = vsel %vm685, %v677, 0.0
        %v700 = vsel %vm686, %v675, 0.0
        %v701 = vsel %vm687, %v673, 0.0
        %v702 = vsel %vm688, %v671, 0.0
        %v703 = vsel %vm689, %v669, 0.0
        %v704 = vsel %vm690, %v667, 0.0
        %v705 = vsel %vm691, %v665, 0.0
        %706 = vrot.lane.b32.xlu0 %v520, 105
        %v707 = vpop.permute.xlu0 %706
        %708 = vrot.lane.b32.xlu0 %v527, 105
        %v709 = vpop.permute.xlu0 %708
        %710 = vrot.lane.b32.xlu0 %v521, 105
        %v711 = vpop.permute.xlu0 %710
        %712 = vrot.lane.b32.xlu0 %v528, 105
        %v713 = vpop.permute.xlu0 %712
        %714 = vrot.lane.b32.xlu0 %v522, 105
        %v715 = vpop.permute.xlu0 %714
        %716 = vrot.lane.b32.xlu0 %v529, 105
        %v717 = vpop.permute.xlu0 %716
        %718 = vrot.lane.b32.xlu0 %v523, 105
        %v719 = vpop.permute.xlu0 %718
        %720 = vrot.lane.b32.xlu0 %v530, 105
        %v721 = vpop.permute.xlu0 %720
        %722 = vrot.lane.b32.xlu0 %v524, 105
        %v723 = vpop.permute.xlu0 %722
        %724 = vrot.lane.b32.xlu0 %v531, 105
        %v725 = vpop.permute.xlu0 %724
        %726 = vrot.lane.b32.xlu0 %v525, 105
        %v727 = vpop.permute.xlu0 %726
        %728 = vrot.lane.b32.xlu0 %v532, 105
        %v729 = vpop.permute.xlu0 %728
        %730 = vrot.lane.b32.xlu0 %v526, 105
        %v731 = vpop.permute.xlu0 %730
        %732 = vrot.lane.b32.xlu0 %v533, 105
        %v733 = vpop.permute.xlu0 %732
        %vm734 = vcmp.lt.s32.totalorder %v591, 105
        %v735 = vsel %vm734, %v727, %v731
        %v736 = vsel %vm734, %v729, %v733
        %v737 = vsel %vm734, %v723, %v727
        %v738 = vsel %vm734, %v725, %v729
        %v739 = vsel %vm734, %v719, %v723
        %v740 = vsel %vm734, %v721, %v725
        %v741 = vsel %vm734, %v715, %v719
        %v742 = vsel %vm734, %v717, %v721
        %v743 = vsel %vm734, %v711, %v715
        %v744 = vsel %vm734, %v713, %v717
        %v745 = vsel %vm734, %v707, %v711
        %v746 = vsel %vm734, %v709, %v713
        %v747 = vsel %vm734, %v731, %v707
        %v748 = vsel %vm734, %v733, %v709
        %v749 = vsel %vm548, %v745, %v692
        %v750 = vsel %vm549, %v743, %v693
        %v751 = vsel %vm550, %v741, %v694
        %v752 = vsel %vm551, %v739, %v695
        %v753 = vsel %vm552, %v737, %v696
        %v754 = vsel %vm553, %v735, %v697
        %v755 = vsel %vm554, %v747, %v698
        %v756 = vsel %vm555, %v746, %v699
        %v757 = vsel %vm556, %v744, %v700
        %v758 = vsel %vm557, %v742, %v701
        %v759 = vsel %vm558, %v740, %v702
        %v760 = vsel %vm559, %v738, %v703
        %v761 = vsel %vm560, %v736, %v704
        %v762 = vsel %vm561, %v748, %v705
        %v763 = vadd.f32 %v621, %v749
        %v764 = vadd.f32 %v622, %v750
        %v765 = vadd.f32 %v623, %v751
        %v766 = vadd.f32 %v624, %v752
        %v767 = vadd.f32 %v625, %v753
        %v768 = vadd.f32 %v626, %v754
        %v769 = vadd.f32 %v627, %v755
        %v770 = vadd.f32 %v628, %v756
        %v771 = vadd.f32 %v629, %v757
        %v772 = vadd.f32 %v630, %v758
        %v773 = vadd.f32 %v631, %v759
        %v774 = vadd.f32 %v632, %v760
        %v775 = vadd.f32 %v633, %v761
        %v776 = vadd.f32 %v634, %v762
        %777 = vst [vmem:[#allocation3] sm:$0xff] %v763
        %778 = vst [vmem:[#allocation3 + $0x8] sm:$0xff] %v764
        %779 = vst [vmem:[#allocation3 + $0x10] sm:$0xff] %v765
        %780 = vst [vmem:[#allocation3 + $0x18] sm:$0xff] %v766
        %781 = vst [vmem:[#allocation3 + $0x20] sm:$0xff] %v767
        %782 = vst [vmem:[#allocation3 + $0x28] sm:$0xff] %v768
        %783 = vst [vmem:[#allocation3 + $0x30] sm:$0xff] %v769
        %784 = vst [vmem:[#allocation3 + $0x38] sm:$0xff] %v770
        %785 = vst [vmem:[#allocation3 + $0x40] sm:$0xff] %v771
        %786 = vst [vmem:[#allocation3 + $0x48] sm:$0xff] %v772
        %787 = vst [vmem:[#allocation3 + $0x50] sm:$0xff] %v773
        %788 = vst [vmem:[#allocation3 + $0x58] sm:$0xff] %v774
        %789 = vst [vmem:[#allocation3 + $0x60] sm:$0xff] %v775
        %790 = vst [vmem:[#allocation3 + $0x68] sm:$0xff] %v776
        %791 = vrot.lane.b32.xlu0 %v506, 3
        %v792 = vpop.permute.xlu0 %791
        %793 = vrot.lane.b32.xlu0 %v513, 3
        %v794 = vpop.permute.xlu0 %793
        %795 = vrot.lane.b32.xlu0 %v507, 3
        %v796 = vpop.permute.xlu0 %795
        %797 = vrot.lane.b32.xlu0 %v514, 3
        %v798 = vpop.permute.xlu0 %797
        %799 = vrot.lane.b32.xlu0 %v508, 3
        %v800 = vpop.permute.xlu0 %799
        %801 = vrot.lane.b32.xlu0 %v515, 3
        %v802 = vpop.permute.xlu0 %801
        %803 = vrot.lane.b32.xlu0 %v509, 3
        %v804 = vpop.permute.xlu0 %803
        %805 = vrot.lane.b32.xlu0 %v516, 3
        %v806 = vpop.permute.xlu0 %805
        %807 = vrot.lane.b32.xlu0 %v510, 3
        %v808 = vpop.permute.xlu0 %807
        %809 = vrot.lane.b32.xlu0 %v517, 3
        %v810 = vpop.permute.xlu0 %809
        %811 = vrot.lane.b32.xlu0 %v511, 3
        %v812 = vpop.permute.xlu0 %811
        %813 = vrot.lane.b32.xlu0 %v518, 3
        %v814 = vpop.permute.xlu0 %813
        %815 = vrot.lane.b32.xlu0 %v512, 3
        %v816 = vpop.permute.xlu0 %815
        %817 = vrot.lane.b32.xlu0 %v519, 3
        %v818 = vpop.permute.xlu0 %817
        %vm819 = vcmp.lt.s32.totalorder %v591, 3
        %v820 = vsel %vm819, %v812, %v816
        %v821 = vsel %vm819, %v814, %v818
        %v822 = vsel %vm819, %v808, %v812
        %v823 = vsel %vm819, %v810, %v814
        %v824 = vsel %vm819, %v804, %v808
        %v825 = vsel %vm819, %v806, %v810
        %v826 = vsel %vm819, %v800, %v804
        %v827 = vsel %vm819, %v802, %v806
        %v828 = vsel %vm819, %v796, %v800
        %v829 = vsel %vm819, %v798, %v802
        %v830 = vsel %vm819, %v792, %v796
        %v831 = vsel %vm819, %v794, %v798
        %v832 = vsel %vm819, %v816, %v792
        %v833 = vsel %vm819, %v818, %v794
        %vm834 = vcmp.ge.s32.totalorder %v534, 3
        %vm835 = vcmp.ge.s32.totalorder %v535, 3
        %vm836 = vcmp.ge.s32.totalorder %v536, 3
        %vm837 = vcmp.ge.s32.totalorder %v537, 3
        %vm838 = vcmp.ge.s32.totalorder %v538, 3
        %vm839 = vcmp.ge.s32.totalorder %v539, 3
        %vm840 = vcmp.ge.s32.totalorder %v540, 3
        %vm841 = vcmp.ge.s32.totalorder %v541, 3
        %vm842 = vcmp.ge.s32.totalorder %v542, 3
        %vm843 = vcmp.ge.s32.totalorder %v543, 3
        %vm844 = vcmp.ge.s32.totalorder %v544, 3
        %vm845 = vcmp.ge.s32.totalorder %v545, 3
        %vm846 = vcmp.ge.s32.totalorder %v546, 3
        %vm847 = vcmp.ge.s32.totalorder %v547, 3
        %v848 = vsel %vm834, %v832, 0.0
        %v849 = vsel %vm835, %v830, 0.0
        %v850 = vsel %vm836, %v828, 0.0
        %v851 = vsel %vm837, %v826, 0.0
        %v852 = vsel %vm838, %v824, 0.0
        %v853 = vsel %vm839, %v822, 0.0
        %v854 = vsel %vm840, %v820, 0.0
        %v855 = vsel %vm841, %v833, 0.0
        %v856 = vsel %vm842, %v831, 0.0
        %v857 = vsel %vm843, %v829, 0.0
        %v858 = vsel %vm844, %v827, 0.0
        %v859 = vsel %vm845, %v825, 0.0
        %v860 = vsel %vm846, %v823, 0.0
        %v861 = vsel %vm847, %v821, 0.0
        %862 = vrot.lane.b32.xlu0 %v520, 4
        %v863 = vpop.permute.xlu0 %862
        %864 = vrot.lane.b32.xlu0 %v527, 4
        %v865 = vpop.permute.xlu0 %864
        %866 = vrot.lane.b32.xlu0 %v521, 4
        %v867 = vpop.permute.xlu0 %866
        %868 = vrot.lane.b32.xlu0 %v528, 4
        %v869 = vpop.permute.xlu0 %868
        %870 = vrot.lane.b32.xlu0 %v522, 4
        %v871 = vpop.permute.xlu0 %870
        %872 = vrot.lane.b32.xlu0 %v529, 4
        %v873 = vpop.permute.xlu0 %872
        %874 = vrot.lane.b32.xlu0 %v523, 4
        %v875 = vpop.permute.xlu0 %874
        %876 = vrot.lane.b32.xlu0 %v530, 4
        %v877 = vpop.permute.xlu0 %876
        %878 = vrot.lane.b32.xlu0 %v524, 4
        %v879 = vpop.permute.xlu0 %878
        %880 = vrot.lane.b32.xlu0 %v531, 4
        %v881 = vpop.permute.xlu0 %880
        %882 = vrot.lane.b32.xlu0 %v525, 4
        %v883 = vpop.permute.xlu0 %882
        %884 = vrot.lane.b32.xlu0 %v532, 4
        %v885 = vpop.permute.xlu0 %884
        %886 = vrot.lane.b32.xlu0 %v526, 4
        %v887 = vpop.permute.xlu0 %886
        %888 = vrot.lane.b32.xlu0 %v533, 4
        %v889 = vpop.permute.xlu0 %888
        %v890 = vsel %vm592, %v883, %v887
        %v891 = vsel %vm592, %v885, %v889
        %v892 = vsel %vm592, %v879, %v883
        %v893 = vsel %vm592, %v881, %v885
        %v894 = vsel %vm592, %v875, %v879
        %v895 = vsel %vm592, %v877, %v881
        %v896 = vsel %vm592, %v871, %v875
        %v897 = vsel %vm592, %v873, %v877
        %v898 = vsel %vm592, %v867, %v871
        %v899 = vsel %vm592, %v869, %v873
        %v900 = vsel %vm592, %v863, %v867
        %v901 = vsel %vm592, %v865, %v869
        %v902 = vsel %vm592, %v887, %v863
        %v903 = vsel %vm592, %v889, %v865
        %v904 = vsel %vm607, %v902, 0.0
        %v905 = vsel %vm608, %v900, 0.0
        %v906 = vsel %vm609, %v898, 0.0
        %v907 = vsel %vm610, %v896, 0.0
        %v908 = vsel %vm611, %v894, 0.0
        %v909 = vsel %vm612, %v892, 0.0
        %v910 = vsel %vm613, %v890, 0.0
        %v911 = vsel %vm614, %v903, 0.0
        %v912 = vsel %vm615, %v901, 0.0
        %v913 = vsel %vm616, %v899, 0.0
        %v914 = vsel %vm617, %v897, 0.0
        %v915 = vsel %vm618, %v895, 0.0
        %v916 = vsel %vm619, %v893, 0.0
        %v917 = vsel %vm620, %v891, 0.0
        %918 = vrot.lane.b32.xlu0 %v520, 104
        %v919 = vpop.permute.xlu0 %918
        %920 = vrot.lane.b32.xlu0 %v527, 104
        %v921 = vpop.permute.xlu0 %920
        %922 = vrot.lane.b32.xlu0 %v521, 104
        %v923 = vpop.permute.xlu0 %922
        %924 = vrot.lane.b32.xlu0 %v528, 104
        %v925 = vpop.permute.xlu0 %924
        %926 = vrot.lane.b32.xlu0 %v522, 104
        %v927 = vpop.permute.xlu0 %926
        %928 = vrot.lane.b32.xlu0 %v529, 104
        %v929 = vpop.permute.xlu0 %928
        %930 = vrot.lane.b32.xlu0 %v523, 104
        %v931 = vpop.permute.xlu0 %930
        %932 = vrot.lane.b32.xlu0 %v530, 104
        %v933 = vpop.permute.xlu0 %932
        %934 = vrot.lane.b32.xlu0 %v524, 104
        %v935 = vpop.permute.xlu0 %934
        %936 = vrot.lane.b32.xlu0 %v531, 104
        %v937 = vpop.permute.xlu0 %936
        %938 = vrot.lane.b32.xlu0 %v525, 104
        %v939 = vpop.permute.xlu0 %938
        %940 = vrot.lane.b32.xlu0 %v532, 104
        %v941 = vpop.permute.xlu0 %940
        %942 = vrot.lane.b32.xlu0 %v526, 104
        %v943 = vpop.permute.xlu0 %942
        %944 = vrot.lane.b32.xlu0 %v533, 104
        %v945 = vpop.permute.xlu0 %944
        %vm946 = vcmp.lt.s32.totalorder %v591, 104
        %v947 = vsel %vm946, %v939, %v943
        %v948 = vsel %vm946, %v941, %v945
        %v949 = vsel %vm946, %v935, %v939
        %v950 = vsel %vm946, %v937, %v941
        %v951 = vsel %vm946, %v931, %v935
        %v952 = vsel %vm946, %v933, %v937
        %v953 = vsel %vm946, %v927, %v931
        %v954 = vsel %vm946, %v929, %v933
        %v955 = vsel %vm946, %v923, %v927
        %v956 = vsel %vm946, %v925, %v929
        %v957 = vsel %vm946, %v919, %v923
        %v958 = vsel %vm946, %v921, %v925
        %v959 = vsel %vm946, %v943, %v919
        %v960 = vsel %vm946, %v945, %v921
        %v961 = vsel %vm548, %v957, %v904
        %v962 = vsel %vm549, %v955, %v905
        %v963 = vsel %vm550, %v953, %v906
        %v964 = vsel %vm551, %v951, %v907
        %v965 = vsel %vm552, %v949, %v908
        %v966 = vsel %vm553, %v947, %v909
        %v967 = vsel %vm554, %v959, %v910
        %v968 = vsel %vm555, %v958, %v911
        %v969 = vsel %vm556, %v956, %v912
        %v970 = vsel %vm557, %v954, %v913
        %v971 = vsel %vm558, %v952, %v914
        %v972 = vsel %vm559, %v950, %v915
        %v973 = vsel %vm560, %v948, %v916
        %v974 = vsel %vm561, %v960, %v917
        %v975 = vadd.f32 %v848, %v961
        %v976 = vadd.f32 %v849, %v962
        %v977 = vadd.f32 %v850, %v963
        %v978 = vadd.f32 %v851, %v964
        %v979 = vadd.f32 %v852, %v965
        %v980 = vadd.f32 %v853, %v966
        %v981 = vadd.f32 %v854, %v967
        %v982 = vadd.f32 %v855, %v968
        %v983 = vadd.f32 %v856, %v969
        %v984 = vadd.f32 %v857, %v970
        %v985 = vadd.f32 %v858, %v971
        %v986 = vadd.f32 %v859, %v972
        %v987 = vadd.f32 %v860, %v973
        %v988 = vadd.f32 %v861, %v974
        %989 = vst [vmem:[#allocation3 + $0x70] sm:$0xff] %v975
        %990 = vst [vmem:[#allocation3 + $0x78] sm:$0xff] %v976
        %991 = vst [vmem:[#allocation3 + $0x80] sm:$0xff] %v977
        %992 = vst [vmem:[#allocation3 + $0x88] sm:$0xff] %v978
        %993 = vst [vmem:[#allocation3 + $0x90] sm:$0xff] %v979
        %994 = vst [vmem:[#allocation3 + $0x98] sm:$0xff] %v980
        %995 = vst [vmem:[#allocation3 + $0xa0] sm:$0xff] %v981
        %996 = vst [vmem:[#allocation3 + $0xa8] sm:$0xff] %v982
        %997 = vst [vmem:[#allocation3 + $0xb0] sm:$0xff] %v983
        %998 = vst [vmem:[#allocation3 + $0xb8] sm:$0xff] %v984
        %999 = vst [vmem:[#allocation3 + $0xc0] sm:$0xff] %v985
        %1000 = vst [vmem:[#allocation3 + $0xc8] sm:$0xff] %v986
        %1001 = vst [vmem:[#allocation3 + $0xd0] sm:$0xff] %v987
        %1002 = vst [vmem:[#allocation3 + $0xd8] sm:$0xff] %v988
        %1003 = vrot.lane.b32.xlu0 %v506, 2
        %v1004 = vpop.permute.xlu0 %1003
        %1005 = vrot.lane.b32.xlu0 %v513, 2
        %v1006 = vpop.permute.xlu0 %1005
        %1007 = vrot.lane.b32.xlu0 %v507, 2
        %v1008 = vpop.permute.xlu0 %1007
        %1009 = vrot.lane.b32.xlu0 %v514, 2
        %v1010 = vpop.permute.xlu0 %1009
        %1011 = vrot.lane.b32.xlu0 %v508, 2
        %v1012 = vpop.permute.xlu0 %1011
        %1013 = vrot.lane.b32.xlu0 %v515, 2
        %v1014 = vpop.permute.xlu0 %1013
        %1015 = vrot.lane.b32.xlu0 %v509, 2
        %v1016 = vpop.permute.xlu0 %1015
        %1017 = vrot.lane.b32.xlu0 %v516, 2
        %v1018 = vpop.permute.xlu0 %1017
        %1019 = vrot.lane.b32.xlu0 %v510, 2
        %v1020 = vpop.permute.xlu0 %1019
        %1021 = vrot.lane.b32.xlu0 %v517, 2
        %v1022 = vpop.permute.xlu0 %1021
        %1023 = vrot.lane.b32.xlu0 %v511, 2
        %v1024 = vpop.permute.xlu0 %1023
        %1025 = vrot.lane.b32.xlu0 %v518, 2
        %v1026 = vpop.permute.xlu0 %1025
        %1027 = vrot.lane.b32.xlu0 %v512, 2
        %v1028 = vpop.permute.xlu0 %1027
        %1029 = vrot.lane.b32.xlu0 %v519, 2
        %v1030 = vpop.permute.xlu0 %1029
        %vm1031 = vcmp.lt.s32.totalorder %v591, 2
        %v1032 = vsel %vm1031, %v1024, %v1028
        %v1033 = vsel %vm1031, %v1026, %v1030
        %v1034 = vsel %vm1031, %v1020, %v1024
        %v1035 = vsel %vm1031, %v1022, %v1026
        %v1036 = vsel %vm1031, %v1016, %v1020
        %v1037 = vsel %vm1031, %v1018, %v1022
        %v1038 = vsel %vm1031, %v1012, %v1016
        %v1039 = vsel %vm1031, %v1014, %v1018
        %v1040 = vsel %vm1031, %v1008, %v1012
        %v1041 = vsel %vm1031, %v1010, %v1014
        %v1042 = vsel %vm1031, %v1004, %v1008
        %v1043 = vsel %vm1031, %v1006, %v1010
        %v1044 = vsel %vm1031, %v1028, %v1004
        %v1045 = vsel %vm1031, %v1030, %v1006
        %vm1046 = vcmp.ge.s32.totalorder %v534, 2
        %vm1047 = vcmp.ge.s32.totalorder %v535, 2
        %vm1048 = vcmp.ge.s32.totalorder %v536, 2
        %vm1049 = vcmp.ge.s32.totalorder %v537, 2
        %vm1050 = vcmp.ge.s32.totalorder %v538, 2
        %vm1051 = vcmp.ge.s32.totalorder %v539, 2
        %vm1052 = vcmp.ge.s32.totalorder %v540, 2
        %vm1053 = vcmp.ge.s32.totalorder %v541, 2
        %vm1054 = vcmp.ge.s32.totalorder %v542, 2
        %vm1055 = vcmp.ge.s32.totalorder %v543, 2
        %vm1056 = vcmp.ge.s32.totalorder %v544, 2
        %vm1057 = vcmp.ge.s32.totalorder %v545, 2
        %vm1058 = vcmp.ge.s32.totalorder %v546, 2
        %vm1059 = vcmp.ge.s32.totalorder %v547, 2
        %v1060 = vsel %vm1046, %v1044, 0.0
        %v1061 = vsel %vm1047, %v1042, 0.0
        %v1062 = vsel %vm1048, %v1040, 0.0
        %v1063 = vsel %vm1049, %v1038, 0.0
        %v1064 = vsel %vm1050, %v1036, 0.0
        %v1065 = vsel %vm1051, %v1034, 0.0
        %v1066 = vsel %vm1052, %v1032, 0.0
        %v1067 = vsel %vm1053, %v1045, 0.0
        %v1068 = vsel %vm1054, %v1043, 0.0
        %v1069 = vsel %vm1055, %v1041, 0.0
        %v1070 = vsel %vm1056, %v1039, 0.0
        %v1071 = vsel %vm1057, %v1037, 0.0
        %v1072 = vsel %vm1058, %v1035, 0.0
        %v1073 = vsel %vm1059, %v1033, 0.0
        %1074 = vrot.lane.b32.xlu0 %v520, 3
        %v1075 = vpop.permute.xlu0 %1074
        %1076 = vrot.lane.b32.xlu0 %v527, 3
        %v1077 = vpop.permute.xlu0 %1076
        %1078 = vrot.lane.b32.xlu0 %v521, 3
        %v1079 = vpop.permute.xlu0 %1078
        %1080 = vrot.lane.b32.xlu0 %v528, 3
        %v1081 = vpop.permute.xlu0 %1080
        %1082 = vrot.lane.b32.xlu0 %v522, 3
        %v1083 = vpop.permute.xlu0 %1082
        %1084 = vrot.lane.b32.xlu0 %v529, 3
        %v1085 = vpop.permute.xlu0 %1084
        %1086 = vrot.lane.b32.xlu0 %v523, 3
        %v1087 = vpop.permute.xlu0 %1086
        %1088 = vrot.lane.b32.xlu0 %v530, 3
        %v1089 = vpop.permute.xlu0 %1088
        %1090 = vrot.lane.b32.xlu0 %v524, 3
        %v1091 = vpop.permute.xlu0 %1090
        %1092 = vrot.lane.b32.xlu0 %v531, 3
        %v1093 = vpop.permute.xlu0 %1092
        %1094 = vrot.lane.b32.xlu0 %v525, 3
        %v1095 = vpop.permute.xlu0 %1094
        %1096 = vrot.lane.b32.xlu0 %v532, 3
        %v1097 = vpop.permute.xlu0 %1096
        %1098 = vrot.lane.b32.xlu0 %v526, 3
        %v1099 = vpop.permute.xlu0 %1098
        %1100 = vrot.lane.b32.xlu0 %v533, 3
        %v1101 = vpop.permute.xlu0 %1100
        %v1102 = vsel %vm819, %v1095, %v1099
        %v1103 = vsel %vm819, %v1097, %v1101
        %v1104 = vsel %vm819, %v1091, %v1095
        %v1105 = vsel %vm819, %v1093, %v1097
        %v1106 = vsel %vm819, %v1087, %v1091
        %v1107 = vsel %vm819, %v1089, %v1093
        %v1108 = vsel %vm819, %v1083, %v1087
        %v1109 = vsel %vm819, %v1085, %v1089
        %v1110 = vsel %vm819, %v1079, %v1083
        %v1111 = vsel %vm819, %v1081, %v1085
        %v1112 = vsel %vm819, %v1075, %v1079
        %v1113 = vsel %vm819, %v1077, %v1081
        %v1114 = vsel %vm819, %v1099, %v1075
        %v1115 = vsel %vm819, %v1101, %v1077
        %v1116 = vsel %vm834, %v1114, 0.0
        %v1117 = vsel %vm835, %v1112, 0.0
        %v1118 = vsel %vm836, %v1110, 0.0
        %v1119 = vsel %vm837, %v1108, 0.0
        %v1120 = vsel %vm838, %v1106, 0.0
        %v1121 = vsel %vm839, %v1104, 0.0
        %v1122 = vsel %vm840, %v1102, 0.0
        %v1123 = vsel %vm841, %v1115, 0.0
        %v1124 = vsel %vm842, %v1113, 0.0
        %v1125 = vsel %vm843, %v1111, 0.0
        %v1126 = vsel %vm844, %v1109, 0.0
        %v1127 = vsel %vm845, %v1107, 0.0
        %v1128 = vsel %vm846, %v1105, 0.0
        %v1129 = vsel %vm847, %v1103, 0.0
        %1130 = vrot.lane.b32.xlu0 %v520, 103
        %v1131 = vpop.permute.xlu0 %1130
        %1132 = vrot.lane.b32.xlu0 %v527, 103
        %v1133 = vpop.permute.xlu0 %1132
        %1134 = vrot.lane.b32.xlu0 %v521, 103
        %v1135 = vpop.permute.xlu0 %1134
        %1136 = vrot.lane.b32.xlu0 %v528, 103
        %v1137 = vpop.permute.xlu0 %1136
        %1138 = vrot.lane.b32.xlu0 %v522, 103
        %v1139 = vpop.permute.xlu0 %1138
        %1140 = vrot.lane.b32.xlu0 %v529, 103
        %v1141 = vpop.permute.xlu0 %1140
        %1142 = vrot.lane.b32.xlu0 %v523, 103
        %v1143 = vpop.permute.xlu0 %1142
        %1144 = vrot.lane.b32.xlu0 %v530, 103
        %v1145 = vpop.permute.xlu0 %1144
        %1146 = vrot.lane.b32.xlu0 %v524, 103
        %v1147 = vpop.permute.xlu0 %1146
        %1148 = vrot.lane.b32.xlu0 %v531, 103
        %v1149 = vpop.permute.xlu0 %1148
        %1150 = vrot.lane.b32.xlu0 %v525, 103
        %v1151 = vpop.permute.xlu0 %1150
        %1152 = vrot.lane.b32.xlu0 %v532, 103
        %v1153 = vpop.permute.xlu0 %1152
        %1154 = vrot.lane.b32.xlu0 %v526, 103
        %v1155 = vpop.permute.xlu0 %1154
        %1156 = vrot.lane.b32.xlu0 %v533, 103
        %v1157 = vpop.permute.xlu0 %1156
        %vm1158 = vcmp.lt.s32.totalorder %v591, 103
        %v1159 = vsel %vm1158, %v1151, %v1155
        %v1160 = vsel %vm1158, %v1153, %v1157
        %v1161 = vsel %vm1158, %v1147, %v1151
        %v1162 = vsel %vm1158, %v1149, %v1153
        %v1163 = vsel %vm1158, %v1143, %v1147
        %v1164 = vsel %vm1158, %v1145, %v1149
        %v1165 = vsel %vm1158, %v1139, %v1143
        %v1166 = vsel %vm1158, %v1141, %v1145
        %v1167 = vsel %vm1158, %v1135, %v1139
        %v1168 = vsel %vm1158, %v1137, %v1141
        %v1169 = vsel %vm1158, %v1131, %v1135
        %v1170 = vsel %vm1158, %v1133, %v1137
        %v1171 = vsel %vm1158, %v1155, %v1131
        %v1172 = vsel %vm1158, %v1157, %v1133
        %v1173 = vsel %vm548, %v1169, %v1116
        %v1174 = vsel %vm549, %v1167, %v1117
        %v1175 = vsel %vm550, %v1165, %v1118
        %v1176 = vsel %vm551, %v1163, %v1119
        %v1177 = vsel %vm552, %v1161, %v1120
        %v1178 = vsel %vm553, %v1159, %v1121
        %v1179 = vsel %vm554, %v1171, %v1122
        %v1180 = vsel %vm555, %v1170, %v1123
        %v1181 = vsel %vm556, %v1168, %v1124
        %v1182 = vsel %vm557, %v1166, %v1125
        %v1183 = vsel %vm558, %v1164, %v1126
        %v1184 = vsel %vm559, %v1162, %v1127
        %v1185 = vsel %vm560, %v1160, %v1128
        %v1186 = vsel %vm561, %v1172, %v1129
        %v1187 = vadd.f32 %v1060, %v1173
        %v1188 = vadd.f32 %v1061, %v1174
        %v1189 = vadd.f32 %v1062, %v1175
        %v1190 = vadd.f32 %v1063, %v1176
        %v1191 = vadd.f32 %v1064, %v1177
        %v1192 = vadd.f32 %v1065, %v1178
        %v1193 = vadd.f32 %v1066, %v1179
        %v1194 = vadd.f32 %v1067, %v1180
        %v1195 = vadd.f32 %v1068, %v1181
        %v1196 = vadd.f32 %v1069, %v1182
        %v1197 = vadd.f32 %v1070, %v1183
        %v1198 = vadd.f32 %v1071, %v1184
        %v1199 = vadd.f32 %v1072, %v1185
        %v1200 = vadd.f32 %v1073, %v1186
        %1201 = vst [vmem:[#allocation3 + $0xe0] sm:$0xff] %v1187
        %1202 = vst [vmem:[#allocation3 + $0xe8] sm:$0xff] %v1188
        %1203 = vst [vmem:[#allocation3 + $0xf0] sm:$0xff] %v1189
        %1204 = vst [vmem:[#allocation3 + $0xf8] sm:$0xff] %v1190
        %1205 = vst [vmem:[#allocation3 + $0x100] sm:$0xff] %v1191
        %1206 = vst [vmem:[#allocation3 + $0x108] sm:$0xff] %v1192
        %1207 = vst [vmem:[#allocation3 + $0x110] sm:$0xff] %v1193
        %1208 = vst [vmem:[#allocation3 + $0x118] sm:$0xff] %v1194
        %1209 = vst [vmem:[#allocation3 + $0x120] sm:$0xff] %v1195
        %1210 = vst [vmem:[#allocation3 + $0x128] sm:$0xff] %v1196
        %1211 = vst [vmem:[#allocation3 + $0x130] sm:$0xff] %v1197
        %1212 = vst [vmem:[#allocation3 + $0x138] sm:$0xff] %v1198
        %1213 = vst [vmem:[#allocation3 + $0x140] sm:$0xff] %v1199
        %1214 = vst [vmem:[#allocation3 + $0x148] sm:$0xff] %v1200
        %1215 = vrot.lane.b32.xlu0 %v506, 1
        %v1216 = vpop.permute.xlu0 %1215
        %1217 = vrot.lane.b32.xlu0 %v513, 1
        %v1218 = vpop.permute.xlu0 %1217
        %1219 = vrot.lane.b32.xlu0 %v507, 1
        %v1220 = vpop.permute.xlu0 %1219
        %1221 = vrot.lane.b32.xlu0 %v514, 1
        %v1222 = vpop.permute.xlu0 %1221
        %1223 = vrot.lane.b32.xlu0 %v508, 1
        %v1224 = vpop.permute.xlu0 %1223
        %1225 = vrot.lane.b32.xlu0 %v515, 1
        %v1226 = vpop.permute.xlu0 %1225
        %1227 = vrot.lane.b32.xlu0 %v509, 1
        %v1228 = vpop.permute.xlu0 %1227
        %1229 = vrot.lane.b32.xlu0 %v516, 1
        %v1230 = vpop.permute.xlu0 %1229
        %1231 = vrot.lane.b32.xlu0 %v510, 1
        %v1232 = vpop.permute.xlu0 %1231
        %1233 = vrot.lane.b32.xlu0 %v517, 1
        %v1234 = vpop.permute.xlu0 %1233
        %1235 = vrot.lane.b32.xlu0 %v511, 1
        %v1236 = vpop.permute.xlu0 %1235
        %1237 = vrot.lane.b32.xlu0 %v518, 1
        %v1238 = vpop.permute.xlu0 %1237
        %1239 = vrot.lane.b32.xlu0 %v512, 1
        %v1240 = vpop.permute.xlu0 %1239
        %1241 = vrot.lane.b32.xlu0 %v519, 1
        %v1242 = vpop.permute.xlu0 %1241
        %vm1243 = vcmp.lt.s32.totalorder %v591, 1
        %v1244 = vsel %vm1243, %v1236, %v1240
        %v1245 = vsel %vm1243, %v1238, %v1242
        %v1246 = vsel %vm1243, %v1232, %v1236
        %v1247 = vsel %vm1243, %v1234, %v1238
        %v1248 = vsel %vm1243, %v1228, %v1232
        %v1249 = vsel %vm1243, %v1230, %v1234
        %v1250 = vsel %vm1243, %v1224, %v1228
        %v1251 = vsel %vm1243, %v1226, %v1230
        %v1252 = vsel %vm1243, %v1220, %v1224
        %v1253 = vsel %vm1243, %v1222, %v1226
        %v1254 = vsel %vm1243, %v1216, %v1220
        %v1255 = vsel %vm1243, %v1218, %v1222
        %v1256 = vsel %vm1243, %v1240, %v1216
        %v1257 = vsel %vm1243, %v1242, %v1218
        %vm1258 = vcmp.ge.s32.totalorder %v534, 1
        %vm1259 = vcmp.ge.s32.totalorder %v535, 1
        %vm1260 = vcmp.ge.s32.totalorder %v536, 1
        %vm1261 = vcmp.ge.s32.totalorder %v537, 1
        %vm1262 = vcmp.ge.s32.totalorder %v538, 1
        %vm1263 = vcmp.ge.s32.totalorder %v539, 1
        %vm1264 = vcmp.ge.s32.totalorder %v540, 1
        %vm1265 = vcmp.ge.s32.totalorder %v541, 1
        %vm1266 = vcmp.ge.s32.totalorder %v542, 1
        %vm1267 = vcmp.ge.s32.totalorder %v543, 1
        %vm1268 = vcmp.ge.s32.totalorder %v544, 1
        %vm1269 = vcmp.ge.s32.totalorder %v545, 1
        %vm1270 = vcmp.ge.s32.totalorder %v546, 1
        %vm1271 = vcmp.ge.s32.totalorder %v547, 1
        %v1272 = vsel %vm1258, %v1256, 0.0
        %v1273 = vsel %vm1259, %v1254, 0.0
        %v1274 = vsel %vm1260, %v1252, 0.0
        %v1275 = vsel %vm1261, %v1250, 0.0
        %v1276 = vsel %vm1262, %v1248, 0.0
        %v1277 = vsel %vm1263, %v1246, 0.0
        %v1278 = vsel %vm1264, %v1244, 0.0
        %v1279 = vsel %vm1265, %v1257, 0.0
        %v1280 = vsel %vm1266, %v1255, 0.0
        %v1281 = vsel %vm1267, %v1253, 0.0
        %v1282 = vsel %vm1268, %v1251, 0.0
        %v1283 = vsel %vm1269, %v1249, 0.0
        %v1284 = vsel %vm1270, %v1247, 0.0
        %v1285 = vsel %vm1271, %v1245, 0.0
        %1286 = vrot.lane.b32.xlu0 %v520, 2
        %v1287 = vpop.permute.xlu0 %1286
        %1288 = vrot.lane.b32.xlu0 %v527, 2
        %v1289 = vpop.permute.xlu0 %1288
        %1290 = vrot.lane.b32.xlu0 %v521, 2
        %v1291 = vpop.permute.xlu0 %1290
        %1292 = vrot.lane.b32.xlu0 %v528, 2
        %v1293 = vpop.permute.xlu0 %1292
        %1294 = vrot.lane.b32.xlu0 %v522, 2
        %v1295 = vpop.permute.xlu0 %1294
        %1296 = vrot.lane.b32.xlu0 %v529, 2
        %v1297 = vpop.permute.xlu0 %1296
        %1298 = vrot.lane.b32.xlu0 %v523, 2
        %v1299 = vpop.permute.xlu0 %1298
        %1300 = vrot.lane.b32.xlu0 %v530, 2
        %v1301 = vpop.permute.xlu0 %1300
        %1302 = vrot.lane.b32.xlu0 %v524, 2
        %v1303 = vpop.permute.xlu0 %1302
        %1304 = vrot.lane.b32.xlu0 %v531, 2
        %v1305 = vpop.permute.xlu0 %1304
        %1306 = vrot.lane.b32.xlu0 %v525, 2
        %v1307 = vpop.permute.xlu0 %1306
        %1308 = vrot.lane.b32.xlu0 %v532, 2
        %v1309 = vpop.permute.xlu0 %1308
        %1310 = vrot.lane.b32.xlu0 %v526, 2
        %v1311 = vpop.permute.xlu0 %1310
        %1312 = vrot.lane.b32.xlu0 %v533, 2
        %v1313 = vpop.permute.xlu0 %1312
        %v1314 = vsel %vm1031, %v1307, %v1311
        %v1315 = vsel %vm1031, %v1309, %v1313
        %v1316 = vsel %vm1031, %v1303, %v1307
        %v1317 = vsel %vm1031, %v1305, %v1309
        %v1318 = vsel %vm1031, %v1299, %v1303
        %v1319 = vsel %vm1031, %v1301, %v1305
        %v1320 = vsel %vm1031, %v1295, %v1299
        %v1321 = vsel %vm1031, %v1297, %v1301
        %v1322 = vsel %vm1031, %v1291, %v1295
        %v1323 = vsel %vm1031, %v1293, %v1297
        %v1324 = vsel %vm1031, %v1287, %v1291
        %v1325 = vsel %vm1031, %v1289, %v1293
        %v1326 = vsel %vm1031, %v1311, %v1287
        %v1327 = vsel %vm1031, %v1313, %v1289
        %v1328 = vsel %vm1046, %v1326, 0.0
        %v1329 = vsel %vm1047, %v1324, 0.0
        %v1330 = vsel %vm1048, %v1322, 0.0
        %v1331 = vsel %vm1049, %v1320, 0.0
        %v1332 = vsel %vm1050, %v1318, 0.0
        %v1333 = vsel %vm1051, %v1316, 0.0
        %v1334 = vsel %vm1052, %v1314, 0.0
        %v1335 = vsel %vm1053, %v1327, 0.0
        %v1336 = vsel %vm1054, %v1325, 0.0
        %v1337 = vsel %vm1055, %v1323, 0.0
        %v1338 = vsel %vm1056, %v1321, 0.0
        %v1339 = vsel %vm1057, %v1319, 0.0
        %v1340 = vsel %vm1058, %v1317, 0.0
        %v1341 = vsel %vm1059, %v1315, 0.0
        %1342 = vrot.lane.b32.xlu0 %v520, 102
        %v1343 = vpop.permute.xlu0 %1342
        %1344 = vrot.lane.b32.xlu0 %v527, 102
        %v1345 = vpop.permute.xlu0 %1344
        %1346 = vrot.lane.b32.xlu0 %v521, 102
        %v1347 = vpop.permute.xlu0 %1346
        %1348 = vrot.lane.b32.xlu0 %v528, 102
        %v1349 = vpop.permute.xlu0 %1348
        %1350 = vrot.lane.b32.xlu0 %v522, 102
        %v1351 = vpop.permute.xlu0 %1350
        %1352 = vrot.lane.b32.xlu0 %v529, 102
        %v1353 = vpop.permute.xlu0 %1352
        %1354 = vrot.lane.b32.xlu0 %v523, 102
        %v1355 = vpop.permute.xlu0 %1354
        %1356 = vrot.lane.b32.xlu0 %v530, 102
        %v1357 = vpop.permute.xlu0 %1356
        %1358 = vrot.lane.b32.xlu0 %v524, 102
        %v1359 = vpop.permute.xlu0 %1358
        %1360 = vrot.lane.b32.xlu0 %v531, 102
        %v1361 = vpop.permute.xlu0 %1360
        %1362 = vrot.lane.b32.xlu0 %v525, 102
        %v1363 = vpop.permute.xlu0 %1362
        %1364 = vrot.lane.b32.xlu0 %v532, 102
        %v1365 = vpop.permute.xlu0 %1364
        %1366 = vrot.lane.b32.xlu0 %v526, 102
        %v1367 = vpop.permute.xlu0 %1366
        %1368 = vrot.lane.b32.xlu0 %v533, 102
        %v1369 = vpop.permute.xlu0 %1368
        %vm1370 = vcmp.lt.s32.totalorder %v591, 102
        %v1371 = vsel %vm1370, %v1363, %v1367
        %v1372 = vsel %vm1370, %v1365, %v1369
        %v1373 = vsel %vm1370, %v1359, %v1363
        %v1374 = vsel %vm1370, %v1361, %v1365
        %v1375 = vsel %vm1370, %v1355, %v1359
        %v1376 = vsel %vm1370, %v1357, %v1361
        %v1377 = vsel %vm1370, %v1351, %v1355
        %v1378 = vsel %vm1370, %v1353, %v1357
        %v1379 = vsel %vm1370, %v1347, %v1351
        %v1380 = vsel %vm1370, %v1349, %v1353
        %v1381 = vsel %vm1370, %v1343, %v1347
        %v1382 = vsel %vm1370, %v1345, %v1349
        %v1383 = vsel %vm1370, %v1367, %v1343
        %v1384 = vsel %vm1370, %v1369, %v1345
        %v1385 = vsel %vm548, %v1381, %v1328
        %v1386 = vsel %vm549, %v1379, %v1329
        %v1387 = vsel %vm550, %v1377, %v1330
        %v1388 = vsel %vm551, %v1375, %v1331
        %v1389 = vsel %vm552, %v1373, %v1332
        %v1390 = vsel %vm553, %v1371, %v1333
        %v1391 = vsel %vm554, %v1383, %v1334
        %v1392 = vsel %vm555, %v1382, %v1335
        %v1393 = vsel %vm556, %v1380, %v1336
        %v1394 = vsel %vm557, %v1378, %v1337
        %v1395 = vsel %vm558, %v1376, %v1338
        %v1396 = vsel %vm559, %v1374, %v1339
        %v1397 = vsel %vm560, %v1372, %v1340
        %v1398 = vsel %vm561, %v1384, %v1341
        %v1399 = vadd.f32 %v1272, %v1385
        %v1400 = vadd.f32 %v1273, %v1386
        %v1401 = vadd.f32 %v1274, %v1387
        %v1402 = vadd.f32 %v1275, %v1388
        %v1403 = vadd.f32 %v1276, %v1389
        %v1404 = vadd.f32 %v1277, %v1390
        %v1405 = vadd.f32 %v1278, %v1391
        %v1406 = vadd.f32 %v1279, %v1392
        %v1407 = vadd.f32 %v1280, %v1393
        %v1408 = vadd.f32 %v1281, %v1394
        %v1409 = vadd.f32 %v1282, %v1395
        %v1410 = vadd.f32 %v1283, %v1396
        %v1411 = vadd.f32 %v1284, %v1397
        %v1412 = vadd.f32 %v1285, %v1398
        %1413 = vst [vmem:[#allocation3 + $0x150] sm:$0xff] %v1399
        %1414 = vst [vmem:[#allocation3 + $0x158] sm:$0xff] %v1400
        %1415 = vst [vmem:[#allocation3 + $0x160] sm:$0xff] %v1401
        %1416 = vst [vmem:[#allocation3 + $0x168] sm:$0xff] %v1402
        %1417 = vst [vmem:[#allocation3 + $0x170] sm:$0xff] %v1403
        %1418 = vst [vmem:[#allocation3 + $0x178] sm:$0xff] %v1404
        %1419 = vst [vmem:[#allocation3 + $0x180] sm:$0xff] %v1405
        %1420 = vst [vmem:[#allocation3 + $0x188] sm:$0xff] %v1406
        %1421 = vst [vmem:[#allocation3 + $0x190] sm:$0xff] %v1407
        %1422 = vst [vmem:[#allocation3 + $0x198] sm:$0xff] %v1408
        %1423 = vst [vmem:[#allocation3 + $0x1a0] sm:$0xff] %v1409
        %1424 = vst [vmem:[#allocation3 + $0x1a8] sm:$0xff] %v1410
        %1425 = vst [vmem:[#allocation3 + $0x1b0] sm:$0xff] %v1411
        %1426 = vst [vmem:[#allocation3 + $0x1b8] sm:$0xff] %v1412
        %vm1427 = vcmp.lt.s32.totalorder %v534, 28
        %vm1428 = vcmp.lt.s32.totalorder %v535, 28
        %vm1429 = vcmp.lt.s32.totalorder %v536, 28
        %vm1430 = vcmp.lt.s32.totalorder %v537, 28
        %vm1431 = vcmp.lt.s32.totalorder %v538, 28
        %vm1432 = vcmp.lt.s32.totalorder %v539, 28
        %vm1433 = vcmp.lt.s32.totalorder %v540, 28
        %vm1434 = vcmp.lt.s32.totalorder %v541, 28
        %vm1435 = vcmp.lt.s32.totalorder %v542, 28
        %vm1436 = vcmp.lt.s32.totalorder %v543, 28
        %vm1437 = vcmp.lt.s32.totalorder %v544, 28
        %vm1438 = vcmp.lt.s32.totalorder %v545, 28
        %vm1439 = vcmp.lt.s32.totalorder %v546, 28
        %vm1440 = vcmp.lt.s32.totalorder %v547, 28
        %v1441 = vsel %vm1427, %v506, 0.0
        %v1442 = vsel %vm1428, %v507, 0.0
        %v1443 = vsel %vm1429, %v508, 0.0
        %v1444 = vsel %vm1430, %v509, 0.0
        %v1445 = vsel %vm1431, %v510, 0.0
        %v1446 = vsel %vm1432, %v511, 0.0
        %v1447 = vsel %vm1433, %v512, 0.0
        %v1448 = vsel %vm1434, %v513, 0.0
        %v1449 = vsel %vm1435, %v514, 0.0
        %v1450 = vsel %vm1436, %v515, 0.0
        %v1451 = vsel %vm1437, %v516, 0.0
        %v1452 = vsel %vm1438, %v517, 0.0
        %v1453 = vsel %vm1439, %v518, 0.0
        %v1454 = vsel %vm1440, %v519, 0.0
        %1455 = vrot.lane.b32.xlu0 %v520, 1
        %v1456 = vpop.permute.xlu0 %1455
        %1457 = vrot.lane.b32.xlu0 %v527, 1
        %v1458 = vpop.permute.xlu0 %1457
        %1459 = vrot.lane.b32.xlu0 %v521, 1
        %v1460 = vpop.permute.xlu0 %1459
        %1461 = vrot.lane.b32.xlu0 %v528, 1
        %v1462 = vpop.permute.xlu0 %1461
        %1463 = vrot.lane.b32.xlu0 %v522, 1
        %v1464 = vpop.permute.xlu0 %1463
        %1465 = vrot.lane.b32.xlu0 %v529, 1
        %v1466 = vpop.permute.xlu0 %1465
        %1467 = vrot.lane.b32.xlu0 %v523, 1
        %v1468 = vpop.permute.xlu0 %1467
        %1469 = vrot.lane.b32.xlu0 %v530, 1
        %v1470 = vpop.permute.xlu0 %1469
        %1471 = vrot.lane.b32.xlu0 %v524, 1
        %v1472 = vpop.permute.xlu0 %1471
        %1473 = vrot.lane.b32.xlu0 %v531, 1
        %v1474 = vpop.permute.xlu0 %1473
        %1475 = vrot.lane.b32.xlu0 %v525, 1
        %v1476 = vpop.permute.xlu0 %1475
        %1477 = vrot.lane.b32.xlu0 %v532, 1
        %v1478 = vpop.permute.xlu0 %1477
        %1479 = vrot.lane.b32.xlu0 %v526, 1
        %v1480 = vpop.permute.xlu0 %1479
        %1481 = vrot.lane.b32.xlu0 %v533, 1
        %v1482 = vpop.permute.xlu0 %1481
        %v1483 = vsel %vm1243, %v1476, %v1480
        %v1484 = vsel %vm1243, %v1478, %v1482
        %v1485 = vsel %vm1243, %v1472, %v1476
        %v1486 = vsel %vm1243, %v1474, %v1478
        %v1487 = vsel %vm1243, %v1468, %v1472
        %v1488 = vsel %vm1243, %v1470, %v1474
        %v1489 = vsel %vm1243, %v1464, %v1468
        %v1490 = vsel %vm1243, %v1466, %v1470
        %v1491 = vsel %vm1243, %v1460, %v1464
        %v1492 = vsel %vm1243, %v1462, %v1466
        %v1493 = vsel %vm1243, %v1456, %v1460
        %v1494 = vsel %vm1243, %v1458, %v1462
        %v1495 = vsel %vm1243, %v1480, %v1456
        %v1496 = vsel %vm1243, %v1482, %v1458
        %v1497 = vsel %vm1258, %v1495, 0.0
        %v1498 = vsel %vm1259, %v1493, 0.0
        %v1499 = vsel %vm1260, %v1491, 0.0
        %v1500 = vsel %vm1261, %v1489, 0.0
        %v1501 = vsel %vm1262, %v1487, 0.0
        %v1502 = vsel %vm1263, %v1485, 0.0
        %v1503 = vsel %vm1264, %v1483, 0.0
        %v1504 = vsel %vm1265, %v1496, 0.0
        %v1505 = vsel %vm1266, %v1494, 0.0
        %v1506 = vsel %vm1267, %v1492, 0.0
        %v1507 = vsel %vm1268, %v1490, 0.0
        %v1508 = vsel %vm1269, %v1488, 0.0
        %v1509 = vsel %vm1270, %v1486, 0.0
        %v1510 = vsel %vm1271, %v1484, 0.0
        %1511 = vrot.lane.b32.xlu0 %v520, 101
        %v1512 = vpop.permute.xlu0 %1511
        %1513 = vrot.lane.b32.xlu0 %v527, 101
        %v1514 = vpop.permute.xlu0 %1513
        %1515 = vrot.lane.b32.xlu0 %v521, 101
        %v1516 = vpop.permute.xlu0 %1515
        %1517 = vrot.lane.b32.xlu0 %v528, 101
        %v1518 = vpop.permute.xlu0 %1517
        %1519 = vrot.lane.b32.xlu0 %v522, 101
        %v1520 = vpop.permute.xlu0 %1519
        %1521 = vrot.lane.b32.xlu0 %v529, 101
        %v1522 = vpop.permute.xlu0 %1521
        %1523 = vrot.lane.b32.xlu0 %v523, 101
        %v1524 = vpop.permute.xlu0 %1523
        %1525 = vrot.lane.b32.xlu0 %v530, 101
        %v1526 = vpop.permute.xlu0 %1525
        %1527 = vrot.lane.b32.xlu0 %v524, 101
        %v1528 = vpop.permute.xlu0 %1527
        %1529 = vrot.lane.b32.xlu0 %v531, 101
        %v1530 = vpop.permute.xlu0 %1529
        %1531 = vrot.lane.b32.xlu0 %v525, 101
        %v1532 = vpop.permute.xlu0 %1531
        %1533 = vrot.lane.b32.xlu0 %v532, 101
        %v1534 = vpop.permute.xlu0 %1533
        %1535 = vrot.lane.b32.xlu0 %v526, 101
        %v1536 = vpop.permute.xlu0 %1535
        %1537 = vrot.lane.b32.xlu0 %v533, 101
        %v1538 = vpop.permute.xlu0 %1537
        %vm1539 = vcmp.lt.s32.totalorder %v591, 101
        %v1540 = vsel %vm1539, %v1532, %v1536
        %v1541 = vsel %vm1539, %v1534, %v1538
        %v1542 = vsel %vm1539, %v1528, %v1532
        %v1543 = vsel %vm1539, %v1530, %v1534
        %v1544 = vsel %vm1539, %v1524, %v1528
        %v1545 = vsel %vm1539, %v1526, %v1530
        %v1546 = vsel %vm1539, %v1520, %v1524
        %v1547 = vsel %vm1539, %v1522, %v1526
        %v1548 = vsel %vm1539, %v1516, %v1520
        %v1549 = vsel %vm1539, %v1518, %v1522
        %v1550 = vsel %vm1539, %v1512, %v1516
        %v1551 = vsel %vm1539, %v1514, %v1518
        %v1552 = vsel %vm1539, %v1536, %v1512
        %v1553 = vsel %vm1539, %v1538, %v1514
        %v1554 = vsel %vm548, %v1550, %v1497
        %v1555 = vsel %vm549, %v1548, %v1498
        %v1556 = vsel %vm550, %v1546, %v1499
        %v1557 = vsel %vm551, %v1544, %v1500
        %v1558 = vsel %vm552, %v1542, %v1501
        %v1559 = vsel %vm553, %v1540, %v1502
        %v1560 = vsel %vm554, %v1552, %v1503
        %v1561 = vsel %vm555, %v1551, %v1504
        %v1562 = vsel %vm556, %v1549, %v1505
        %v1563 = vsel %vm557, %v1547, %v1506
        %v1564 = vsel %vm558, %v1545, %v1507
        %v1565 = vsel %vm559, %v1543, %v1508
        %v1566 = vsel %vm560, %v1541, %v1509
        %v1567 = vsel %vm561, %v1553, %v1510
        %v1568 = vadd.f32 %v1441, %v1554
        %v1569 = vadd.f32 %v1442, %v1555
        %v1570 = vadd.f32 %v1443, %v1556
        %v1571 = vadd.f32 %v1444, %v1557
        %v1572 = vadd.f32 %v1445, %v1558
        %v1573 = vadd.f32 %v1446, %v1559
        %v1574 = vadd.f32 %v1447, %v1560
        %v1575 = vadd.f32 %v1448, %v1561
        %v1576 = vadd.f32 %v1449, %v1562
        %v1577 = vadd.f32 %v1450, %v1563
        %v1578 = vadd.f32 %v1451, %v1564
        %v1579 = vadd.f32 %v1452, %v1565
        %v1580 = vadd.f32 %v1453, %v1566
        %v1581 = vadd.f32 %v1454, %v1567
        %1582 = vst [vmem:[#allocation3 + $0x1c0] sm:$0xff] %v1568
        %1583 = vst [vmem:[#allocation3 + $0x1c8] sm:$0xff] %v1569
        %1584 = vst [vmem:[#allocation3 + $0x1d0] sm:$0xff] %v1570
        %1585 = vst [vmem:[#allocation3 + $0x1d8] sm:$0xff] %v1571
        %1586 = vst [vmem:[#allocation3 + $0x1e0] sm:$0xff] %v1572
        %1587 = vst [vmem:[#allocation3 + $0x1e8] sm:$0xff] %v1573
        %1588 = vst [vmem:[#allocation3 + $0x1f0] sm:$0xff] %v1574
        %1589 = vst [vmem:[#allocation3 + $0x1f8] sm:$0xff] %v1575
        %1590 = vst [vmem:[#allocation3 + $0x200] sm:$0xff] %v1576
        %1591 = vst [vmem:[#allocation3 + $0x208] sm:$0xff] %v1577
        %1592 = vst [vmem:[#allocation3 + $0x210] sm:$0xff] %v1578
        %1593 = vst [vmem:[#allocation3 + $0x218] sm:$0xff] %v1579
        %1594 = vst [vmem:[#allocation3 + $0x220] sm:$0xff] %v1580
        %1595 = vst [vmem:[#allocation3 + $0x228] sm:$0xff] %v1581
        %1596 = vrot.lane.b32.xlu0 %v506, 127
        %v1597 = vpop.permute.xlu0 %1596
        %1598 = vrot.lane.b32.xlu0 %v513, 127
        %v1599 = vpop.permute.xlu0 %1598
        %1600 = vrot.lane.b32.xlu0 %v507, 127
        %v1601 = vpop.permute.xlu0 %1600
        %1602 = vrot.lane.b32.xlu0 %v514, 127
        %v1603 = vpop.permute.xlu0 %1602
        %1604 = vrot.lane.b32.xlu0 %v508, 127
        %v1605 = vpop.permute.xlu0 %1604
        %1606 = vrot.lane.b32.xlu0 %v515, 127
        %v1607 = vpop.permute.xlu0 %1606
        %1608 = vrot.lane.b32.xlu0 %v509, 127
        %v1609 = vpop.permute.xlu0 %1608
        %1610 = vrot.lane.b32.xlu0 %v516, 127
        %v1611 = vpop.permute.xlu0 %1610
        %1612 = vrot.lane.b32.xlu0 %v510, 127
        %v1613 = vpop.permute.xlu0 %1612
        %1614 = vrot.lane.b32.xlu0 %v517, 127
        %v1615 = vpop.permute.xlu0 %1614
        %1616 = vrot.lane.b32.xlu0 %v511, 127
        %v1617 = vpop.permute.xlu0 %1616
        %1618 = vrot.lane.b32.xlu0 %v518, 127
        %v1619 = vpop.permute.xlu0 %1618
        %1620 = vrot.lane.b32.xlu0 %v512, 127
        %v1621 = vpop.permute.xlu0 %1620
        %1622 = vrot.lane.b32.xlu0 %v519, 127
        %v1623 = vpop.permute.xlu0 %1622
        %vm1624 = vcmp.lt.s32.totalorder %v591, 127
        %v1625 = vsel %vm1624, %v1617, %v1621
        %v1626 = vsel %vm1624, %v1619, %v1623
        %v1627 = vsel %vm1624, %v1613, %v1617
        %v1628 = vsel %vm1624, %v1615, %v1619
        %v1629 = vsel %vm1624, %v1609, %v1613
        %v1630 = vsel %vm1624, %v1611, %v1615
        %v1631 = vsel %vm1624, %v1605, %v1609
        %v1632 = vsel %vm1624, %v1607, %v1611
        %v1633 = vsel %vm1624, %v1601, %v1605
        %v1634 = vsel %vm1624, %v1603, %v1607
        %v1635 = vsel %vm1624, %v1597, %v1601
        %v1636 = vsel %vm1624, %v1599, %v1603
        %v1637 = vsel %vm1624, %v1621, %v1597
        %v1638 = vsel %vm1624, %v1623, %v1599
        %vm1639 = vcmp.lt.s32.totalorder %v534, 27
        %vm1640 = vcmp.lt.s32.totalorder %v535, 27
        %vm1641 = vcmp.lt.s32.totalorder %v536, 27
        %vm1642 = vcmp.lt.s32.totalorder %v537, 27
        %vm1643 = vcmp.lt.s32.totalorder %v538, 27
        %vm1644 = vcmp.lt.s32.totalorder %v539, 27
        %vm1645 = vcmp.lt.s32.totalorder %v540, 27
        %vm1646 = vcmp.lt.s32.totalorder %v541, 27
        %vm1647 = vcmp.lt.s32.totalorder %v542, 27
        %vm1648 = vcmp.lt.s32.totalorder %v543, 27
        %vm1649 = vcmp.lt.s32.totalorder %v544, 27
        %vm1650 = vcmp.lt.s32.totalorder %v545, 27
        %vm1651 = vcmp.lt.s32.totalorder %v546, 27
        %vm1652 = vcmp.lt.s32.totalorder %v547, 27
        %v1653 = vsel %vm1639, %v1635, 0.0
        %v1654 = vsel %vm1640, %v1633, 0.0
        %v1655 = vsel %vm1641, %v1631, 0.0
        %v1656 = vsel %vm1642, %v1629, 0.0
        %v1657 = vsel %vm1643, %v1627, 0.0
        %v1658 = vsel %vm1644, %v1625, 0.0
        %v1659 = vsel %vm1645, %v1637, 0.0
        %v1660 = vsel %vm1646, %v1636, 0.0
        %v1661 = vsel %vm1647, %v1634, 0.0
        %v1662 = vsel %vm1648, %v1632, 0.0
        %v1663 = vsel %vm1649, %v1630, 0.0
        %v1664 = vsel %vm1650, %v1628, 0.0
        %v1665 = vsel %vm1651, %v1626, 0.0
        %v1666 = vsel %vm1652, %v1638, 0.0
        %vm1667 = vmand %vm1258, %vm1427
        %vm1668 = vmand %vm1259, %vm1428
        %vm1669 = vmand %vm1260, %vm1429
        %vm1670 = vmand %vm1261, %vm1430
        %vm1671 = vmand %vm1262, %vm1431
        %vm1672 = vmand %vm1263, %vm1432
        %vm1673 = vmand %vm1264, %vm1433
        %vm1674 = vmand %vm1265, %vm1434
        %vm1675 = vmand %vm1266, %vm1435
        %vm1676 = vmand %vm1267, %vm1436
        %vm1677 = vmand %vm1268, %vm1437
        %vm1678 = vmand %vm1269, %vm1438
        %vm1679 = vmand %vm1270, %vm1439
        %vm1680 = vmand %vm1271, %vm1440
        %v1681 = vsel %vm1667, %v520, 0.0
        %v1682 = vsel %vm1668, %v521, 0.0
        %v1683 = vsel %vm1669, %v522, 0.0
        %v1684 = vsel %vm1670, %v523, 0.0
        %v1685 = vsel %vm1671, %v524, 0.0
        %v1686 = vsel %vm1672, %v525, 0.0
        %v1687 = vsel %vm1673, %v526, 0.0
        %v1688 = vsel %vm1674, %v527, 0.0
        %v1689 = vsel %vm1675, %v528, 0.0
        %v1690 = vsel %vm1676, %v529, 0.0
        %v1691 = vsel %vm1677, %v530, 0.0
        %v1692 = vsel %vm1678, %v531, 0.0
        %v1693 = vsel %vm1679, %v532, 0.0
        %v1694 = vsel %vm1680, %v533, 0.0
        %v1695 = vadd.f32 %v1653, %v1681
        %v1696 = vadd.f32 %v1654, %v1682
        %v1697 = vadd.f32 %v1655, %v1683
        %v1698 = vadd.f32 %v1656, %v1684
        %v1699 = vadd.f32 %v1657, %v1685
        %v1700 = vadd.f32 %v1658, %v1686
        %v1701 = vadd.f32 %v1659, %v1687
        %v1702 = vadd.f32 %v1660, %v1688
        %v1703 = vadd.f32 %v1661, %v1689
        %v1704 = vadd.f32 %v1662, %v1690
        %v1705 = vadd.f32 %v1663, %v1691
        %v1706 = vadd.f32 %v1664, %v1692
        %v1707 = vadd.f32 %v1665, %v1693
        %v1708 = vadd.f32 %v1666, %v1694
        %1709 = vst [vmem:[#allocation3 + $0x230] sm:$0xff] %v1695
        %1710 = vst [vmem:[#allocation3 + $0x238] sm:$0xff] %v1696
        %1711 = vst [vmem:[#allocation3 + $0x240] sm:$0xff] %v1697
        %1712 = vst [vmem:[#allocation3 + $0x248] sm:$0xff] %v1698
        %1713 = vst [vmem:[#allocation3 + $0x250] sm:$0xff] %v1699
        %1714 = vst [vmem:[#allocation3 + $0x258] sm:$0xff] %v1700
        %1715 = vst [vmem:[#allocation3 + $0x260] sm:$0xff] %v1701
        %1716 = vst [vmem:[#allocation3 + $0x268] sm:$0xff] %v1702
        %1717 = vst [vmem:[#allocation3 + $0x270] sm:$0xff] %v1703
        %1718 = vst [vmem:[#allocation3 + $0x278] sm:$0xff] %v1704
        %1719 = vst [vmem:[#allocation3 + $0x280] sm:$0xff] %v1705
        %1720 = vst [vmem:[#allocation3 + $0x288] sm:$0xff] %v1706
        %1721 = vst [vmem:[#allocation3 + $0x290] sm:$0xff] %v1707
        %1722 = vst [vmem:[#allocation3 + $0x298] sm:$0xff] %v1708
        %1723 = vrot.lane.b32.xlu0 %v506, 126
        %v1724 = vpop.permute.xlu0 %1723
        %1725 = vrot.lane.b32.xlu0 %v513, 126
        %v1726 = vpop.permute.xlu0 %1725
        %1727 = vrot.lane.b32.xlu0 %v507, 126
        %v1728 = vpop.permute.xlu0 %1727
        %1729 = vrot.lane.b32.xlu0 %v514, 126
        %v1730 = vpop.permute.xlu0 %1729
        %1731 = vrot.lane.b32.xlu0 %v508, 126
        %v1732 = vpop.permute.xlu0 %1731
        %1733 = vrot.lane.b32.xlu0 %v515, 126
        %v1734 = vpop.permute.xlu0 %1733
        %1735 = vrot.lane.b32.xlu0 %v509, 126
        %v1736 = vpop.permute.xlu0 %1735
        %1737 = vrot.lane.b32.xlu0 %v516, 126
        %v1738 = vpop.permute.xlu0 %1737
        %1739 = vrot.lane.b32.xlu0 %v510, 126
        %v1740 = vpop.permute.xlu0 %1739
        %1741 = vrot.lane.b32.xlu0 %v517, 126
        %v1742 = vpop.permute.xlu0 %1741
        %1743 = vrot.lane.b32.xlu0 %v511, 126
        %v1744 = vpop.permute.xlu0 %1743
        %1745 = vrot.lane.b32.xlu0 %v518, 126
        %v1746 = vpop.permute.xlu0 %1745
        %1747 = vrot.lane.b32.xlu0 %v512, 126
        %v1748 = vpop.permute.xlu0 %1747
        %1749 = vrot.lane.b32.xlu0 %v519, 126
        %v1750 = vpop.permute.xlu0 %1749
        %vm1751 = vcmp.lt.s32.totalorder %v591, 126
        %v1752 = vsel %vm1751, %v1744, %v1748
        %v1753 = vsel %vm1751, %v1746, %v1750
        %v1754 = vsel %vm1751, %v1740, %v1744
        %v1755 = vsel %vm1751, %v1742, %v1746
        %v1756 = vsel %vm1751, %v1736, %v1740
        %v1757 = vsel %vm1751, %v1738, %v1742
        %v1758 = vsel %vm1751, %v1732, %v1736
        %v1759 = vsel %vm1751, %v1734, %v1738
        %v1760 = vsel %vm1751, %v1728, %v1732
        %v1761 = vsel %vm1751, %v1730, %v1734
        %v1762 = vsel %vm1751, %v1724, %v1728
        %v1763 = vsel %vm1751, %v1726, %v1730
        %v1764 = vsel %vm1751, %v1748, %v1724
        %v1765 = vsel %vm1751, %v1750, %v1726
        %vm1766 = vcmp.lt.s32.totalorder %v534, 26
        %vm1767 = vcmp.lt.s32.totalorder %v535, 26
        %vm1768 = vcmp.lt.s32.totalorder %v536, 26
        %vm1769 = vcmp.lt.s32.totalorder %v537, 26
        %vm1770 = vcmp.lt.s32.totalorder %v538, 26
        %vm1771 = vcmp.lt.s32.totalorder %v539, 26
        %vm1772 = vcmp.lt.s32.totalorder %v540, 26
        %vm1773 = vcmp.lt.s32.totalorder %v541, 26
        %vm1774 = vcmp.lt.s32.totalorder %v542, 26
        %vm1775 = vcmp.lt.s32.totalorder %v543, 26
        %vm1776 = vcmp.lt.s32.totalorder %v544, 26
        %vm1777 = vcmp.lt.s32.totalorder %v545, 26
        %vm1778 = vcmp.lt.s32.totalorder %v546, 26
        %vm1779 = vcmp.lt.s32.totalorder %v547, 26
        %v1780 = vsel %vm1766, %v1762, 0.0
        %v1781 = vsel %vm1767, %v1760, 0.0
        %v1782 = vsel %vm1768, %v1758, 0.0
        %v1783 = vsel %vm1769, %v1756, 0.0
        %v1784 = vsel %vm1770, %v1754, 0.0
        %v1785 = vsel %vm1771, %v1752, 0.0
        %v1786 = vsel %vm1772, %v1764, 0.0
        %v1787 = vsel %vm1773, %v1763, 0.0
        %v1788 = vsel %vm1774, %v1761, 0.0
        %v1789 = vsel %vm1775, %v1759, 0.0
        %v1790 = vsel %vm1776, %v1757, 0.0
        %v1791 = vsel %vm1777, %v1755, 0.0
        %v1792 = vsel %vm1778, %v1753, 0.0
        %v1793 = vsel %vm1779, %v1765, 0.0
        %1794 = vrot.lane.b32.xlu0 %v520, 127
        %v1795 = vpop.permute.xlu0 %1794
        %1796 = vrot.lane.b32.xlu0 %v527, 127
        %v1797 = vpop.permute.xlu0 %1796
        %1798 = vrot.lane.b32.xlu0 %v521, 127
        %v1799 = vpop.permute.xlu0 %1798
        %1800 = vrot.lane.b32.xlu0 %v528, 127
        %v1801 = vpop.permute.xlu0 %1800
        %1802 = vrot.lane.b32.xlu0 %v522, 127
        %v1803 = vpop.permute.xlu0 %1802
        %1804 = vrot.lane.b32.xlu0 %v529, 127
        %v1805 = vpop.permute.xlu0 %1804
        %1806 = vrot.lane.b32.xlu0 %v523, 127
        %v1807 = vpop.permute.xlu0 %1806
        %1808 = vrot.lane.b32.xlu0 %v530, 127
        %v1809 = vpop.permute.xlu0 %1808
        %1810 = vrot.lane.b32.xlu0 %v524, 127
        %v1811 = vpop.permute.xlu0 %1810
        %1812 = vrot.lane.b32.xlu0 %v531, 127
        %v1813 = vpop.permute.xlu0 %1812
        %1814 = vrot.lane.b32.xlu0 %v525, 127
        %v1815 = vpop.permute.xlu0 %1814
        %1816 = vrot.lane.b32.xlu0 %v532, 127
        %v1817 = vpop.permute.xlu0 %1816
        %1818 = vrot.lane.b32.xlu0 %v526, 127
        %v1819 = vpop.permute.xlu0 %1818
        %1820 = vrot.lane.b32.xlu0 %v533, 127
        %v1821 = vpop.permute.xlu0 %1820
        %v1822 = vsel %vm1624, %v1815, %v1819
        %v1823 = vsel %vm1624, %v1817, %v1821
        %v1824 = vsel %vm1624, %v1811, %v1815
        %v1825 = vsel %vm1624, %v1813, %v1817
        %v1826 = vsel %vm1624, %v1807, %v1811
        %v1827 = vsel %vm1624, %v1809, %v1813
        %v1828 = vsel %vm1624, %v1803, %v1807
        %v1829 = vsel %vm1624, %v1805, %v1809
        %v1830 = vsel %vm1624, %v1799, %v1803
        %v1831 = vsel %vm1624, %v1801, %v1805
        %v1832 = vsel %vm1624, %v1795, %v1799
        %v1833 = vsel %vm1624, %v1797, %v1801
        %v1834 = vsel %vm1624, %v1819, %v1795
        %v1835 = vsel %vm1624, %v1821, %v1797
        %vm1836 = vmand %vm1258, %vm1639
        %vm1837 = vmand %vm1259, %vm1640
        %vm1838 = vmand %vm1260, %vm1641
        %vm1839 = vmand %vm1261, %vm1642
        %vm1840 = vmand %vm1262, %vm1643
        %vm1841 = vmand %vm1263, %vm1644
        %vm1842 = vmand %vm1264, %vm1645
        %vm1843 = vmand %vm1265, %vm1646
        %vm1844 = vmand %vm1266, %vm1647
        %vm1845 = vmand %vm1267, %vm1648
        %vm1846 = vmand %vm1268, %vm1649
        %vm1847 = vmand %vm1269, %vm1650
        %vm1848 = vmand %vm1270, %vm1651
        %vm1849 = vmand %vm1271, %vm1652
        %v1850 = vsel %vm1836, %v1832, 0.0
        %v1851 = vsel %vm1837, %v1830, 0.0
        %v1852 = vsel %vm1838, %v1828, 0.0
        %v1853 = vsel %vm1839, %v1826, 0.0
        %v1854 = vsel %vm1840, %v1824, 0.0
        %v1855 = vsel %vm1841, %v1822, 0.0
        %v1856 = vsel %vm1842, %v1834, 0.0
        %v1857 = vsel %vm1843, %v1833, 0.0
        %v1858 = vsel %vm1844, %v1831, 0.0
        %v1859 = vsel %vm1845, %v1829, 0.0
        %v1860 = vsel %vm1846, %v1827, 0.0
        %v1861 = vsel %vm1847, %v1825, 0.0
        %v1862 = vsel %vm1848, %v1823, 0.0
        %v1863 = vsel %vm1849, %v1835, 0.0
        %v1864 = vadd.f32 %v1780, %v1850
        %v1865 = vadd.f32 %v1781, %v1851
        %v1866 = vadd.f32 %v1782, %v1852
        %v1867 = vadd.f32 %v1783, %v1853
        %v1868 = vadd.f32 %v1784, %v1854
        %v1869 = vadd.f32 %v1785, %v1855
        %v1870 = vadd.f32 %v1786, %v1856
        %v1871 = vadd.f32 %v1787, %v1857
        %v1872 = vadd.f32 %v1788, %v1858
        %v1873 = vadd.f32 %v1789, %v1859
        %v1874 = vadd.f32 %v1790, %v1860
        %v1875 = vadd.f32 %v1791, %v1861
        %v1876 = vadd.f32 %v1792, %v1862
        %v1877 = vadd.f32 %v1793, %v1863
        %1878 = vst [vmem:[#allocation3 + $0x2a0] sm:$0xff] %v1864
        %1879 = vst [vmem:[#allocation3 + $0x2a8] sm:$0xff] %v1865
        %1880 = vst [vmem:[#allocation3 + $0x2b0] sm:$0xff] %v1866
        %1881 = vst [vmem:[#allocation3 + $0x2b8] sm:$0xff] %v1867
        %1882 = vst [vmem:[#allocation3 + $0x2c0] sm:$0xff] %v1868
        %1883 = vst [vmem:[#allocation3 + $0x2c8] sm:$0xff] %v1869
        %1884 = vst [vmem:[#allocation3 + $0x2d0] sm:$0xff] %v1870
        %1885 = vst [vmem:[#allocation3 + $0x2d8] sm:$0xff] %v1871
        %1886 = vst [vmem:[#allocation3 + $0x2e0] sm:$0xff] %v1872
        %1887 = vst [vmem:[#allocation3 + $0x2e8] sm:$0xff] %v1873
        %1888 = vst [vmem:[#allocation3 + $0x2f0] sm:$0xff] %v1874
        %1889 = vst [vmem:[#allocation3 + $0x2f8] sm:$0xff] %v1875
        %1890 = vst [vmem:[#allocation3 + $0x300] sm:$0xff] %v1876
        %1891 = vst [vmem:[#allocation3 + $0x308] sm:$0xff] %v1877
        %1892 = vrot.lane.b32.xlu0 %v506, 125
        %v1893 = vpop.permute.xlu0 %1892
        %1894 = vrot.lane.b32.xlu0 %v513, 125
        %v1895 = vpop.permute.xlu0 %1894
        %1896 = vrot.lane.b32.xlu0 %v507, 125
        %v1897 = vpop.permute.xlu0 %1896
        %1898 = vrot.lane.b32.xlu0 %v514, 125
        %v1899 = vpop.permute.xlu0 %1898
        %1900 = vrot.lane.b32.xlu0 %v508, 125
        %v1901 = vpop.permute.xlu0 %1900
        %1902 = vrot.lane.b32.xlu0 %v515, 125
        %v1903 = vpop.permute.xlu0 %1902
        %1904 = vrot.lane.b32.xlu0 %v509, 125
        %v1905 = vpop.permute.xlu0 %1904
        %1906 = vrot.lane.b32.xlu0 %v516, 125
        %v1907 = vpop.permute.xlu0 %1906
        %1908 = vrot.lane.b32.xlu0 %v510, 125
        %v1909 = vpop.permute.xlu0 %1908
        %1910 = vrot.lane.b32.xlu0 %v517, 125
        %v1911 = vpop.permute.xlu0 %1910
        %1912 = vrot.lane.b32.xlu0 %v511, 125
        %v1913 = vpop.permute.xlu0 %1912
        %1914 = vrot.lane.b32.xlu0 %v518, 125
        %v1915 = vpop.permute.xlu0 %1914
        %1916 = vrot.lane.b32.xlu0 %v512, 125
        %v1917 = vpop.permute.xlu0 %1916
        %1918 = vrot.lane.b32.xlu0 %v519, 125
        %v1919 = vpop.permute.xlu0 %1918
        %vm1920 = vcmp.lt.s32.totalorder %v591, 125
        %v1921 = vsel %vm1920, %v1913, %v1917
        %v1922 = vsel %vm1920, %v1915, %v1919
        %v1923 = vsel %vm1920, %v1909, %v1913
        %v1924 = vsel %vm1920, %v1911, %v1915
        %v1925 = vsel %vm1920, %v1905, %v1909
        %v1926 = vsel %vm1920, %v1907, %v1911
        %v1927 = vsel %vm1920, %v1901, %v1905
        %v1928 = vsel %vm1920, %v1903, %v1907
        %v1929 = vsel %vm1920, %v1897, %v1901
        %v1930 = vsel %vm1920, %v1899, %v1903
        %v1931 = vsel %vm1920, %v1893, %v1897
        %v1932 = vsel %vm1920, %v1895, %v1899
        %v1933 = vsel %vm1920, %v1917, %v1893
        %v1934 = vsel %vm1920, %v1919, %v1895
        %vm1935 = vcmp.lt.s32.totalorder %v534, 25
        %vm1936 = vcmp.lt.s32.totalorder %v535, 25
        %vm1937 = vcmp.lt.s32.totalorder %v536, 25
        %vm1938 = vcmp.lt.s32.totalorder %v537, 25
        %vm1939 = vcmp.lt.s32.totalorder %v538, 25
        %vm1940 = vcmp.lt.s32.totalorder %v539, 25
        %vm1941 = vcmp.lt.s32.totalorder %v540, 25
        %vm1942 = vcmp.lt.s32.totalorder %v541, 25
        %vm1943 = vcmp.lt.s32.totalorder %v542, 25
        %vm1944 = vcmp.lt.s32.totalorder %v543, 25
        %vm1945 = vcmp.lt.s32.totalorder %v544, 25
        %vm1946 = vcmp.lt.s32.totalorder %v545, 25
        %vm1947 = vcmp.lt.s32.totalorder %v546, 25
        %vm1948 = vcmp.lt.s32.totalorder %v547, 25
        %v1949 = vsel %vm1935, %v1931, 0.0
        %v1950 = vsel %vm1936, %v1929, 0.0
        %v1951 = vsel %vm1937, %v1927, 0.0
        %v1952 = vsel %vm1938, %v1925, 0.0
        %v1953 = vsel %vm1939, %v1923, 0.0
        %v1954 = vsel %vm1940, %v1921, 0.0
        %v1955 = vsel %vm1941, %v1933, 0.0
        %v1956 = vsel %vm1942, %v1932, 0.0
        %v1957 = vsel %vm1943, %v1930, 0.0
        %v1958 = vsel %vm1944, %v1928, 0.0
        %v1959 = vsel %vm1945, %v1926, 0.0
        %v1960 = vsel %vm1946, %v1924, 0.0
        %v1961 = vsel %vm1947, %v1922, 0.0
        %v1962 = vsel %vm1948, %v1934, 0.0
        %1963 = vrot.lane.b32.xlu0 %v520, 126
        %v1964 = vpop.permute.xlu0 %1963
        %1965 = vrot.lane.b32.xlu0 %v527, 126
        %v1966 = vpop.permute.xlu0 %1965
        %1967 = vrot.lane.b32.xlu0 %v521, 126
        %v1968 = vpop.permute.xlu0 %1967
        %1969 = vrot.lane.b32.xlu0 %v528, 126
        %v1970 = vpop.permute.xlu0 %1969
        %1971 = vrot.lane.b32.xlu0 %v522, 126
        %v1972 = vpop.permute.xlu0 %1971
        %1973 = vrot.lane.b32.xlu0 %v529, 126
        %v1974 = vpop.permute.xlu0 %1973
        %1975 = vrot.lane.b32.xlu0 %v523, 126
        %v1976 = vpop.permute.xlu0 %1975
        %1977 = vrot.lane.b32.xlu0 %v530, 126
        %v1978 = vpop.permute.xlu0 %1977
        %1979 = vrot.lane.b32.xlu0 %v524, 126
        %v1980 = vpop.permute.xlu0 %1979
        %1981 = vrot.lane.b32.xlu0 %v531, 126
        %v1982 = vpop.permute.xlu0 %1981
        %1983 = vrot.lane.b32.xlu0 %v525, 126
        %v1984 = vpop.permute.xlu0 %1983
        %1985 = vrot.lane.b32.xlu0 %v532, 126
        %v1986 = vpop.permute.xlu0 %1985
        %1987 = vrot.lane.b32.xlu0 %v526, 126
        %v1988 = vpop.permute.xlu0 %1987
        %1989 = vrot.lane.b32.xlu0 %v533, 126
        %v1990 = vpop.permute.xlu0 %1989
        %v1991 = vsel %vm1751, %v1984, %v1988
        %v1992 = vsel %vm1751, %v1986, %v1990
        %v1993 = vsel %vm1751, %v1980, %v1984
        %v1994 = vsel %vm1751, %v1982, %v1986
        %v1995 = vsel %vm1751, %v1976, %v1980
        %v1996 = vsel %vm1751, %v1978, %v1982
        %v1997 = vsel %vm1751, %v1972, %v1976
        %v1998 = vsel %vm1751, %v1974, %v1978
        %v1999 = vsel %vm1751, %v1968, %v1972
        %v2000 = vsel %vm1751, %v1970, %v1974
        %v2001 = vsel %vm1751, %v1964, %v1968
        %v2002 = vsel %vm1751, %v1966, %v1970
        %v2003 = vsel %vm1751, %v1988, %v1964
        %v2004 = vsel %vm1751, %v1990, %v1966
        %vm2005 = vmand %vm1258, %vm1766
        %vm2006 = vmand %vm1259, %vm1767
        %vm2007 = vmand %vm1260, %vm1768
        %vm2008 = vmand %vm1261, %vm1769
        %vm2009 = vmand %vm1262, %vm1770
        %vm2010 = vmand %vm1263, %vm1771
        %vm2011 = vmand %vm1264, %vm1772
        %vm2012 = vmand %vm1265, %vm1773
        %vm2013 = vmand %vm1266, %vm1774
        %vm2014 = vmand %vm1267, %vm1775
        %vm2015 = vmand %vm1268, %vm1776
        %vm2016 = vmand %vm1269, %vm1777
        %vm2017 = vmand %vm1270, %vm1778
        %vm2018 = vmand %vm1271, %vm1779
        %v2019 = vsel %vm2005, %v2001, 0.0
        %v2020 = vsel %vm2006, %v1999, 0.0
        %v2021 = vsel %vm2007, %v1997, 0.0
        %v2022 = vsel %vm2008, %v1995, 0.0
        %v2023 = vsel %vm2009, %v1993, 0.0
        %v2024 = vsel %vm2010, %v1991, 0.0
        %v2025 = vsel %vm2011, %v2003, 0.0
        %v2026 = vsel %vm2012, %v2002, 0.0
        %v2027 = vsel %vm2013, %v2000, 0.0
        %v2028 = vsel %vm2014, %v1998, 0.0
        %v2029 = vsel %vm2015, %v1996, 0.0
        %v2030 = vsel %vm2016, %v1994, 0.0
        %v2031 = vsel %vm2017, %v1992, 0.0
        %v2032 = vsel %vm2018, %v2004, 0.0
        %v2033 = vadd.f32 %v1949, %v2019
        %v2034 = vadd.f32 %v1950, %v2020
        %v2035 = vadd.f32 %v1951, %v2021
        %v2036 = vadd.f32 %v1952, %v2022
        %v2037 = vadd.f32 %v1953, %v2023
        %v2038 = vadd.f32 %v1954, %v2024
        %v2039 = vadd.f32 %v1955, %v2025
        %v2040 = vadd.f32 %v1956, %v2026
        %v2041 = vadd.f32 %v1957, %v2027
        %v2042 = vadd.f32 %v1958, %v2028
        %v2043 = vadd.f32 %v1959, %v2029
        %v2044 = vadd.f32 %v1960, %v2030
        %v2045 = vadd.f32 %v1961, %v2031
        %v2046 = vadd.f32 %v1962, %v2032
        %2047 = vst [vmem:[#allocation3 + $0x310] sm:$0xff] %v2033
        %2048 = vst [vmem:[#allocation3 + $0x318] sm:$0xff] %v2034
        %2049 = vst [vmem:[#allocation3 + $0x320] sm:$0xff] %v2035
        %2050 = vst [vmem:[#allocation3 + $0x328] sm:$0xff] %v2036
        %2051 = vst [vmem:[#allocation3 + $0x330] sm:$0xff] %v2037
        %2052 = vst [vmem:[#allocation3 + $0x338] sm:$0xff] %v2038
        %2053 = vst [vmem:[#allocation3 + $0x340] sm:$0xff] %v2039
        %2054 = vst [vmem:[#allocation3 + $0x348] sm:$0xff] %v2040
        %2055 = vst [vmem:[#allocation3 + $0x350] sm:$0xff] %v2041
        %2056 = vst [vmem:[#allocation3 + $0x358] sm:$0xff] %v2042
        %2057 = vst [vmem:[#allocation3 + $0x360] sm:$0xff] %v2043
        %2058 = vst [vmem:[#allocation3 + $0x368] sm:$0xff] %v2044
        %2059 = vst [vmem:[#allocation3 + $0x370] sm:$0xff] %v2045
        %2060 = vst [vmem:[#allocation3 + $0x378] sm:$0xff] %v2046
        %2061 = vrot.lane.b32.xlu0 %v506, 124
        %v2062 = vpop.permute.xlu0 %2061
        %2063 = vrot.lane.b32.xlu0 %v513, 124
        %v2064 = vpop.permute.xlu0 %2063
        %2065 = vrot.lane.b32.xlu0 %v507, 124
        %v2066 = vpop.permute.xlu0 %2065
        %2067 = vrot.lane.b32.xlu0 %v514, 124
        %v2068 = vpop.permute.xlu0 %2067
        %2069 = vrot.lane.b32.xlu0 %v508, 124
        %v2070 = vpop.permute.xlu0 %2069
        %2071 = vrot.lane.b32.xlu0 %v515, 124
        %v2072 = vpop.permute.xlu0 %2071
        %2073 = vrot.lane.b32.xlu0 %v509, 124
        %v2074 = vpop.permute.xlu0 %2073
        %2075 = vrot.lane.b32.xlu0 %v516, 124
        %v2076 = vpop.permute.xlu0 %2075
        %2077 = vrot.lane.b32.xlu0 %v510, 124
        %v2078 = vpop.permute.xlu0 %2077
        %2079 = vrot.lane.b32.xlu0 %v517, 124
        %v2080 = vpop.permute.xlu0 %2079
        %2081 = vrot.lane.b32.xlu0 %v511, 124
        %v2082 = vpop.permute.xlu0 %2081
        %2083 = vrot.lane.b32.xlu0 %v518, 124
        %v2084 = vpop.permute.xlu0 %2083
        %2085 = vrot.lane.b32.xlu0 %v512, 124
        %v2086 = vpop.permute.xlu0 %2085
        %2087 = vrot.lane.b32.xlu0 %v519, 124
        %v2088 = vpop.permute.xlu0 %2087
        %vm2089 = vcmp.lt.s32.totalorder %v591, 124
        %v2090 = vsel %vm2089, %v2082, %v2086
        %v2091 = vsel %vm2089, %v2084, %v2088
        %v2092 = vsel %vm2089, %v2078, %v2082
        %v2093 = vsel %vm2089, %v2080, %v2084
        %v2094 = vsel %vm2089, %v2074, %v2078
        %v2095 = vsel %vm2089, %v2076, %v2080
        %v2096 = vsel %vm2089, %v2070, %v2074
        %v2097 = vsel %vm2089, %v2072, %v2076
        %v2098 = vsel %vm2089, %v2066, %v2070
        %v2099 = vsel %vm2089, %v2068, %v2072
        %v2100 = vsel %vm2089, %v2062, %v2066
        %v2101 = vsel %vm2089, %v2064, %v2068
        %v2102 = vsel %vm2089, %v2086, %v2062
        %v2103 = vsel %vm2089, %v2088, %v2064
        %vm2104 = vcmp.lt.s32.totalorder %v534, 24
        %vm2105 = vcmp.lt.s32.totalorder %v535, 24
        %vm2106 = vcmp.lt.s32.totalorder %v536, 24
        %vm2107 = vcmp.lt.s32.totalorder %v537, 24
        %vm2108 = vcmp.lt.s32.totalorder %v538, 24
        %vm2109 = vcmp.lt.s32.totalorder %v539, 24
        %vm2110 = vcmp.lt.s32.totalorder %v540, 24
        %vm2111 = vcmp.lt.s32.totalorder %v541, 24
        %vm2112 = vcmp.lt.s32.totalorder %v542, 24
        %vm2113 = vcmp.lt.s32.totalorder %v543, 24
        %vm2114 = vcmp.lt.s32.totalorder %v544, 24
        %vm2115 = vcmp.lt.s32.totalorder %v545, 24
        %vm2116 = vcmp.lt.s32.totalorder %v546, 24
        %vm2117 = vcmp.lt.s32.totalorder %v547, 24
        %v2118 = vsel %vm2104, %v2100, 0.0
        %v2119 = vsel %vm2105, %v2098, 0.0
        %v2120 = vsel %vm2106, %v2096, 0.0
        %v2121 = vsel %vm2107, %v2094, 0.0
        %v2122 = vsel %vm2108, %v2092, 0.0
        %v2123 = vsel %vm2109, %v2090, 0.0
        %v2124 = vsel %vm2110, %v2102, 0.0
        %v2125 = vsel %vm2111, %v2101, 0.0
        %v2126 = vsel %vm2112, %v2099, 0.0
        %v2127 = vsel %vm2113, %v2097, 0.0
        %v2128 = vsel %vm2114, %v2095, 0.0
        %v2129 = vsel %vm2115, %v2093, 0.0
        %v2130 = vsel %vm2116, %v2091, 0.0
        %v2131 = vsel %vm2117, %v2103, 0.0
        %2132 = vrot.lane.b32.xlu0 %v520, 125
        %v2133 = vpop.permute.xlu0 %2132
        %2134 = vrot.lane.b32.xlu0 %v527, 125
        %v2135 = vpop.permute.xlu0 %2134
        %2136 = vrot.lane.b32.xlu0 %v521, 125
        %v2137 = vpop.permute.xlu0 %2136
        %2138 = vrot.lane.b32.xlu0 %v528, 125
        %v2139 = vpop.permute.xlu0 %2138
        %2140 = vrot.lane.b32.xlu0 %v522, 125
        %v2141 = vpop.permute.xlu0 %2140
        %2142 = vrot.lane.b32.xlu0 %v529, 125
        %v2143 = vpop.permute.xlu0 %2142
        %2144 = vrot.lane.b32.xlu0 %v523, 125
        %v2145 = vpop.permute.xlu0 %2144
        %2146 = vrot.lane.b32.xlu0 %v530, 125
        %v2147 = vpop.permute.xlu0 %2146
        %2148 = vrot.lane.b32.xlu0 %v524, 125
        %v2149 = vpop.permute.xlu0 %2148
        %2150 = vrot.lane.b32.xlu0 %v531, 125
        %v2151 = vpop.permute.xlu0 %2150
        %2152 = vrot.lane.b32.xlu0 %v525, 125
        %v2153 = vpop.permute.xlu0 %2152
        %2154 = vrot.lane.b32.xlu0 %v532, 125
        %v2155 = vpop.permute.xlu0 %2154
        %2156 = vrot.lane.b32.xlu0 %v526, 125
        %v2157 = vpop.permute.xlu0 %2156
        %2158 = vrot.lane.b32.xlu0 %v533, 125
        %v2159 = vpop.permute.xlu0 %2158
        %v2160 = vsel %vm1920, %v2153, %v2157
        %v2161 = vsel %vm1920, %v2155, %v2159
        %v2162 = vsel %vm1920, %v2149, %v2153
        %v2163 = vsel %vm1920, %v2151, %v2155
        %v2164 = vsel %vm1920, %v2145, %v2149
        %v2165 = vsel %vm1920, %v2147, %v2151
        %v2166 = vsel %vm1920, %v2141, %v2145
        %v2167 = vsel %vm1920, %v2143, %v2147
        %v2168 = vsel %vm1920, %v2137, %v2141
        %v2169 = vsel %vm1920, %v2139, %v2143
        %v2170 = vsel %vm1920, %v2133, %v2137
        %v2171 = vsel %vm1920, %v2135, %v2139
        %v2172 = vsel %vm1920, %v2157, %v2133
        %v2173 = vsel %vm1920, %v2159, %v2135
        %vm2174 = vmand %vm1258, %vm1935
        %vm2175 = vmand %vm1259, %vm1936
        %vm2176 = vmand %vm1260, %vm1937
        %vm2177 = vmand %vm1261, %vm1938
        %vm2178 = vmand %vm1262, %vm1939
        %vm2179 = vmand %vm1263, %vm1940
        %vm2180 = vmand %vm1264, %vm1941
        %vm2181 = vmand %vm1265, %vm1942
        %vm2182 = vmand %vm1266, %vm1943
        %vm2183 = vmand %vm1267, %vm1944
        %vm2184 = vmand %vm1268, %vm1945
        %vm2185 = vmand %vm1269, %vm1946
        %vm2186 = vmand %vm1270, %vm1947
        %vm2187 = vmand %vm1271, %vm1948
        %v2188 = vsel %vm2174, %v2170, 0.0
        %v2189 = vsel %vm2175, %v2168, 0.0
        %v2190 = vsel %vm2176, %v2166, 0.0
        %v2191 = vsel %vm2177, %v2164, 0.0
        %v2192 = vsel %vm2178, %v2162, 0.0
        %v2193 = vsel %vm2179, %v2160, 0.0
        %v2194 = vsel %vm2180, %v2172, 0.0
        %v2195 = vsel %vm2181, %v2171, 0.0
        %v2196 = vsel %vm2182, %v2169, 0.0
        %v2197 = vsel %vm2183, %v2167, 0.0
        %v2198 = vsel %vm2184, %v2165, 0.0
        %v2199 = vsel %vm2185, %v2163, 0.0
        %v2200 = vsel %vm2186, %v2161, 0.0
        %v2201 = vsel %vm2187, %v2173, 0.0
        %v2202 = vadd.f32 %v2118, %v2188
        %v2203 = vadd.f32 %v2119, %v2189
        %v2204 = vadd.f32 %v2120, %v2190
        %v2205 = vadd.f32 %v2121, %v2191
        %v2206 = vadd.f32 %v2122, %v2192
        %v2207 = vadd.f32 %v2123, %v2193
        %v2208 = vadd.f32 %v2124, %v2194
        %v2209 = vadd.f32 %v2125, %v2195
        %v2210 = vadd.f32 %v2126, %v2196
        %v2211 = vadd.f32 %v2127, %v2197
        %v2212 = vadd.f32 %v2128, %v2198
        %v2213 = vadd.f32 %v2129, %v2199
        %v2214 = vadd.f32 %v2130, %v2200
        %v2215 = vadd.f32 %v2131, %v2201
        %2216 = vst [vmem:[#allocation3 + $0x380] sm:$0xff] %v2202
        %2217 = vst [vmem:[#allocation3 + $0x388] sm:$0xff] %v2203
        %2218 = vst [vmem:[#allocation3 + $0x390] sm:$0xff] %v2204
        %2219 = vst [vmem:[#allocation3 + $0x398] sm:$0xff] %v2205
        %2220 = vst [vmem:[#allocation3 + $0x3a0] sm:$0xff] %v2206
        %2221 = vst [vmem:[#allocation3 + $0x3a8] sm:$0xff] %v2207
        %2222 = vst [vmem:[#allocation3 + $0x3b0] sm:$0xff] %v2208
        %2223 = vst [vmem:[#allocation3 + $0x3b8] sm:$0xff] %v2209
        %2224 = vst [vmem:[#allocation3 + $0x3c0] sm:$0xff] %v2210
        %2225 = vst [vmem:[#allocation3 + $0x3c8] sm:$0xff] %v2211
        %2226 = vst [vmem:[#allocation3 + $0x3d0] sm:$0xff] %v2212
        %2227 = vst [vmem:[#allocation3 + $0x3d8] sm:$0xff] %v2213
        %2228 = vst [vmem:[#allocation3 + $0x3e0] sm:$0xff] %v2214
        %2229 = vst [vmem:[#allocation3 + $0x3e8] sm:$0xff] %v2215
      $region40: #{kernel_generated_3_forward.1} parent=35 // pred_fallthru
        _
      %v2230 = vld [vmem:[%s197] sm:$0xff]
      %v2231 = vld [vmem:[%s197 + $0x8] sm:$0xff]
      %v2232 = vld [vmem:[%s197 + $0x10] sm:$0xff]
      %v2233 = vld [vmem:[%s197 + $0x18] sm:$0xff]
      %v2234 = vld [vmem:[%s197 + $0x20] sm:$0xff]
      %v2235 = vld [vmem:[%s197 + $0x28] sm:$0xff]
      %v2236 = vld [vmem:[%s197 + $0x30] sm:$0xff]
      %v2237 = vld [vmem:[%s197 + $0x38] sm:$0xff]
      %v2238 = vld [vmem:[%s197 + $0x40] sm:$0xff]
      %v2239 = vld [vmem:[%s197 + $0x48] sm:$0xff]
      %v2240 = vld [vmem:[%s197 + $0x50] sm:$0xff]
      %v2241 = vld [vmem:[%s197 + $0x58] sm:$0xff]
      %v2242 = vld [vmem:[%s197 + $0x60] sm:$0xff]
      %v2243 = vld [vmem:[%s197 + $0x68] sm:$0xff]
      %v2244 = vld [vmem:[%s197 + $0x70] sm:$0xff]
      %v2245 = vld [vmem:[%s197 + $0x78] sm:$0xff]
      %v2246 = vld [vmem:[%s197 + $0x80] sm:$0xff]
      %v2247 = vld [vmem:[%s197 + $0x88] sm:$0xff]
      %v2248 = vld [vmem:[%s197 + $0x90] sm:$0xff]
      %v2249 = vld [vmem:[%s197 + $0x98] sm:$0xff]
      %v2250 = vld [vmem:[%s197 + $0xa0] sm:$0xff]
      %v2251 = vld [vmem:[%s197 + $0xa8] sm:$0xff]
      %v2252 = vld [vmem:[%s197 + $0xb0] sm:$0xff]
      %v2253 = vld [vmem:[%s197 + $0xb8] sm:$0xff]
      %v2254 = vld [vmem:[#allocation3] sm:$0xff]
      %v2255 = vld [vmem:[#allocation3 + $0x8] sm:$0xff]
      %v2256 = vld [vmem:[#allocation3 + $0x10] sm:$0xff]
      %v2257 = vld [vmem:[#allocation3 + $0x18] sm:$0xff]
      %v2258 = vld [vmem:[#allocation3 + $0x20] sm:$0xff]
      %v2259 = vld [vmem:[#allocation3 + $0x28] sm:$0xff]
      %v2260 = vld [vmem:[#allocation3 + $0x30] sm:$0xff]
      %v2261 = vld [vmem:[#allocation3 + $0x38] sm:$0xff]
      %v2262 = vld [vmem:[#allocation3 + $0x40] sm:$0xff]
      %v2263 = vld [vmem:[#allocation3 + $0x48] sm:$0xff]
      %v2264 = vld [vmem:[#allocation3 + $0x50] sm:$0xff]
      %v2265 = vld [vmem:[#allocation3 + $0x58] sm:$0xff]
      %v2266 = vld [vmem:[#allocation3 + $0x60] sm:$0xff]
      %v2267 = vld [vmem:[#allocation3 + $0x68] sm:$0xff]
      %v2268 = vld [vmem:[#allocation3 + $0x70] sm:$0xff]
      %v2269 = vld [vmem:[#allocation3 + $0x78] sm:$0xff]
      %v2270 = vld [vmem:[#allocation3 + $0x80] sm:$0xff]
      %v2271 = vld [vmem:[#allocation3 + $0x88] sm:$0xff]
      %v2272 = vld [vmem:[#allocation3 + $0x90] sm:$0xff]
      %v2273 = vld [vmem:[#allocation3 + $0x98] sm:$0xff]
      %v2274 = vld [vmem:[#allocation3 + $0xa0] sm:$0xff]
      %v2275 = vld [vmem:[#allocation3 + $0xa8] sm:$0xff]
      %v2276 = vld [vmem:[#allocation3 + $0xb0] sm:$0xff]
      %v2277 = vld [vmem:[#allocation3 + $0xb8] sm:$0xff]
      %v2278 = vld [vmem:[#allocation3 + $0xc0] sm:$0xff]
      %v2279 = vld [vmem:[#allocation3 + $0xc8] sm:$0xff]
      %v2280 = vld [vmem:[#allocation3 + $0xd0] sm:$0xff]
      %v2281 = vld [vmem:[#allocation3 + $0xd8] sm:$0xff]
      %v2282 = vld [vmem:[#allocation3 + $0xe0] sm:$0xff]
      %v2283 = vld [vmem:[#allocation3 + $0xe8] sm:$0xff]
      %v2284 = vld [vmem:[#allocation3 + $0xf0] sm:$0xff]
      %v2285 = vld [vmem:[#allocation3 + $0xf8] sm:$0xff]
      %v2286 = vld [vmem:[#allocation3 + $0x100] sm:$0xff]
      %v2287 = vld [vmem:[#allocation3 + $0x108] sm:$0xff]
      %v2288 = vld [vmem:[#allocation3 + $0x110] sm:$0xff]
      %v2289 = vld [vmem:[#allocation3 + $0x118] sm:$0xff]
      %v2290 = vld [vmem:[#allocation3 + $0x120] sm:$0xff]
      %v2291 = vld [vmem:[#allocation3 + $0x128] sm:$0xff]
      %v2292 = vld [vmem:[#allocation3 + $0x130] sm:$0xff]
      %v2293 = vld [vmem:[#allocation3 + $0x138] sm:$0xff]
      %v2294 = vld [vmem:[#allocation3 + $0x140] sm:$0xff]
      %v2295 = vld [vmem:[#allocation3 + $0x148] sm:$0xff]
      %v2296 = vld [vmem:[#allocation3 + $0x150] sm:$0xff]
      %v2297 = vld [vmem:[#allocation3 + $0x158] sm:$0xff]
      %v2298 = vld [vmem:[#allocation3 + $0x160] sm:$0xff]
      %v2299 = vld [vmem:[#allocation3 + $0x168] sm:$0xff]
      %v2300 = vld [vmem:[#allocation3 + $0x170] sm:$0xff]
      %v2301 = vld [vmem:[#allocation3 + $0x178] sm:$0xff]
      %v2302 = vld [vmem:[#allocation3 + $0x180] sm:$0xff]
      %v2303 = vld [vmem:[#allocation3 + $0x188] sm:$0xff]
      %v2304 = vld [vmem:[#allocation3 + $0x190] sm:$0xff]
      %v2305 = vld [vmem:[#allocation3 + $0x198] sm:$0xff]
      %v2306 = vld [vmem:[#allocation3 + $0x1a0] sm:$0xff]
      %v2307 = vld [vmem:[#allocation3 + $0x1a8] sm:$0xff]
      %v2308 = vld [vmem:[#allocation3 + $0x1b0] sm:$0xff]
      %v2309 = vld [vmem:[#allocation3 + $0x1b8] sm:$0xff]
      %v2310 = vld [vmem:[#allocation3 + $0x1c0] sm:$0xff]
      %v2311 = vld [vmem:[#allocation3 + $0x1c8] sm:$0xff]
      %v2312 = vld [vmem:[#allocation3 + $0x1d0] sm:$0xff]
      %v2313 = vld [vmem:[#allocation3 + $0x1d8] sm:$0xff]
      %v2314 = vld [vmem:[#allocation3 + $0x1e0] sm:$0xff]
      %v2315 = vld [vmem:[#allocation3 + $0x1e8] sm:$0xff]
      %v2316 = vld [vmem:[#allocation3 + $0x1f0] sm:$0xff]
      %v2317 = vld [vmem:[#allocation3 + $0x1f8] sm:$0xff]
      %v2318 = vld [vmem:[#allocation3 + $0x200] sm:$0xff]
      %v2319 = vld [vmem:[#allocation3 + $0x208] sm:$0xff]
      %v2320 = vld [vmem:[#allocation3 + $0x210] sm:$0xff]
      %v2321 = vld [vmem:[#allocation3 + $0x218] sm:$0xff]
      %v2322 = vld [vmem:[#allocation3 + $0x220] sm:$0xff]
      %v2323 = vld [vmem:[#allocation3 + $0x228] sm:$0xff]
      %v2324 = vld [vmem:[#allocation3 + $0x230] sm:$0xff]
      %v2325 = vld [vmem:[#allocation3 + $0x238] sm:$0xff]
      %v2326 = vld [vmem:[#allocation3 + $0x240] sm:$0xff]
      %v2327 = vld [vmem:[#allocation3 + $0x248] sm:$0xff]
      %v2328 = vld [vmem:[#allocation3 + $0x250] sm:$0xff]
      %v2329 = vld [vmem:[#allocation3 + $0x258] sm:$0xff]
      %v2330 = vld [vmem:[#allocation3 + $0x260] sm:$0xff]
      %v2331 = vld [vmem:[#allocation3 + $0x268] sm:$0xff]
      %v2332 = vld [vmem:[#allocation3 + $0x270] sm:$0xff]
      %v2333 = vld [vmem:[#allocation3 + $0x278] sm:$0xff]
      %v2334 = vld [vmem:[#allocation3 + $0x280] sm:$0xff]
      %v2335 = vld [vmem:[#allocation3 + $0x288] sm:$0xff]
      %v2336 = vld [vmem:[#allocation3 + $0x290] sm:$0xff]
      %v2337 = vld [vmem:[#allocation3 + $0x298] sm:$0xff]
      %v2338 = vld [vmem:[#allocation3 + $0x2a0] sm:$0xff]
      %v2339 = vld [vmem:[#allocation3 + $0x2a8] sm:$0xff]
      %v2340 = vld [vmem:[#allocation3 + $0x2b0] sm:$0xff]
      %v2341 = vld [vmem:[#allocation3 + $0x2b8] sm:$0xff]
      %v2342 = vld [vmem:[#allocation3 + $0x2c0] sm:$0xff]
      %v2343 = vld [vmem:[#allocation3 + $0x2c8] sm:$0xff]
      %v2344 = vld [vmem:[#allocation3 + $0x2d0] sm:$0xff]
      %v2345 = vld [vmem:[#allocation3 + $0x2d8] sm:$0xff]
      %v2346 = vld [vmem:[#allocation3 + $0x2e0] sm:$0xff]
      %v2347 = vld [vmem:[#allocation3 + $0x2e8] sm:$0xff]
      %v2348 = vld [vmem:[#allocation3 + $0x2f0] sm:$0xff]
      %v2349 = vld [vmem:[#allocation3 + $0x2f8] sm:$0xff]
      %v2350 = vld [vmem:[#allocation3 + $0x300] sm:$0xff]
      %v2351 = vld [vmem:[#allocation3 + $0x308] sm:$0xff]
      %v2352 = vld [vmem:[#allocation3 + $0x310] sm:$0xff]
      %v2353 = vld [vmem:[#allocation3 + $0x318] sm:$0xff]
      %v2354 = vld [vmem:[#allocation3 + $0x320] sm:$0xff]
      %v2355 = vld [vmem:[#allocation3 + $0x328] sm:$0xff]
      %v2356 = vld [vmem:[#allocation3 + $0x330] sm:$0xff]
      %v2357 = vld [vmem:[#allocation3 + $0x338] sm:$0xff]
      %v2358 = vld [vmem:[#allocation3 + $0x340] sm:$0xff]
      %v2359 = vld [vmem:[#allocation3 + $0x348] sm:$0xff]
      %v2360 = vld [vmem:[#allocation3 + $0x350] sm:$0xff]
      %v2361 = vld [vmem:[#allocation3 + $0x358] sm:$0xff]
      %v2362 = vld [vmem:[#allocation3 + $0x360] sm:$0xff]
      %v2363 = vld [vmem:[#allocation3 + $0x368] sm:$0xff]
      %v2364 = vld [vmem:[#allocation3 + $0x370] sm:$0xff]
      %v2365 = vld [vmem:[#allocation3 + $0x378] sm:$0xff]
      %v2366 = vld [vmem:[#allocation3 + $0x380] sm:$0xff]
      %v2367 = vld [vmem:[#allocation3 + $0x388] sm:$0xff]
      %v2368 = vld [vmem:[#allocation3 + $0x390] sm:$0xff]
      %v2369 = vld [vmem:[#allocation3 + $0x398] sm:$0xff]
      %v2370 = vld [vmem:[#allocation3 + $0x3a0] sm:$0xff]
      %v2371 = vld [vmem:[#allocation3 + $0x3a8] sm:$0xff]
      %v2372 = vld [vmem:[#allocation3 + $0x3b0] sm:$0xff]
      %v2373 = vld [vmem:[#allocation3 + $0x3b8] sm:$0xff]
      %v2374 = vld [vmem:[#allocation3 + $0x3c0] sm:$0xff]
      %v2375 = vld [vmem:[#allocation3 + $0x3c8] sm:$0xff]
      %v2376 = vld [vmem:[#allocation3 + $0x3d0] sm:$0xff]
      %v2377 = vld [vmem:[#allocation3 + $0x3d8] sm:$0xff]
      %v2378 = vld [vmem:[#allocation3 + $0x3e0] sm:$0xff]
      %v2379 = vld [vmem:[#allocation3 + $0x3e8] sm:$0xff]
      %vm2380 = vcmask 130048
      %v2382 = vsel %vm2380, %v2231, 0
      %v2385 = vsel %vm2380, %v2233, 0
      %v2388 = vsel %vm2380, %v2235, 0
      %v2391 = vsel %vm2380, %v2237, 0
      %v2394 = vsel %vm2380, %v2239, 0
      %v2397 = vsel %vm2380, %v2241, 0
      %v2400 = vsel %vm2380, %v2243, 0
      %v2403 = vsel %vm2380, %v2245, 0
      %v2406 = vsel %vm2380, %v2247, 0
      %v2409 = vsel %vm2380, %v2249, 0
      %v2412 = vsel %vm2380, %v2251, 0
      %v2415 = vsel %vm2380, %v2253, 0
      %2417 = vmatpush.msra.mxu0 %v2359
      %2418 = vmatpush.msra.mxu0 %v2352
      %2419 = vmatpush.msra.mxu0 %v2345
      %2420 = vmatpush.msra.mxu0 %v2338
      %2421 = vmatpush.msra.mxu0 %v2331
      %2422 = vmatpush.msra.mxu0 %v2324
      %2423 = vmatpush.msra.mxu0 %v2317
      %2424 = vmatpush.msra.mxu0 %v2310
      %2425 = vmatpush.msra.mxu0 %v2303
      %2426 = vmatpush.msra.mxu0 %v2296
      %2427 = vmatpush.msra.mxu0 %v2289
      %2428 = vmatpush.msra.mxu0 %v2282
      %2429 = vmatpush.msra.mxu0 %v2275
      %2430 = vmatpush.msra.mxu0 %v2268
      %2431 = vmatpush.msra.mxu0 %v2261
      %2432 = vmatpush.msra.mxu0 %v2254
      %2433 = vmatmul.f32.gmra.mxu0 %v2230
      %v2434 = vpop.f32.mrf.mxu0
      %v2435 = vadd.f32 0.0, %v2434
      %2436 = vmatmul.f32.gmra.mxu0 %v2232
      %v2437 = vpop.f32.mrf.mxu0
      %v2438 = vadd.f32 0.0, %v2437
      %2439 = vmatmul.f32.gmra.mxu0 %v2234
      %v2440 = vpop.f32.mrf.mxu0
      %v2441 = vadd.f32 0.0, %v2440
      %2442 = vmatmul.f32.gmra.mxu0 %v2236
      %v2443 = vpop.f32.mrf.mxu0
      %v2444 = vadd.f32 0.0, %v2443
      %2445 = vmatmul.f32.gmra.mxu0 %v2238
      %v2446 = vpop.f32.mrf.mxu0
      %v2447 = vadd.f32 0.0, %v2446
      %2448 = vmatmul.f32.gmra.mxu0 %v2240
      %v2449 = vpop.f32.mrf.mxu0
      %v2450 = vadd.f32 0.0, %v2449
      %2451 = vmatmul.f32.gmra.mxu0 %v2242
      %v2452 = vpop.f32.mrf.mxu0
      %v2453 = vadd.f32 0.0, %v2452
      %2454 = vmatmul.f32.gmra.mxu0 %v2244
      %v2455 = vpop.f32.mrf.mxu0
      %v2456 = vadd.f32 0.0, %v2455
      %2457 = vmatmul.f32.gmra.mxu0 %v2246
      %v2458 = vpop.f32.mrf.mxu0
      %v2459 = vadd.f32 0.0, %v2458
      %2460 = vmatmul.f32.gmra.mxu0 %v2248
      %v2461 = vpop.f32.mrf.mxu0
      %v2462 = vadd.f32 0.0, %v2461
      %2463 = vmatmul.f32.gmra.mxu0 %v2250
      %v2464 = vpop.f32.mrf.mxu0
      %v2465 = vadd.f32 0.0, %v2464
      %2466 = vmatmul.f32.gmra.mxu0 %v2252
      %v2467 = vpop.f32.mrf.mxu0
      %v2468 = vadd.f32 0.0, %v2467
      %2469 = vdwg.mxu0
      %2470 = vmatpush.msra.mxu0 0.0
      %2471 = vmatpush.msra.mxu0 0.0
      %2472 = vmatpush.msra.mxu0 0.0
      %2473 = vmatpush.msra.mxu0 0.0
      %2474 = vmatpush.msra.mxu0 0.0
      %2475 = vmatpush.msra.mxu0 0.0
      %2476 = vmatpush.msra.mxu0 0.0
      %2477 = vmatpush.msra.mxu0 0.0
      %2478 = vmatpush.msra.mxu0 0.0
      %2479 = vmatpush.msra.mxu0 0.0
      %2480 = vmatpush.msra.mxu0 0.0
      %2481 = vmatpush.msra.mxu0 0.0
      %2482 = vmatpush.msra.mxu0 0.0
      %2483 = vmatpush.msra.mxu0 0.0
      %2484 = vmatpush.msra.mxu0 %v2373
      %2485 = vmatpush.msra.mxu0 %v2366
      %2486 = vmatmul.f32.gmra.mxu0 %v2382
      %v2487 = vpop.f32.mrf.mxu0
      %v2488 = vadd.f32 %v2435, %v2487
      %2489 = vmatmul.f32.gmra.mxu0 %v2385
      %v2490 = vpop.f32.mrf.mxu0
      %v2491 = vadd.f32 %v2438, %v2490
      %2492 = vmatmul.f32.gmra.mxu0 %v2388
      %v2493 = vpop.f32.mrf.mxu0
      %v2494 = vadd.f32 %v2441, %v2493
      %2495 = vmatmul.f32.gmra.mxu0 %v2391
      %v2496 = vpop.f32.mrf.mxu0
      %v2497 = vadd.f32 %v2444, %v2496
      %2498 = vmatmul.f32.gmra.mxu0 %v2394
      %v2499 = vpop.f32.mrf.mxu0
      %v2500 = vadd.f32 %v2447, %v2499
      %2501 = vmatmul.f32.gmra.mxu0 %v2397
      %v2502 = vpop.f32.mrf.mxu0
      %v2503 = vadd.f32 %v2450, %v2502
      %2504 = vmatmul.f32.gmra.mxu0 %v2400
      %v2505 = vpop.f32.mrf.mxu0
      %v2506 = vadd.f32 %v2453, %v2505
      %2507 = vmatmul.f32.gmra.mxu0 %v2403
      %v2508 = vpop.f32.mrf.mxu0
      %v2509 = vadd.f32 %v2456, %v2508
      %2510 = vmatmul.f32.gmra.mxu0 %v2406
      %v2511 = vpop.f32.mrf.mxu0
      %v2512 = vadd.f32 %v2459, %v2511
      %2513 = vmatmul.f32.gmra.mxu0 %v2409
      %v2514 = vpop.f32.mrf.mxu0
      %v2515 = vadd.f32 %v2462, %v2514
      %2516 = vmatmul.f32.gmra.mxu0 %v2412
      %v2517 = vpop.f32.mrf.mxu0
      %v2518 = vadd.f32 %v2465, %v2517
      %2519 = vmatmul.f32.gmra.mxu0 %v2415
      %v2520 = vpop.f32.mrf.mxu0
      %v2521 = vadd.f32 %v2468, %v2520
      %2522 = vdwg.mxu0
      %2523 = vmatpush.msra.mxu0 %v2360
      %2524 = vmatpush.msra.mxu0 %v2353
      %2525 = vmatpush.msra.mxu0 %v2346
      %2526 = vmatpush.msra.mxu0 %v2339
      %2527 = vmatpush.msra.mxu0 %v2332
      %2528 = vmatpush.msra.mxu0 %v2325
      %2529 = vmatpush.msra.mxu0 %v2318
      %2530 = vmatpush.msra.mxu0 %v2311
      %2531 = vmatpush.msra.mxu0 %v2304
      %2532 = vmatpush.msra.mxu0 %v2297
      %2533 = vmatpush.msra.mxu0 %v2290
      %2534 = vmatpush.msra.mxu0 %v2283
      %2535 = vmatpush.msra.mxu0 %v2276
      %2536 = vmatpush.msra.mxu0 %v2269
      %2537 = vmatpush.msra.mxu0 %v2262
      %2538 = vmatpush.msra.mxu0 %v2255
      %2539 = vmatmul.f32.gmra.mxu0 %v2230
      %v2540 = vpop.f32.mrf.mxu0
      %v2541 = vadd.f32 0.0, %v2540
      %2542 = vmatmul.f32.gmra.mxu0 %v2232
      %v2543 = vpop.f32.mrf.mxu0
      %v2544 = vadd.f32 0.0, %v2543
      %2545 = vmatmul.f32.gmra.mxu0 %v2234
      %v2546 = vpop.f32.mrf.mxu0
      %v2547 = vadd.f32 0.0, %v2546
      %2548 = vmatmul.f32.gmra.mxu0 %v2236
      %v2549 = vpop.f32.mrf.mxu0
      %v2550 = vadd.f32 0.0, %v2549
      %2551 = vmatmul.f32.gmra.mxu0 %v2238
      %v2552 = vpop.f32.mrf.mxu0
      %v2553 = vadd.f32 0.0, %v2552
      %2554 = vmatmul.f32.gmra.mxu0 %v2240
      %v2555 = vpop.f32.mrf.mxu0
      %v2556 = vadd.f32 0.0, %v2555
      %2557 = vmatmul.f32.gmra.mxu0 %v2242
      %v2558 = vpop.f32.mrf.mxu0
      %v2559 = vadd.f32 0.0, %v2558
      %2560 = vmatmul.f32.gmra.mxu0 %v2244
      %v2561 = vpop.f32.mrf.mxu0
      %v2562 = vadd.f32 0.0, %v2561
      %2563 = vmatmul.f32.gmra.mxu0 %v2246
      %v2564 = vpop.f32.mrf.mxu0
      %v2565 = vadd.f32 0.0, %v2564
      %2566 = vmatmul.f32.gmra.mxu0 %v2248
      %v2567 = vpop.f32.mrf.mxu0
      %v2568 = vadd.f32 0.0, %v2567
      %2569 = vmatmul.f32.gmra.mxu0 %v2250
      %v2570 = vpop.f32.mrf.mxu0
      %v2571 = vadd.f32 0.0, %v2570
      %2572 = vmatmul.f32.gmra.mxu0 %v2252
      %v2573 = vpop.f32.mrf.mxu0
      %v2574 = vadd.f32 0.0, %v2573
      %2575 = vdwg.mxu0
      %2576 = vmatpush.msra.mxu0 0.0
      %2577 = vmatpush.msra.mxu0 0.0
      %2578 = vmatpush.msra.mxu0 0.0
      %2579 = vmatpush.msra.mxu0 0.0
      %2580 = vmatpush.msra.mxu0 0.0
      %2581 = vmatpush.msra.mxu0 0.0
      %2582 = vmatpush.msra.mxu0 0.0
      %2583 = vmatpush.msra.mxu0 0.0
      %2584 = vmatpush.msra.mxu0 0.0
      %2585 = vmatpush.msra.mxu0 0.0
      %2586 = vmatpush.msra.mxu0 0.0
      %2587 = vmatpush.msra.mxu0 0.0
      %2588 = vmatpush.msra.mxu0 0.0
      %2589 = vmatpush.msra.mxu0 0.0
      %2590 = vmatpush.msra.mxu0 %v2374
      %2591 = vmatpush.msra.mxu0 %v2367
      %2592 = vmatmul.f32.gmra.mxu0 %v2382
      %v2593 = vpop.f32.mrf.mxu0
      %v2594 = vadd.f32 %v2541, %v2593
      %2595 = vmatmul.f32.gmra.mxu0 %v2385
      %v2596 = vpop.f32.mrf.mxu0
      %v2597 = vadd.f32 %v2544, %v2596
      %2598 = vmatmul.f32.gmra.mxu0 %v2388
      %v2599 = vpop.f32.mrf.mxu0
      %v2600 = vadd.f32 %v2547, %v2599
      %2601 = vmatmul.f32.gmra.mxu0 %v2391
      %v2602 = vpop.f32.mrf.mxu0
      %v2603 = vadd.f32 %v2550, %v2602
      %2604 = vmatmul.f32.gmra.mxu0 %v2394
      %v2605 = vpop.f32.mrf.mxu0
      %v2606 = vadd.f32 %v2553, %v2605
      %2607 = vmatmul.f32.gmra.mxu0 %v2397
      %v2608 = vpop.f32.mrf.mxu0
      %v2609 = vadd.f32 %v2556, %v2608
      %2610 = vmatmul.f32.gmra.mxu0 %v2400
      %v2611 = vpop.f32.mrf.mxu0
      %v2612 = vadd.f32 %v2559, %v2611
      %2613 = vmatmul.f32.gmra.mxu0 %v2403
      %v2614 = vpop.f32.mrf.mxu0
      %v2615 = vadd.f32 %v2562, %v2614
      %2616 = vmatmul.f32.gmra.mxu0 %v2406
      %v2617 = vpop.f32.mrf.mxu0
      %v2618 = vadd.f32 %v2565, %v2617
      %2619 = vmatmul.f32.gmra.mxu0 %v2409
      %v2620 = vpop.f32.mrf.mxu0
      %v2621 = vadd.f32 %v2568, %v2620
      %2622 = vmatmul.f32.gmra.mxu0 %v2412
      %v2623 = vpop.f32.mrf.mxu0
      %v2624 = vadd.f32 %v2571, %v2623
      %2625 = vmatmul.f32.gmra.mxu0 %v2415
      %v2626 = vpop.f32.mrf.mxu0
      %v2627 = vadd.f32 %v2574, %v2626
      %2628 = vdwg.mxu0
      %2629 = vmatpush.msra.mxu0 %v2361
      %2630 = vmatpush.msra.mxu0 %v2354
      %2631 = vmatpush.msra.mxu0 %v2347
      %2632 = vmatpush.msra.mxu0 %v2340
      %2633 = vmatpush.msra.mxu0 %v2333
      %2634 = vmatpush.msra.mxu0 %v2326
      %2635 = vmatpush.msra.mxu0 %v2319
      %2636 = vmatpush.msra.mxu0 %v2312
      %2637 = vmatpush.msra.mxu0 %v2305
      %2638 = vmatpush.msra.mxu0 %v2298
      %2639 = vmatpush.msra.mxu0 %v2291
      %2640 = vmatpush.msra.mxu0 %v2284
      %2641 = vmatpush.msra.mxu0 %v2277
      %2642 = vmatpush.msra.mxu0 %v2270
      %2643 = vmatpush.msra.mxu0 %v2263
      %2644 = vmatpush.msra.mxu0 %v2256
      %2645 = vmatmul.f32.gmra.mxu0 %v2230
      %v2646 = vpop.f32.mrf.mxu0
      %v2647 = vadd.f32 0.0, %v2646
      %2648 = vmatmul.f32.gmra.mxu0 %v2232
      %v2649 = vpop.f32.mrf.mxu0
      %v2650 = vadd.f32 0.0, %v2649
      %2651 = vmatmul.f32.gmra.mxu0 %v2234
      %v2652 = vpop.f32.mrf.mxu0
      %v2653 = vadd.f32 0.0, %v2652
      %2654 = vmatmul.f32.gmra.mxu0 %v2236
      %v2655 = vpop.f32.mrf.mxu0
      %v2656 = vadd.f32 0.0, %v2655
      %2657 = vmatmul.f32.gmra.mxu0 %v2238
      %v2658 = vpop.f32.mrf.mxu0
      %v2659 = vadd.f32 0.0, %v2658
      %2660 = vmatmul.f32.gmra.mxu0 %v2240
      %v2661 = vpop.f32.mrf.mxu0
      %v2662 = vadd.f32 0.0, %v2661
      %2663 = vmatmul.f32.gmra.mxu0 %v2242
      %v2664 = vpop.f32.mrf.mxu0
      %v2665 = vadd.f32 0.0, %v2664
      %2666 = vmatmul.f32.gmra.mxu0 %v2244
      %v2667 = vpop.f32.mrf.mxu0
      %v2668 = vadd.f32 0.0, %v2667
      %2669 = vmatmul.f32.gmra.mxu0 %v2246
      %v2670 = vpop.f32.mrf.mxu0
      %v2671 = vadd.f32 0.0, %v2670
      %2672 = vmatmul.f32.gmra.mxu0 %v2248
      %v2673 = vpop.f32.mrf.mxu0
      %v2674 = vadd.f32 0.0, %v2673
      %2675 = vmatmul.f32.gmra.mxu0 %v2250
      %v2676 = vpop.f32.mrf.mxu0
      %v2677 = vadd.f32 0.0, %v2676
      %2678 = vmatmul.f32.gmra.mxu0 %v2252
      %v2679 = vpop.f32.mrf.mxu0
      %v2680 = vadd.f32 0.0, %v2679
      %2681 = vdwg.mxu0
      %2682 = vmatpush.msra.mxu0 0.0
      %2683 = vmatpush.msra.mxu0 0.0
      %2684 = vmatpush.msra.mxu0 0.0
      %2685 = vmatpush.msra.mxu0 0.0
      %2686 = vmatpush.msra.mxu0 0.0
      %2687 = vmatpush.msra.mxu0 0.0
      %2688 = vmatpush.msra.mxu0 0.0
      %2689 = vmatpush.msra.mxu0 0.0
      %2690 = vmatpush.msra.mxu0 0.0
      %2691 = vmatpush.msra.mxu0 0.0
      %2692 = vmatpush.msra.mxu0 0.0
      %2693 = vmatpush.msra.mxu0 0.0
      %2694 = vmatpush.msra.mxu0 0.0
      %2695 = vmatpush.msra.mxu0 0.0
      %2696 = vmatpush.msra.mxu0 %v2375
      %2697 = vmatpush.msra.mxu0 %v2368
      %2698 = vmatmul.f32.gmra.mxu0 %v2382
      %v2699 = vpop.f32.mrf.mxu0
      %v2700 = vadd.f32 %v2647, %v2699
      %2701 = vmatmul.f32.gmra.mxu0 %v2385
      %v2702 = vpop.f32.mrf.mxu0
      %v2703 = vadd.f32 %v2650, %v2702
      %2704 = vmatmul.f32.gmra.mxu0 %v2388
      %v2705 = vpop.f32.mrf.mxu0
      %v2706 = vadd.f32 %v2653, %v2705
      %2707 = vmatmul.f32.gmra.mxu0 %v2391
      %v2708 = vpop.f32.mrf.mxu0
      %v2709 = vadd.f32 %v2656, %v2708
      %2710 = vmatmul.f32.gmra.mxu0 %v2394
      %v2711 = vpop.f32.mrf.mxu0
      %v2712 = vadd.f32 %v2659, %v2711
      %2713 = vmatmul.f32.gmra.mxu0 %v2397
      %v2714 = vpop.f32.mrf.mxu0
      %v2715 = vadd.f32 %v2662, %v2714
      %2716 = vmatmul.f32.gmra.mxu0 %v2400
      %v2717 = vpop.f32.mrf.mxu0
      %v2718 = vadd.f32 %v2665, %v2717
      %2719 = vmatmul.f32.gmra.mxu0 %v2403
      %v2720 = vpop.f32.mrf.mxu0
      %v2721 = vadd.f32 %v2668, %v2720
      %2722 = vmatmul.f32.gmra.mxu0 %v2406
      %v2723 = vpop.f32.mrf.mxu0
      %v2724 = vadd.f32 %v2671, %v2723
      %2725 = vmatmul.f32.gmra.mxu0 %v2409
      %v2726 = vpop.f32.mrf.mxu0
      %v2727 = vadd.f32 %v2674, %v2726
      %2728 = vmatmul.f32.gmra.mxu0 %v2412
      %v2729 = vpop.f32.mrf.mxu0
      %v2730 = vadd.f32 %v2677, %v2729
      %2731 = vmatmul.f32.gmra.mxu0 %v2415
      %v2732 = vpop.f32.mrf.mxu0
      %v2733 = vadd.f32 %v2680, %v2732
      %2734 = vdwg.mxu0
      %2735 = vmatpush.msra.mxu0 %v2362
      %2736 = vmatpush.msra.mxu0 %v2355
      %2737 = vmatpush.msra.mxu0 %v2348
      %2738 = vmatpush.msra.mxu0 %v2341
      %2739 = vmatpush.msra.mxu0 %v2334
      %2740 = vmatpush.msra.mxu0 %v2327
      %2741 = vmatpush.msra.mxu0 %v2320
      %2742 = vmatpush.msra.mxu0 %v2313
      %2743 = vmatpush.msra.mxu0 %v2306
      %2744 = vmatpush.msra.mxu0 %v2299
      %2745 = vmatpush.msra.mxu0 %v2292
      %2746 = vmatpush.msra.mxu0 %v2285
      %2747 = vmatpush.msra.mxu0 %v2278
      %2748 = vmatpush.msra.mxu0 %v2271
      %2749 = vmatpush.msra.mxu0 %v2264
      %2750 = vmatpush.msra.mxu0 %v2257
      %2751 = vmatmul.f32.gmra.mxu0 %v2230
      %v2752 = vpop.f32.mrf.mxu0
      %v2753 = vadd.f32 0.0, %v2752
      %2754 = vmatmul.f32.gmra.mxu0 %v2232
      %v2755 = vpop.f32.mrf.mxu0
      %v2756 = vadd.f32 0.0, %v2755
      %2757 = vmatmul.f32.gmra.mxu0 %v2234
      %v2758 = vpop.f32.mrf.mxu0
      %v2759 = vadd.f32 0.0, %v2758
      %2760 = vmatmul.f32.gmra.mxu0 %v2236
      %v2761 = vpop.f32.mrf.mxu0
      %v2762 = vadd.f32 0.0, %v2761
      %2763 = vmatmul.f32.gmra.mxu0 %v2238
      %v2764 = vpop.f32.mrf.mxu0
      %v2765 = vadd.f32 0.0, %v2764
      %2766 = vmatmul.f32.gmra.mxu0 %v2240
      %v2767 = vpop.f32.mrf.mxu0
      %v2768 = vadd.f32 0.0, %v2767
      %2769 = vmatmul.f32.gmra.mxu0 %v2242
      %v2770 = vpop.f32.mrf.mxu0
      %v2771 = vadd.f32 0.0, %v2770
      %2772 = vmatmul.f32.gmra.mxu0 %v2244
      %v2773 = vpop.f32.mrf.mxu0
      %v2774 = vadd.f32 0.0, %v2773
      %2775 = vmatmul.f32.gmra.mxu0 %v2246
      %v2776 = vpop.f32.mrf.mxu0
      %v2777 = vadd.f32 0.0, %v2776
      %2778 = vmatmul.f32.gmra.mxu0 %v2248
      %v2779 = vpop.f32.mrf.mxu0
      %v2780 = vadd.f32 0.0, %v2779
      %2781 = vmatmul.f32.gmra.mxu0 %v2250
      %v2782 = vpop.f32.mrf.mxu0
      %v2783 = vadd.f32 0.0, %v2782
      %2784 = vmatmul.f32.gmra.mxu0 %v2252
      %v2785 = vpop.f32.mrf.mxu0
      %v2786 = vadd.f32 0.0, %v2785
      %2787 = vdwg.mxu0
      %2788 = vmatpush.msra.mxu0 0.0
      %2789 = vmatpush.msra.mxu0 0.0
      %2790 = vmatpush.msra.mxu0 0.0
      %2791 = vmatpush.msra.mxu0 0.0
      %2792 = vmatpush.msra.mxu0 0.0
      %2793 = vmatpush.msra.mxu0 0.0
      %2794 = vmatpush.msra.mxu0 0.0
      %2795 = vmatpush.msra.mxu0 0.0
      %2796 = vmatpush.msra.mxu0 0.0
      %2797 = vmatpush.msra.mxu0 0.0
      %2798 = vmatpush.msra.mxu0 0.0
      %2799 = vmatpush.msra.mxu0 0.0
      %2800 = vmatpush.msra.mxu0 0.0
      %2801 = vmatpush.msra.mxu0 0.0
      %2802 = vmatpush.msra.mxu0 %v2376
      %2803 = vmatpush.msra.mxu0 %v2369
      %2804 = vmatmul.f32.gmra.mxu0 %v2382
      %v2805 = vpop.f32.mrf.mxu0
      %v2806 = vadd.f32 %v2753, %v2805
      %2807 = vmatmul.f32.gmra.mxu0 %v2385
      %v2808 = vpop.f32.mrf.mxu0
      %v2809 = vadd.f32 %v2756, %v2808
      %2810 = vmatmul.f32.gmra.mxu0 %v2388
      %v2811 = vpop.f32.mrf.mxu0
      %v2812 = vadd.f32 %v2759, %v2811
      %2813 = vmatmul.f32.gmra.mxu0 %v2391
      %v2814 = vpop.f32.mrf.mxu0
      %v2815 = vadd.f32 %v2762, %v2814
      %2816 = vmatmul.f32.gmra.mxu0 %v2394
      %v2817 = vpop.f32.mrf.mxu0
      %v2818 = vadd.f32 %v2765, %v2817
      %2819 = vmatmul.f32.gmra.mxu0 %v2397
      %v2820 = vpop.f32.mrf.mxu0
      %v2821 = vadd.f32 %v2768, %v2820
      %2822 = vmatmul.f32.gmra.mxu0 %v2400
      %v2823 = vpop.f32.mrf.mxu0
      %v2824 = vadd.f32 %v2771, %v2823
      %2825 = vmatmul.f32.gmra.mxu0 %v2403
      %v2826 = vpop.f32.mrf.mxu0
      %v2827 = vadd.f32 %v2774, %v2826
      %2828 = vmatmul.f32.gmra.mxu0 %v2406
      %v2829 = vpop.f32.mrf.mxu0
      %v2830 = vadd.f32 %v2777, %v2829
      %2831 = vmatmul.f32.gmra.mxu0 %v2409
      %v2832 = vpop.f32.mrf.mxu0
      %v2833 = vadd.f32 %v2780, %v2832
      %2834 = vmatmul.f32.gmra.mxu0 %v2412
      %v2835 = vpop.f32.mrf.mxu0
      %v2836 = vadd.f32 %v2783, %v2835
      %2837 = vmatmul.f32.gmra.mxu0 %v2415
      %v2838 = vpop.f32.mrf.mxu0
      %v2839 = vadd.f32 %v2786, %v2838
      %2840 = vdwg.mxu0
      %2841 = vmatpush.msra.mxu0 %v2363
      %2842 = vmatpush.msra.mxu0 %v2356
      %2843 = vmatpush.msra.mxu0 %v2349
      %2844 = vmatpush.msra.mxu0 %v2342
      %2845 = vmatpush.msra.mxu0 %v2335
      %2846 = vmatpush.msra.mxu0 %v2328
      %2847 = vmatpush.msra.mxu0 %v2321
      %2848 = vmatpush.msra.mxu0 %v2314
      %2849 = vmatpush.msra.mxu0 %v2307
      %2850 = vmatpush.msra.mxu0 %v2300
      %2851 = vmatpush.msra.mxu0 %v2293
      %2852 = vmatpush.msra.mxu0 %v2286
      %2853 = vmatpush.msra.mxu0 %v2279
      %2854 = vmatpush.msra.mxu0 %v2272
      %2855 = vmatpush.msra.mxu0 %v2265
      %2856 = vmatpush.msra.mxu0 %v2258
      %2857 = vmatmul.f32.gmra.mxu0 %v2230
      %v2858 = vpop.f32.mrf.mxu0
      %v2859 = vadd.f32 0.0, %v2858
      %2860 = vmatmul.f32.gmra.mxu0 %v2232
      %v2861 = vpop.f32.mrf.mxu0
      %v2862 = vadd.f32 0.0, %v2861
      %2863 = vmatmul.f32.gmra.mxu0 %v2234
      %v2864 = vpop.f32.mrf.mxu0
      %v2865 = vadd.f32 0.0, %v2864
      %2866 = vmatmul.f32.gmra.mxu0 %v2236
      %v2867 = vpop.f32.mrf.mxu0
      %v2868 = vadd.f32 0.0, %v2867
      %2869 = vmatmul.f32.gmra.mxu0 %v2238
      %v2870 = vpop.f32.mrf.mxu0
      %v2871 = vadd.f32 0.0, %v2870
      %2872 = vmatmul.f32.gmra.mxu0 %v2240
      %v2873 = vpop.f32.mrf.mxu0
      %v2874 = vadd.f32 0.0, %v2873
      %2875 = vmatmul.f32.gmra.mxu0 %v2242
      %v2876 = vpop.f32.mrf.mxu0
      %v2877 = vadd.f32 0.0, %v2876
      %2878 = vmatmul.f32.gmra.mxu0 %v2244
      %v2879 = vpop.f32.mrf.mxu0
      %v2880 = vadd.f32 0.0, %v2879
      %2881 = vmatmul.f32.gmra.mxu0 %v2246
      %v2882 = vpop.f32.mrf.mxu0
      %v2883 = vadd.f32 0.0, %v2882
      %2884 = vmatmul.f32.gmra.mxu0 %v2248
      %v2885 = vpop.f32.mrf.mxu0
      %v2886 = vadd.f32 0.0, %v2885
      %2887 = vmatmul.f32.gmra.mxu0 %v2250
      %v2888 = vpop.f32.mrf.mxu0
      %v2889 = vadd.f32 0.0, %v2888
      %2890 = vmatmul.f32.gmra.mxu0 %v2252
      %v2891 = vpop.f32.mrf.mxu0
      %v2892 = vadd.f32 0.0, %v2891
      %2893 = vdwg.mxu0
      %2894 = vmatpush.msra.mxu0 0.0
      %2895 = vmatpush.msra.mxu0 0.0
      %2896 = vmatpush.msra.mxu0 0.0
      %2897 = vmatpush.msra.mxu0 0.0
      %2898 = vmatpush.msra.mxu0 0.0
      %2899 = vmatpush.msra.mxu0 0.0
      %2900 = vmatpush.msra.mxu0 0.0
      %2901 = vmatpush.msra.mxu0 0.0
      %2902 = vmatpush.msra.mxu0 0.0
      %2903 = vmatpush.msra.mxu0 0.0
      %2904 = vmatpush.msra.mxu0 0.0
      %2905 = vmatpush.msra.mxu0 0.0
      %2906 = vmatpush.msra.mxu0 0.0
      %2907 = vmatpush.msra.mxu0 0.0
      %2908 = vmatpush.msra.mxu0 %v2377
      %2909 = vmatpush.msra.mxu0 %v2370
      %2910 = vmatmul.f32.gmra.mxu0 %v2382
      %v2911 = vpop.f32.mrf.mxu0
      %v2912 = vadd.f32 %v2859, %v2911
      %2913 = vmatmul.f32.gmra.mxu0 %v2385
      %v2914 = vpop.f32.mrf.mxu0
      %v2915 = vadd.f32 %v2862, %v2914
      %2916 = vmatmul.f32.gmra.mxu0 %v2388
      %v2917 = vpop.f32.mrf.mxu0
      %v2918 = vadd.f32 %v2865, %v2917
      %2919 = vmatmul.f32.gmra.mxu0 %v2391
      %v2920 = vpop.f32.mrf.mxu0
      %v2921 = vadd.f32 %v2868, %v2920
      %2922 = vmatmul.f32.gmra.mxu0 %v2394
      %v2923 = vpop.f32.mrf.mxu0
      %v2924 = vadd.f32 %v2871, %v2923
      %2925 = vmatmul.f32.gmra.mxu0 %v2397
      %v2926 = vpop.f32.mrf.mxu0
      %v2927 = vadd.f32 %v2874, %v2926
      %2928 = vmatmul.f32.gmra.mxu0 %v2400
      %v2929 = vpop.f32.mrf.mxu0
      %v2930 = vadd.f32 %v2877, %v2929
      %2931 = vmatmul.f32.gmra.mxu0 %v2403
      %v2932 = vpop.f32.mrf.mxu0
      %v2933 = vadd.f32 %v2880, %v2932
      %2934 = vmatmul.f32.gmra.mxu0 %v2406
      %v2935 = vpop.f32.mrf.mxu0
      %v2936 = vadd.f32 %v2883, %v2935
      %2937 = vmatmul.f32.gmra.mxu0 %v2409
      %v2938 = vpop.f32.mrf.mxu0
      %v2939 = vadd.f32 %v2886, %v2938
      %2940 = vmatmul.f32.gmra.mxu0 %v2412
      %v2941 = vpop.f32.mrf.mxu0
      %v2942 = vadd.f32 %v2889, %v2941
      %2943 = vmatmul.f32.gmra.mxu0 %v2415
      %v2944 = vpop.f32.mrf.mxu0
      %v2945 = vadd.f32 %v2892, %v2944
      %2946 = vdwg.mxu0
      %2947 = vmatpush.msra.mxu0 %v2364
      %2948 = vmatpush.msra.mxu0 %v2357
      %2949 = vmatpush.msra.mxu0 %v2350
      %2950 = vmatpush.msra.mxu0 %v2343
      %2951 = vmatpush.msra.mxu0 %v2336
      %2952 = vmatpush.msra.mxu0 %v2329
      %2953 = vmatpush.msra.mxu0 %v2322
      %2954 = vmatpush.msra.mxu0 %v2315
      %2955 = vmatpush.msra.mxu0 %v2308
      %2956 = vmatpush.msra.mxu0 %v2301
      %2957 = vmatpush.msra.mxu0 %v2294
      %2958 = vmatpush.msra.mxu0 %v2287
      %2959 = vmatpush.msra.mxu0 %v2280
      %2960 = vmatpush.msra.mxu0 %v2273
      %2961 = vmatpush.msra.mxu0 %v2266
      %2962 = vmatpush.msra.mxu0 %v2259
      %2963 = vmatmul.f32.gmra.mxu0 %v2230
      %v2964 = vpop.f32.mrf.mxu0
      %v2965 = vadd.f32 0.0, %v2964
      %2966 = vmatmul.f32.gmra.mxu0 %v2232
      %v2967 = vpop.f32.mrf.mxu0
      %v2968 = vadd.f32 0.0, %v2967
      %2969 = vmatmul.f32.gmra.mxu0 %v2234
      %v2970 = vpop.f32.mrf.mxu0
      %v2971 = vadd.f32 0.0, %v2970
      %2972 = vmatmul.f32.gmra.mxu0 %v2236
      %v2973 = vpop.f32.mrf.mxu0
      %v2974 = vadd.f32 0.0, %v2973
      %2975 = vmatmul.f32.gmra.mxu0 %v2238
      %v2976 = vpop.f32.mrf.mxu0
      %v2977 = vadd.f32 0.0, %v2976
      %2978 = vmatmul.f32.gmra.mxu0 %v2240
      %v2979 = vpop.f32.mrf.mxu0
      %v2980 = vadd.f32 0.0, %v2979
      %2981 = vmatmul.f32.gmra.mxu0 %v2242
      %v2982 = vpop.f32.mrf.mxu0
      %v2983 = vadd.f32 0.0, %v2982
      %2984 = vmatmul.f32.gmra.mxu0 %v2244
      %v2985 = vpop.f32.mrf.mxu0
      %v2986 = vadd.f32 0.0, %v2985
      %2987 = vmatmul.f32.gmra.mxu0 %v2246
      %v2988 = vpop.f32.mrf.mxu0
      %v2989 = vadd.f32 0.0, %v2988
      %2990 = vmatmul.f32.gmra.mxu0 %v2248
      %v2991 = vpop.f32.mrf.mxu0
      %v2992 = vadd.f32 0.0, %v2991
      %2993 = vmatmul.f32.gmra.mxu0 %v2250
      %v2994 = vpop.f32.mrf.mxu0
      %v2995 = vadd.f32 0.0, %v2994
      %2996 = vmatmul.f32.gmra.mxu0 %v2252
      %v2997 = vpop.f32.mrf.mxu0
      %v2998 = vadd.f32 0.0, %v2997
      %2999 = vdwg.mxu0
      %3000 = vmatpush.msra.mxu0 0.0
      %3001 = vmatpush.msra.mxu0 0.0
      %3002 = vmatpush.msra.mxu0 0.0
      %3003 = vmatpush.msra.mxu0 0.0
      %3004 = vmatpush.msra.mxu0 0.0
      %3005 = vmatpush.msra.mxu0 0.0
      %3006 = vmatpush.msra.mxu0 0.0
      %3007 = vmatpush.msra.mxu0 0.0
      %3008 = vmatpush.msra.mxu0 0.0
      %3009 = vmatpush.msra.mxu0 0.0
      %3010 = vmatpush.msra.mxu0 0.0
      %3011 = vmatpush.msra.mxu0 0.0
      %3012 = vmatpush.msra.mxu0 0.0
      %3013 = vmatpush.msra.mxu0 0.0
      %3014 = vmatpush.msra.mxu0 %v2378
      %3015 = vmatpush.msra.mxu0 %v2371
      %3016 = vmatmul.f32.gmra.mxu0 %v2382
      %v3017 = vpop.f32.mrf.mxu0
      %v3018 = vadd.f32 %v2965, %v3017
      %3019 = vmatmul.f32.gmra.mxu0 %v2385
      %v3020 = vpop.f32.mrf.mxu0
      %v3021 = vadd.f32 %v2968, %v3020
      %3022 = vmatmul.f32.gmra.mxu0 %v2388
      %v3023 = vpop.f32.mrf.mxu0
      %v3024 = vadd.f32 %v2971, %v3023
      %3025 = vmatmul.f32.gmra.mxu0 %v2391
      %v3026 = vpop.f32.mrf.mxu0
      %v3027 = vadd.f32 %v2974, %v3026
      %3028 = vmatmul.f32.gmra.mxu0 %v2394
      %v3029 = vpop.f32.mrf.mxu0
      %v3030 = vadd.f32 %v2977, %v3029
      %3031 = vmatmul.f32.gmra.mxu0 %v2397
      %v3032 = vpop.f32.mrf.mxu0
      %v3033 = vadd.f32 %v2980, %v3032
      %3034 = vmatmul.f32.gmra.mxu0 %v2400
      %v3035 = vpop.f32.mrf.mxu0
      %v3036 = vadd.f32 %v2983, %v3035
      %3037 = vmatmul.f32.gmra.mxu0 %v2403
      %v3038 = vpop.f32.mrf.mxu0
      %v3039 = vadd.f32 %v2986, %v3038
      %3040 = vmatmul.f32.gmra.mxu0 %v2406
      %v3041 = vpop.f32.mrf.mxu0
      %v3042 = vadd.f32 %v2989, %v3041
      %3043 = vmatmul.f32.gmra.mxu0 %v2409
      %v3044 = vpop.f32.mrf.mxu0
      %v3045 = vadd.f32 %v2992, %v3044
      %3046 = vmatmul.f32.gmra.mxu0 %v2412
      %v3047 = vpop.f32.mrf.mxu0
      %v3048 = vadd.f32 %v2995, %v3047
      %3049 = vmatmul.f32.gmra.mxu0 %v2415
      %v3050 = vpop.f32.mrf.mxu0
      %v3051 = vadd.f32 %v2998, %v3050
      %3052 = vdwg.mxu0
      %3053 = vmatpush.msra.mxu0 %v2365
      %3054 = vmatpush.msra.mxu0 %v2358
      %3055 = vmatpush.msra.mxu0 %v2351
      %3056 = vmatpush.msra.mxu0 %v2344
      %3057 = vmatpush.msra.mxu0 %v2337
      %3058 = vmatpush.msra.mxu0 %v2330
      %3059 = vmatpush.msra.mxu0 %v2323
      %3060 = vmatpush.msra.mxu0 %v2316
      %3061 = vmatpush.msra.mxu0 %v2309
      %3062 = vmatpush.msra.mxu0 %v2302
      %3063 = vmatpush.msra.mxu0 %v2295
      %3064 = vmatpush.msra.mxu0 %v2288
      %3065 = vmatpush.msra.mxu0 %v2281
      %3066 = vmatpush.msra.mxu0 %v2274
      %3067 = vmatpush.msra.mxu0 %v2267
      %3068 = vmatpush.msra.mxu0 %v2260
      %3069 = vmatmul.f32.gmra.mxu0 %v2230
      %v3070 = vpop.f32.mrf.mxu0
      %v3071 = vadd.f32 0.0, %v3070
      %3072 = vmatmul.f32.gmra.mxu0 %v2232
      %v3073 = vpop.f32.mrf.mxu0
      %v3074 = vadd.f32 0.0, %v3073
      %3075 = vmatmul.f32.gmra.mxu0 %v2234
      %v3076 = vpop.f32.mrf.mxu0
      %v3077 = vadd.f32 0.0, %v3076
      %3078 = vmatmul.f32.gmra.mxu0 %v2236
      %v3079 = vpop.f32.mrf.mxu0
      %v3080 = vadd.f32 0.0, %v3079
      %3081 = vmatmul.f32.gmra.mxu0 %v2238
      %v3082 = vpop.f32.mrf.mxu0
      %v3083 = vadd.f32 0.0, %v3082
      %3084 = vmatmul.f32.gmra.mxu0 %v2240
      %v3085 = vpop.f32.mrf.mxu0
      %v3086 = vadd.f32 0.0, %v3085
      %3087 = vmatmul.f32.gmra.mxu0 %v2242
      %v3088 = vpop.f32.mrf.mxu0
      %v3089 = vadd.f32 0.0, %v3088
      %3090 = vmatmul.f32.gmra.mxu0 %v2244
      %v3091 = vpop.f32.mrf.mxu0
      %v3092 = vadd.f32 0.0, %v3091
      %3093 = vmatmul.f32.gmra.mxu0 %v2246
      %v3094 = vpop.f32.mrf.mxu0
      %v3095 = vadd.f32 0.0, %v3094
      %3096 = vmatmul.f32.gmra.mxu0 %v2248
      %v3097 = vpop.f32.mrf.mxu0
      %v3098 = vadd.f32 0.0, %v3097
      %3099 = vmatmul.f32.gmra.mxu0 %v2250
      %v3100 = vpop.f32.mrf.mxu0
      %v3101 = vadd.f32 0.0, %v3100
      %3102 = vmatmul.f32.gmra.mxu0 %v2252
      %v3103 = vpop.f32.mrf.mxu0
      %v3104 = vadd.f32 0.0, %v3103
      %3105 = vdwg.mxu0
      %3106 = vmatpush.msra.mxu0 0.0
      %3107 = vmatpush.msra.mxu0 0.0
      %3108 = vmatpush.msra.mxu0 0.0
      %3109 = vmatpush.msra.mxu0 0.0
      %3110 = vmatpush.msra.mxu0 0.0
      %3111 = vmatpush.msra.mxu0 0.0
      %3112 = vmatpush.msra.mxu0 0.0
      %3113 = vmatpush.msra.mxu0 0.0
      %3114 = vmatpush.msra.mxu0 0.0
      %3115 = vmatpush.msra.mxu0 0.0
      %3116 = vmatpush.msra.mxu0 0.0
      %3117 = vmatpush.msra.mxu0 0.0
      %3118 = vmatpush.msra.mxu0 0.0
      %3119 = vmatpush.msra.mxu0 0.0
      %3120 = vmatpush.msra.mxu0 %v2379
      %3121 = vmatpush.msra.mxu0 %v2372
      %3122 = vmatmul.f32.gmra.mxu0 %v2382
      %v3123 = vpop.f32.mrf.mxu0
      %v3124 = vadd.f32 %v3071, %v3123
      %3125 = vmatmul.f32.gmra.mxu0 %v2385
      %v3126 = vpop.f32.mrf.mxu0
      %v3127 = vadd.f32 %v3074, %v3126
      %3128 = vmatmul.f32.gmra.mxu0 %v2388
      %v3129 = vpop.f32.mrf.mxu0
      %v3130 = vadd.f32 %v3077, %v3129
      %3131 = vmatmul.f32.gmra.mxu0 %v2391
      %v3132 = vpop.f32.mrf.mxu0
      %v3133 = vadd.f32 %v3080, %v3132
      %3134 = vmatmul.f32.gmra.mxu0 %v2394
      %v3135 = vpop.f32.mrf.mxu0
      %v3136 = vadd.f32 %v3083, %v3135
      %3137 = vmatmul.f32.gmra.mxu0 %v2397
      %v3138 = vpop.f32.mrf.mxu0
      %v3139 = vadd.f32 %v3086, %v3138
      %3140 = vmatmul.f32.gmra.mxu0 %v2400
      %v3141 = vpop.f32.mrf.mxu0
      %v3142 = vadd.f32 %v3089, %v3141
      %3143 = vmatmul.f32.gmra.mxu0 %v2403
      %v3144 = vpop.f32.mrf.mxu0
      %v3145 = vadd.f32 %v3092, %v3144
      %3146 = vmatmul.f32.gmra.mxu0 %v2406
      %v3147 = vpop.f32.mrf.mxu0
      %v3148 = vadd.f32 %v3095, %v3147
      %3149 = vmatmul.f32.gmra.mxu0 %v2409
      %v3150 = vpop.f32.mrf.mxu0
      %v3151 = vadd.f32 %v3098, %v3150
      %3152 = vmatmul.f32.gmra.mxu0 %v2412
      %v3153 = vpop.f32.mrf.mxu0
      %v3154 = vadd.f32 %v3101, %v3153
      %3155 = vmatmul.f32.gmra.mxu0 %v2415
      %v3156 = vpop.f32.mrf.mxu0
      %v3157 = vadd.f32 %v3104, %v3156
      %3158 = vdwg.mxu0
      %3159 = vst [vmem:[%s204] sm:$0xff] %v2488
      %3160 = vst [vmem:[%s204 + $0x8] sm:$0xff] %v2594
      %3161 = vst [vmem:[%s204 + $0x10] sm:$0xff] %v2700
      %3162 = vst [vmem:[%s204 + $0x18] sm:$0xff] %v2806
      %3163 = vst [vmem:[%s204 + $0x20] sm:$0xff] %v2912
      %3164 = vst [vmem:[%s204 + $0x28] sm:$0xff] %v3018
      %3165 = vst.msk [vmem:[%s204 + $0x30] sm:$0xff] %vm2380, %v3124
      %3166 = vst [vmem:[%s204 + $0x38] sm:$0xff] %v2491
      %3167 = vst [vmem:[%s204 + $0x40] sm:$0xff] %v2597
      %3168 = vst [vmem:[%s204 + $0x48] sm:$0xff] %v2703
      %3169 = vst [vmem:[%s204 + $0x50] sm:$0xff] %v2809
      %3170 = vst [vmem:[%s204 + $0x58] sm:$0xff] %v2915
      %3171 = vst [vmem:[%s204 + $0x60] sm:$0xff] %v3021
      %3172 = vst.msk [vmem:[%s204 + $0x68] sm:$0xff] %vm2380, %v3127
      %3173 = vst [vmem:[%s204 + $0x70] sm:$0xff] %v2494
      %3174 = vst [vmem:[%s204 + $0x78] sm:$0xff] %v2600
      %3175 = vst [vmem:[%s204 + $0x80] sm:$0xff] %v2706
      %3176 = vst [vmem:[%s204 + $0x88] sm:$0xff] %v2812
      %3177 = vst [vmem:[%s204 + $0x90] sm:$0xff] %v2918
      %3178 = vst [vmem:[%s204 + $0x98] sm:$0xff] %v3024
      %3179 = vst.msk [vmem:[%s204 + $0xa0] sm:$0xff] %vm2380, %v3130
      %3180 = vst [vmem:[%s204 + $0xa8] sm:$0xff] %v2497
      %3181 = vst [vmem:[%s204 + $0xb0] sm:$0xff] %v2603
      %3182 = vst [vmem:[%s204 + $0xb8] sm:$0xff] %v2709
      %3183 = vst [vmem:[%s204 + $0xc0] sm:$0xff] %v2815
      %3184 = vst [vmem:[%s204 + $0xc8] sm:$0xff] %v2921
      %3185 = vst [vmem:[%s204 + $0xd0] sm:$0xff] %v3027
      %3186 = vst.msk [vmem:[%s204 + $0xd8] sm:$0xff] %vm2380, %v3133
      %3187 = vst [vmem:[%s204 + $0xe0] sm:$0xff] %v2500
      %3188 = vst [vmem:[%s204 + $0xe8] sm:$0xff] %v2606
      %3189 = vst [vmem:[%s204 + $0xf0] sm:$0xff] %v2712
      %3190 = vst [vmem:[%s204 + $0xf8] sm:$0xff] %v2818
      %3191 = vst [vmem:[%s204 + $0x100] sm:$0xff] %v2924
      %3192 = vst [vmem:[%s204 + $0x108] sm:$0xff] %v3030
      %3193 = vst.msk [vmem:[%s204 + $0x110] sm:$0xff] %vm2380, %v3136
      %3194 = vst [vmem:[%s204 + $0x118] sm:$0xff] %v2503
      %3195 = vst [vmem:[%s204 + $0x120] sm:$0xff] %v2609
      %3196 = vst [vmem:[%s204 + $0x128] sm:$0xff] %v2715
      %3197 = vst [vmem:[%s204 + $0x130] sm:$0xff] %v2821
      %3198 = vst [vmem:[%s204 + $0x138] sm:$0xff] %v2927
      %3199 = vst [vmem:[%s204 + $0x140] sm:$0xff] %v3033
      %3200 = vst.msk [vmem:[%s204 + $0x148] sm:$0xff] %vm2380, %v3139
      %3201 = vst [vmem:[%s204 + $0x150] sm:$0xff] %v2506
      %3202 = vst [vmem:[%s204 + $0x158] sm:$0xff] %v2612
      %3203 = vst [vmem:[%s204 + $0x160] sm:$0xff] %v2718
      %3204 = vst [vmem:[%s204 + $0x168] sm:$0xff] %v2824
      %3205 = vst [vmem:[%s204 + $0x170] sm:$0xff] %v2930
      %3206 = vst [vmem:[%s204 + $0x178] sm:$0xff] %v3036
      %3207 = vst.msk [vmem:[%s204 + $0x180] sm:$0xff] %vm2380, %v3142
      %3208 = vst [vmem:[%s204 + $0x188] sm:$0xff] %v2509
      %3209 = vst [vmem:[%s204 + $0x190] sm:$0xff] %v2615
      %3210 = vst [vmem:[%s204 + $0x198] sm:$0xff] %v2721
      %3211 = vst [vmem:[%s204 + $0x1a0] sm:$0xff] %v2827
      %3212 = vst [vmem:[%s204 + $0x1a8] sm:$0xff] %v2933
      %3213 = vst [vmem:[%s204 + $0x1b0] sm:$0xff] %v3039
      %3214 = vst.msk [vmem:[%s204 + $0x1b8] sm:$0xff] %vm2380, %v3145
      %3215 = vst [vmem:[%s204 + $0x1c0] sm:$0xff] %v2512
      %3216 = vst [vmem:[%s204 + $0x1c8] sm:$0xff] %v2618
      %3217 = vst [vmem:[%s204 + $0x1d0] sm:$0xff] %v2724
      %3218 = vst [vmem:[%s204 + $0x1d8] sm:$0xff] %v2830
      %3219 = vst [vmem:[%s204 + $0x1e0] sm:$0xff] %v2936
      %3220 = vst [vmem:[%s204 + $0x1e8] sm:$0xff] %v3042
      %3221 = vst.msk [vmem:[%s204 + $0x1f0] sm:$0xff] %vm2380, %v3148
      %3222 = vst [vmem:[%s204 + $0x1f8] sm:$0xff] %v2515
      %3223 = vst [vmem:[%s204 + $0x200] sm:$0xff] %v2621
      %3224 = vst [vmem:[%s204 + $0x208] sm:$0xff] %v2727
      %3225 = vst [vmem:[%s204 + $0x210] sm:$0xff] %v2833
      %3226 = vst [vmem:[%s204 + $0x218] sm:$0xff] %v2939
      %3227 = vst [vmem:[%s204 + $0x220] sm:$0xff] %v3045
      %3228 = vst.msk [vmem:[%s204 + $0x228] sm:$0xff] %vm2380, %v3151
      %3229 = vst [vmem:[%s204 + $0x230] sm:$0xff] %v2518
      %3230 = vst [vmem:[%s204 + $0x238] sm:$0xff] %v2624
      %3231 = vst [vmem:[%s204 + $0x240] sm:$0xff] %v2730
      %3232 = vst [vmem:[%s204 + $0x248] sm:$0xff] %v2836
      %3233 = vst [vmem:[%s204 + $0x250] sm:$0xff] %v2942
      %3234 = vst [vmem:[%s204 + $0x258] sm:$0xff] %v3048
      %3235 = vst.msk [vmem:[%s204 + $0x260] sm:$0xff] %vm2380, %v3154
      %3236 = vst [vmem:[%s204 + $0x268] sm:$0xff] %v2521
      %3237 = vst [vmem:[%s204 + $0x270] sm:$0xff] %v2627
      %3238 = vst [vmem:[%s204 + $0x278] sm:$0xff] %v2733
      %3239 = vst [vmem:[%s204 + $0x280] sm:$0xff] %v2839
      %3240 = vst [vmem:[%s204 + $0x288] sm:$0xff] %v2945
      %3241 = vst [vmem:[%s204 + $0x290] sm:$0xff] %v3051
      %3242 = vst.msk [vmem:[%s204 + $0x298] sm:$0xff] %vm2380, %v3157
      %s3243 = smul.u32 12, %s15
      %p3244 = scmp.lt.s32.totalorder %s3243, 23
      %s3245 = scalar_select %p3244, %s3243, 23
      %s3246 = smul.addr %s3245, 7
      %s3247 = smul.addr %s3246, 8
      %s3248 = scalar_lea.vmem %s4, %s3247
      // Predicated region
      $region41: #{kernel_generated_3_forward.1} parent=35 // pred_check
        %p3249 = pneg %p122
      $region42: #{kernel_generated_3_forward.1} parent=35 // pred_check_branch
        %3251 = sbr.rel (%p3249) target = $region44
      $region43: #{kernel_generated_3_forward.1} parent=35 // pred_region
        %s3252 = smul.u32 12, %s15
      $region44: #{kernel_generated_3_forward.1} parent=35 // pred_fallthru
        _
    $region36: #{kernel_generated_3_forward.1} parent=5 // pred_fallthru
      _
    %p3253 = scmp.le.s32.totalorder 2, %s10
    // Predicated region
    $region45: #{kernel_generated_3_forward.1} parent=5 // pred_check
      %p3254 = pneg %p3253
    $region46: #{kernel_generated_3_forward.1} parent=5 // pred_check_branch
      %3256 = sbr.rel (%p3254) target = $region48
    $region47: #{kernel_generated_3_forward.1} parent=5 // pred_region
      %s3257 = ssub.s32 %s10, 2
      // Predicated region
      $region49: #{kernel_generated_3_forward.1} parent=47 // pred_check
        %p3258 = pneg %p128
      $region50: #{kernel_generated_3_forward.1} parent=47 // pred_check_branch
        %3260 = sbr.rel (%p3258) target = $region52
      $region51: #{kernel_generated_3_forward.1} parent=47 // pred_region
        %s3261 = smul.u32 12, %s16
        %p3262 = scmp.lt.s32.totalorder %s3261, 23
        %s3263 = scalar_select %p3262, %s3261, 23
        %s3264 = smul.addr %s3263, 7
        %s3265 = smul.addr %s3264, 8
        %s3266 = scalar_lea.vmem %s4, %s3265
      $region52: #{kernel_generated_3_forward.1} parent=47 // pred_fallthru
        _
    $region48: #{kernel_generated_3_forward.1} parent=5 // pred_fallthru
      _
  $region6: #{kernel_generated_3_forward.1} parent=0 // loop_footer
    %s14 = sadd.s32 1, %s10
  $region7: #{kernel_generated_3_forward.1} parent=0 // loop_footer_branch
    %9 = sbr.rel target = $region3
  $region8: #{kernel_generated_3_forward.1} parent=0 // loop_exit
    _

</llo_original>
